<compile_context>
chip_gen: v7x
topology: tpu7x:2x2x1
jax: 0.10.0
libtpu: 0.0.40
codegen_flags: <defaults>
</compile_context>

<pallas_src>
import functools

import jax
import jax.numpy as jnp
from jax.experimental import pallas as pl
from jax.experimental.pallas import tpu as pltpu


def _round_up(x, m):
    return (x + m - 1) // m * m


def _tile_bytes(rows, cols, dtype):
    """VMEM footprint of a (rows, cols) 2-D slab after (8k,128) tiling."""
    itemsize = jnp.dtype(dtype).itemsize
    sub = 8 * max(1, 4 // itemsize)  # (8,128) f32, (16,128) bf16, (32,128) i8
    return _round_up(max(rows, 1), sub) * _round_up(max(cols, 1), 128) * itemsize


def _pick_rows_per_step(B, nH, nW, row_block_bytes, target_rows, vmem_budget):
    """Largest divisor of nH s.t. the per-step block stays within budget and
    the grid keeps >= 2 steps (so v7x megacore has something to shard)."""
    best = 1
    for rh in range(1, nH + 1):
        if nH % rh != 0:
            continue
        if rh * nW <= target_rows and rh * row_block_bytes <= vmem_budget:
            best = rh
    if B * (nH // best) < 2:
        for rh in range(best - 1, 0, -1):
            if nH % rh == 0 and B * (nH // rh) >= 2:
                best = rh
                break
    return best


def _patch_embed_kernel(x_ref, w_ref, b_ref, o_ref, *, C, P, RH, precision):
    """One grid step = RH patch rows of one image.

    x_ref: (1, C, RH, P, nW, P)  image block (free 6-D view of NCHW input)
    w_ref: (K, D)                VMEM-resident projection weight, K = (c,ph,pw)
    b_ref: (1, D)                f32 bias (added on the f32 accumulator)
    o_ref: (1, RH, nW, D)        output block
    """
    w = w_ref[...]
    b = b_ref[...]
    for rh in range(RH):
        # In-VMEM patchify: lane-concatenate the (nW, P) pixel strips in
        # (c, ph) order -> (nW, C*P*P); identical ordering to the Conv2d
        # weight flattening, so a single dense dot finishes the projection.
        strips = [x_ref[0, c, rh, ph] for c in range(C) for ph in range(P)]
        patches = strips[0] if len(strips) == 1 else jnp.concatenate(strips, axis=-1)
        acc = jnp.dot(patches.astype(w.dtype), w,
                      preferred_element_type=jnp.float32, precision=precision)
        o_ref[0, rh] = (acc + b).astype(o_ref.dtype)


def patch_embed_forward(x, weight, bias, patch_size, *, compute_dtype=None,
                        precision=jax.lax.Precision.DEFAULT, rows_per_step=None):
    """ViT patch embedding (Conv2d, stride == kernel) as a fused Pallas kernel.

    x:      (B, C, H, W)   NCHW, matching nn.Conv2d
    weight: (D, C, P, P)   PyTorch Conv2d weight layout
    bias:   (D,)
    returns (B, N, D) with N = (H // P) * (W // P)

    compute_dtype=jnp.bfloat16 selects a bf16-compute / f32-accumulate MXU path
    (a true precision change vs. the f32 reference; accumulation stays f32).
    """
    B, C, H, W = x.shape
    D = weight.shape[0]
    P = patch_size
    assert H % P == 0 and W % P == 0, "image size must be divisible by patch size"
    nH, nW = H // P, W // P
    N = nH * nW
    K = C * P * P

    out_dtype = x.dtype
    compute_dtype = jnp.dtype(compute_dtype) if compute_dtype is not None else jnp.dtype(x.dtype)
    x_itemsize = jnp.dtype(x.dtype).itemsize

    # Conv2d weight (D, C, P, P) -> dense (K, D), K ordered (c, ph, pw).
    # Tiny one-time transform; no K/D padding (full-dim blocks satisfy (8,128)).
    w2d = weight.reshape(D, K).T.astype(compute_dtype)
    # Bias kept f32 so the add happens on the f32 accumulator.
    b2d = bias.astype(jnp.float32).reshape(1, D)

    # Free metadata reshape (splits of the two minor-most dims, no transpose,
    # no copy): (B, C, H, W) -> (B, C, nH, P, nW, P).
    x6 = x.reshape(B, C, nH, P, nW, P)

    # Rows of patches handled per grid step: big enough to amortize the
    # ~0.35 us per-step overhead / lengthen DMAs, small enough for VMEM and for
    # >= 2 grid steps (megacore).
    row_block_bytes = C * P * _tile_bytes(nW, P, x.dtype)
    target_rows = 512 if x_itemsize >= 4 else 1024
    if rows_per_step is None:
        RH = _pick_rows_per_step(B, nH, nW, row_block_bytes, target_rows, 8 << 20)
    else:
        RH = int(rows_per_step)
        assert nH % RH == 0, "rows_per_step must divide H // patch_size"
    grid = (B, nH // RH)

    # VMEM budget: double-buffered image block + output block, resident W/b,
    # plus in-kernel patch-matrix / accumulator scratch.  Never clamp below need.
    in_block_bytes = RH * row_block_bytes
    w_bytes = _tile_bytes(K, D, compute_dtype)
    b_bytes = _tile_bytes(1, D, jnp.float32)
    out_block_bytes = RH * _tile_bytes(nW, D, out_dtype)
    scratch_bytes = _tile_bytes(nW, K, compute_dtype) + _tile_bytes(nW, D, jnp.float32)
    vmem_need = 2 * (in_block_bytes + w_bytes + b_bytes + out_block_bytes) + scratch_bytes

    vmem_cap = 64 << 20
    try:
        vmem_cap = int(pltpu.get_tpu_info().vmem_capacity_bytes)
    except Exception:
        pass
    vmem_limit = max(vmem_need + (8 << 20), 32 << 20)
    vmem_limit = min(vmem_limit, max(vmem_cap - (8 << 20), vmem_need + (2 << 20)))
    vmem_limit = int(max(vmem_limit, vmem_need))

    cost = pl.CostEstimate(
        flops=2 * B * N * K * D,
        transcendentals=0,
        bytes_accessed=(B * C * H * W * x_itemsize
                        + K * D * jnp.dtype(compute_dtype).itemsize
                        + B * N * D * jnp.dtype(out_dtype).itemsize
                        + D * 4),
    )

    kernel = functools.partial(_patch_embed_kernel, C=C, P=P, RH=RH,
                               precision=precision)

    out = pl.pallas_call(
        kernel,
        out_shape=jax.ShapeDtypeStruct((B, nH, nW, D), out_dtype),
        grid_spec=pltpu.PrefetchScalarGridSpec(
            num_scalar_prefetch=0,
            grid=grid,
            in_specs=[
                # RH patch rows of one image; HBM side is C contiguous chunks.
                pl.BlockSpec((1, C, RH, P, nW, P),
                             lambda b, r: (b, 0, r, 0, 0, 0)),
                pl.BlockSpec((K, D), lambda b, r: (0, 0)),   # resident weight
                pl.BlockSpec((1, D), lambda b, r: (0, 0)),   # resident bias
            ],
            out_specs=pl.BlockSpec((1, RH, nW, D), lambda b, r: (b, r, 0, 0)),
        ),
        compiler_params=pltpu.CompilerParams(
            dimension_semantics=("parallel", "parallel"),  # shard over v7x's 2 TCs
            vmem_limit_bytes=vmem_limit,
        ),
        cost_estimate=cost,
    )(x6, w2d, b2d)

    # Free merge of adjacent dims: (B, nH, nW, D) -> (B, N, D).
    return out.reshape(B, N, D)


if __name__ == "__main__":
    # Small shapes consistent with the module: img_size=16, patch_size=4,
    # in_chans=4, embed_dim=32  ->  num_patches = (16//4)^2 = 16
    B, C, IMG, P, D = 2, 4, 16, 4, 32

    key = jax.random.PRNGKey(0)
    kx, kw, kb = jax.random.split(key, 3)

    x = jax.random.normal(kx, (B, C, IMG, IMG), dtype=jnp.float32)
    # Deterministic synthetic Conv2d params (shapes from nn.Conv2d(C, D, P, P))
    weight = jax.random.normal(kw, (D, C, P, P), dtype=jnp.float32) * 0.02
    bias = jax.random.normal(kb, (D,), dtype=jnp.float32) * 0.02

    # Reference: conv via lax to validate semantics against the PyTorch module.
    ref = jax.lax.conv_general_dilated(
        x, weight, window_strides=(P, P), padding="VALID",
        dimension_numbers=("NCHW", "OIHW", "NCHW"),
        precision=jax.lax.Precision.HIGHEST,
    ) + bias.reshape(1, D, 1, 1)
    ref = ref.reshape(B, D, -1).transpose(0, 2, 1)

    N = (IMG // P) ** 2

    # Exact-ish f32 path (HIGHEST precision) — tight tolerance.
    out_hi = jax.block_until_ready(
        patch_embed_forward(x, weight, bias, P,
                            precision=jax.lax.Precision.HIGHEST))
    assert out_hi.shape == (B, N, D)
    assert jnp.allclose(out_hi, ref, atol=1e-4, rtol=1e-4)

    # Default fast path (Precision.DEFAULT, single MXU pass) — looser tolerance.
    out = jax.block_until_ready(patch_embed_forward(x, weight, bias, P))
    assert out.shape == (B, N, D)
    assert jnp.allclose(out, ref, atol=2e-2, rtol=2e-2)

    # bf16-compute / f32-accumulate path — loosest tolerance.
    out_bf16 = jax.block_until_ready(
        patch_embed_forward(x, weight, bias, P, compute_dtype=jnp.bfloat16))
    assert out_bf16.shape == (B, N, D)
    assert jnp.allclose(out_bf16, ref, atol=5e-2, rtol=5e-2)

    print("KERNEL_OK")
</pallas_src>

<mosaic_0001>
module attributes {stable_mosaic.version = 11 : i64} {
  func.func @_patch_embed_kernel(%arg0: i32, %arg1: i32, %arg2: memref<1x4x4x4x4x4xf32, #tpu.memory_space<vmem>>, %arg3: memref<64x32xf32, #tpu.memory_space<vmem>>, %arg4: memref<1x32xf32, #tpu.memory_space<vmem>>, %arg5: memref<1x4x4x32xf32, #tpu.memory_space<vmem>>) attributes {dimension_semantics = [#tpu.dimension_semantics<parallel>, #tpu.dimension_semantics<parallel>], iteration_bounds = array<i64: 2, 1>, scalar_prefetch = 0 : i64, scratch_operands = 0 : i64, tpu.core_type = #tpu.core_type<tc>, window_params = [{transform_indices = @transform_0, window_bounds = array<i64: 1, 4, 4, 4, 4, 4>}, {pipeline_mode = #tpu.pipeline_mode<synchronous>, transform_indices = @transform_1, window_bounds = array<i64: 64, 32>}, {pipeline_mode = #tpu.pipeline_mode<synchronous>, transform_indices = @transform_2, window_bounds = array<i64: 1, 32>}, {transform_indices = @transform_3, window_bounds = array<i64: 1, 4, 4, 32>}]} {
    %c0 = arith.constant 0 : index
    %c0_0 = arith.constant 0 : index
    %0 = vector.load %arg3[%c0, %c0_0] : memref<64x32xf32, #tpu.memory_space<vmem>>, vector<64x32xf32>
    %c0_1 = arith.constant 0 : index
    %c0_2 = arith.constant 0 : index
    %1 = vector.load %arg4[%c0_1, %c0_2] : memref<1x32xf32, #tpu.memory_space<vmem>>, vector<1x32xf32>
    %c0_3 = arith.constant 0 : index
    %c0_4 = arith.constant 0 : index
    %c0_5 = arith.constant 0 : index
    %c0_6 = arith.constant 0 : index
    %c0_7 = arith.constant 0 : index
    %c0_8 = arith.constant 0 : index
    %2 = vector.load %arg2[%c0_3, %c0_4, %c0_5, %c0_6, %c0_7, %c0_8] : memref<1x4x4x4x4x4xf32, #tpu.memory_space<vmem>>, vector<1x1x1x1x4x4xf32>
    %3 = vector.shape_cast %2 : vector<1x1x1x1x4x4xf32> to vector<4x4xf32>
    %c0_9 = arith.constant 0 : index
    %c0_10 = arith.constant 0 : index
    %c0_11 = arith.constant 0 : index
    %c1 = arith.constant 1 : index
    %c0_12 = arith.constant 0 : index
    %c0_13 = arith.constant 0 : index
    %4 = vector.load %arg2[%c0_9, %c0_10, %c0_11, %c1, %c0_12, %c0_13] : memref<1x4x4x4x4x4xf32, #tpu.memory_space<vmem>>, vector<1x1x1x1x4x4xf32>
    %5 = vector.shape_cast %4 : vector<1x1x1x1x4x4xf32> to vector<4x4xf32>
    %c0_14 = arith.constant 0 : index
    %c0_15 = arith.constant 0 : index
    %c0_16 = arith.constant 0 : index
    %c2 = arith.constant 2 : index
    %c0_17 = arith.constant 0 : index
    %c0_18 = arith.constant 0 : index
    %6 = vector.load %arg2[%c0_14, %c0_15, %c0_16, %c2, %c0_17, %c0_18] : memref<1x4x4x4x4x4xf32, #tpu.memory_space<vmem>>, vector<1x1x1x1x4x4xf32>
    %7 = vector.shape_cast %6 : vector<1x1x1x1x4x4xf32> to vector<4x4xf32>
    %c0_19 = arith.constant 0 : index
    %c0_20 = arith.constant 0 : index
    %c0_21 = arith.constant 0 : index
    %c3 = arith.constant 3 : index
    %c0_22 = arith.constant 0 : index
    %c0_23 = arith.constant 0 : index
    %8 = vector.load %arg2[%c0_19, %c0_20, %c0_21, %c3, %c0_22, %c0_23] : memref<1x4x4x4x4x4xf32, #tpu.memory_space<vmem>>, vector<1x1x1x1x4x4xf32>
    %9 = vector.shape_cast %8 : vector<1x1x1x1x4x4xf32> to vector<4x4xf32>
    %c0_24 = arith.constant 0 : index
    %c1_25 = arith.constant 1 : index
    %c0_26 = arith.constant 0 : index
    %c0_27 = arith.constant 0 : index
    %c0_28 = arith.constant 0 : index
    %c0_29 = arith.constant 0 : index
    %10 = vector.load %arg2[%c0_24, %c1_25, %c0_26, %c0_27, %c0_28, %c0_29] : memref<1x4x4x4x4x4xf32, #tpu.memory_space<vmem>>, vector<1x1x1x1x4x4xf32>
    %11 = vector.shape_cast %10 : vector<1x1x1x1x4x4xf32> to vector<4x4xf32>
    %c0_30 = arith.constant 0 : index
    %c1_31 = arith.constant 1 : index
    %c0_32 = arith.constant 0 : index
    %c1_33 = arith.constant 1 : index
    %c0_34 = arith.constant 0 : index
    %c0_35 = arith.constant 0 : index
    %12 = vector.load %arg2[%c0_30, %c1_31, %c0_32, %c1_33, %c0_34, %c0_35] : memref<1x4x4x4x4x4xf32, #tpu.memory_space<vmem>>, vector<1x1x1x1x4x4xf32>
    %13 = vector.shape_cast %12 : vector<1x1x1x1x4x4xf32> to vector<4x4xf32>
    %c0_36 = arith.constant 0 : index
    %c1_37 = arith.constant 1 : index
    %c0_38 = arith.constant 0 : index
    %c2_39 = arith.constant 2 : index
    %c0_40 = arith.constant 0 : index
    %c0_41 = arith.constant 0 : index
    %14 = vector.load %arg2[%c0_36, %c1_37, %c0_38, %c2_39, %c0_40, %c0_41] : memref<1x4x4x4x4x4xf32, #tpu.memory_space<vmem>>, vector<1x1x1x1x4x4xf32>
    %15 = vector.shape_cast %14 : vector<1x1x1x1x4x4xf32> to vector<4x4xf32>
    %c0_42 = arith.constant 0 : index
    %c1_43 = arith.constant 1 : index
    %c0_44 = arith.constant 0 : index
    %c3_45 = arith.constant 3 : index
    %c0_46 = arith.constant 0 : index
    %c0_47 = arith.constant 0 : index
    %16 = vector.load %arg2[%c0_42, %c1_43, %c0_44, %c3_45, %c0_46, %c0_47] : memref<1x4x4x4x4x4xf32, #tpu.memory_space<vmem>>, vector<1x1x1x1x4x4xf32>
    %17 = vector.shape_cast %16 : vector<1x1x1x1x4x4xf32> to vector<4x4xf32>
    %c0_48 = arith.constant 0 : index
    %c2_49 = arith.constant 2 : index
    %c0_50 = arith.constant 0 : index
    %c0_51 = arith.constant 0 : index
    %c0_52 = arith.constant 0 : index
    %c0_53 = arith.constant 0 : index
    %18 = vector.load %arg2[%c0_48, %c2_49, %c0_50, %c0_51, %c0_52, %c0_53] : memref<1x4x4x4x4x4xf32, #tpu.memory_space<vmem>>, vector<1x1x1x1x4x4xf32>
    %19 = vector.shape_cast %18 : vector<1x1x1x1x4x4xf32> to vector<4x4xf32>
    %c0_54 = arith.constant 0 : index
    %c2_55 = arith.constant 2 : index
    %c0_56 = arith.constant 0 : index
    %c1_57 = arith.constant 1 : index
    %c0_58 = arith.constant 0 : index
    %c0_59 = arith.constant 0 : index
    %20 = vector.load %arg2[%c0_54, %c2_55, %c0_56, %c1_57, %c0_58, %c0_59] : memref<1x4x4x4x4x4xf32, #tpu.memory_space<vmem>>, vector<1x1x1x1x4x4xf32>
    %21 = vector.shape_cast %20 : vector<1x1x1x1x4x4xf32> to vector<4x4xf32>
    %c0_60 = arith.constant 0 : index
    %c2_61 = arith.constant 2 : index
    %c0_62 = arith.constant 0 : index
    %c2_63 = arith.constant 2 : index
    %c0_64 = arith.constant 0 : index
    %c0_65 = arith.constant 0 : index
    %22 = vector.load %arg2[%c0_60, %c2_61, %c0_62, %c2_63, %c0_64, %c0_65] : memref<1x4x4x4x4x4xf32, #tpu.memory_space<vmem>>, vector<1x1x1x1x4x4xf32>
    %23 = vector.shape_cast %22 : vector<1x1x1x1x4x4xf32> to vector<4x4xf32>
    %c0_66 = arith.constant 0 : index
    %c2_67 = arith.constant 2 : index
    %c0_68 = arith.constant 0 : index
    %c3_69 = arith.constant 3 : index
    %c0_70 = arith.constant 0 : index
    %c0_71 = arith.constant 0 : index
    %24 = vector.load %arg2[%c0_66, %c2_67, %c0_68, %c3_69, %c0_70, %c0_71] : memref<1x4x4x4x4x4xf32, #tpu.memory_space<vmem>>, vector<1x1x1x1x4x4xf32>
    %25 = vector.shape_cast %24 : vector<1x1x1x1x4x4xf32> to vector<4x4xf32>
    %c0_72 = arith.constant 0 : index
    %c3_73 = arith.constant 3 : index
    %c0_74 = arith.constant 0 : index
    %c0_75 = arith.constant 0 : index
    %c0_76 = arith.constant 0 : index
    %c0_77 = arith.constant 0 : index
    %26 = vector.load %arg2[%c0_72, %c3_73, %c0_74, %c0_75, %c0_76, %c0_77] : memref<1x4x4x4x4x4xf32, #tpu.memory_space<vmem>>, vector<1x1x1x1x4x4xf32>
    %27 = vector.shape_cast %26 : vector<1x1x1x1x4x4xf32> to vector<4x4xf32>
    %c0_78 = arith.constant 0 : index
    %c3_79 = arith.constant 3 : index
    %c0_80 = arith.constant 0 : index
    %c1_81 = arith.constant 1 : index
    %c0_82 = arith.constant 0 : index
    %c0_83 = arith.constant 0 : index
    %28 = vector.load %arg2[%c0_78, %c3_79, %c0_80, %c1_81, %c0_82, %c0_83] : memref<1x4x4x4x4x4xf32, #tpu.memory_space<vmem>>, vector<1x1x1x1x4x4xf32>
    %29 = vector.shape_cast %28 : vector<1x1x1x1x4x4xf32> to vector<4x4xf32>
    %c0_84 = arith.constant 0 : index
    %c3_85 = arith.constant 3 : index
    %c0_86 = arith.constant 0 : index
    %c2_87 = arith.constant 2 : index
    %c0_88 = arith.constant 0 : index
    %c0_89 = arith.constant 0 : index
    %30 = vector.load %arg2[%c0_84, %c3_85, %c0_86, %c2_87, %c0_88, %c0_89] : memref<1x4x4x4x4x4xf32, #tpu.memory_space<vmem>>, vector<1x1x1x1x4x4xf32>
    %31 = vector.shape_cast %30 : vector<1x1x1x1x4x4xf32> to vector<4x4xf32>
    %c0_90 = arith.constant 0 : index
    %c3_91 = arith.constant 3 : index
    %c0_92 = arith.constant 0 : index
    %c3_93 = arith.constant 3 : index
    %c0_94 = arith.constant 0 : index
    %c0_95 = arith.constant 0 : index
    %32 = vector.load %arg2[%c0_90, %c3_91, %c0_92, %c3_93, %c0_94, %c0_95] : memref<1x4x4x4x4x4xf32, #tpu.memory_space<vmem>>, vector<1x1x1x1x4x4xf32>
    %33 = vector.shape_cast %32 : vector<1x1x1x1x4x4xf32> to vector<4x4xf32>
    %34 = tpu.concatenate %3, %5, %7, %9, %11, %13, %15, %17, %19, %21, %23, %25, %27, %29, %31, %33 in 1 : vector<4x4xf32>, vector<4x4xf32>, vector<4x4xf32>, vector<4x4xf32>, vector<4x4xf32>, vector<4x4xf32>, vector<4x4xf32>, vector<4x4xf32>, vector<4x4xf32>, vector<4x4xf32>, vector<4x4xf32>, vector<4x4xf32>, vector<4x4xf32>, vector<4x4xf32>, vector<4x4xf32>, vector<4x4xf32> -> vector<4x64xf32>
    %cst = arith.constant dense<0.000000e+00> : vector<4x32xf32>
    %35 = tpu.matmul %34, %0, %cst {dimension_numbers = #tpu.dot_dimension_numbers<[1], [0], [0], [1], [0, 0, 1, 1], [], []>, precision = #tpu.contract_precision<fp32>} : vector<4x64xf32>, vector<64x32xf32>, vector<4x32xf32> -> vector<4x32xf32>
    %36 = vector.broadcast %1 : vector<1x32xf32> to vector<4x32xf32>
    %37 = arith.addf %35, %36 : vector<4x32xf32>
    %c0_96 = arith.constant 0 : index
    %c0_97 = arith.constant 0 : index
    %c0_98 = arith.constant 0 : index
    %c0_99 = arith.constant 0 : index
    %38 = vector.load %arg5[%c0_96, %c0_97, %c0_98, %c0_99] : memref<1x4x4x32xf32, #tpu.memory_space<vmem>>, vector<1x1x4x32xf32>
    %39 = vector.shape_cast %38 : vector<1x1x4x32xf32> to vector<4x32xf32>
    %40 = vector.shape_cast %37 : vector<4x32xf32> to vector<1x1x4x32xf32>
    tpu.vector_store %arg5[%c0_96, %c0_97, %c0_98, %c0_99], %40 {strides = array<i32>} : memref<1x4x4x32xf32, #tpu.memory_space<vmem>>, vector<1x1x4x32xf32>,
    %c0_100 = arith.constant 0 : index
    %c0_101 = arith.constant 0 : index
    %c1_102 = arith.constant 1 : index
    %c0_103 = arith.constant 0 : index
    %c0_104 = arith.constant 0 : index
    %c0_105 = arith.constant 0 : index
    %41 = vector.load %arg2[%c0_100, %c0_101, %c1_102, %c0_103, %c0_104, %c0_105] : memref<1x4x4x4x4x4xf32, #tpu.memory_space<vmem>>, vector<1x1x1x1x4x4xf32>
    %42 = vector.shape_cast %41 : vector<1x1x1x1x4x4xf32> to vector<4x4xf32>
    %c0_106 = arith.constant 0 : index
    %c0_107 = arith.constant 0 : index
    %c1_108 = arith.constant 1 : index
    %c1_109 = arith.constant 1 : index
    %c0_110 = arith.constant 0 : index
    %c0_111 = arith.constant 0 : index
    %43 = vector.load %arg2[%c0_106, %c0_107, %c1_108, %c1_109, %c0_110, %c0_111] : memref<1x4x4x4x4x4xf32, #tpu.memory_space<vmem>>, vector<1x1x1x1x4x4xf32>
    %44 = vector.shape_cast %43 : vector<1x1x1x1x4x4xf32> to vector<4x4xf32>
    %c0_112 = arith.constant 0 : index
    %c0_113 = arith.constant 0 : index
    %c1_114 = arith.constant 1 : index
    %c2_115 = arith.constant 2 : index
    %c0_116 = arith.constant 0 : index
    %c0_117 = arith.constant 0 : index
    %45 = vector.load %arg2[%c0_112, %c0_113, %c1_114, %c2_115, %c0_116, %c0_117] : memref<1x4x4x4x4x4xf32, #tpu.memory_space<vmem>>, vector<1x1x1x1x4x4xf32>
    %46 = vector.shape_cast %45 : vector<1x1x1x1x4x4xf32> to vector<4x4xf32>
    %c0_118 = arith.constant 0 : index
    %c0_119 = arith.constant 0 : index
    %c1_120 = arith.constant 1 : index
    %c3_121 = arith.constant 3 : index
    %c0_122 = arith.constant 0 : index
    %c0_123 = arith.constant 0 : index
    %47 = vector.load %arg2[%c0_118, %c0_119, %c1_120, %c3_121, %c0_122, %c0_123] : memref<1x4x4x4x4x4xf32, #tpu.memory_space<vmem>>, vector<1x1x1x1x4x4xf32>
    %48 = vector.shape_cast %47 : vector<1x1x1x1x4x4xf32> to vector<4x4xf32>
    %c0_124 = arith.constant 0 : index
    %c1_125 = arith.constant 1 : index
    %c1_126 = arith.constant 1 : index
    %c0_127 = arith.constant 0 : index
    %c0_128 = arith.constant 0 : index
    %c0_129 = arith.constant 0 : index
    %49 = vector.load %arg2[%c0_124, %c1_125, %c1_126, %c0_127, %c0_128, %c0_129] : memref<1x4x4x4x4x4xf32, #tpu.memory_space<vmem>>, vector<1x1x1x1x4x4xf32>
    %50 = vector.shape_cast %49 : vector<1x1x1x1x4x4xf32> to vector<4x4xf32>
    %c0_130 = arith.constant 0 : index
    %c1_131 = arith.constant 1 : index
    %c1_132 = arith.constant 1 : index
    %c1_133 = arith.constant 1 : index
    %c0_134 = arith.constant 0 : index
    %c0_135 = arith.constant 0 : index
    %51 = vector.load %arg2[%c0_130, %c1_131, %c1_132, %c1_133, %c0_134, %c0_135] : memref<1x4x4x4x4x4xf32, #tpu.memory_space<vmem>>, vector<1x1x1x1x4x4xf32>
    %52 = vector.shape_cast %51 : vector<1x1x1x1x4x4xf32> to vector<4x4xf32>
    %c0_136 = arith.constant 0 : index
    %c1_137 = arith.constant 1 : index
    %c1_138 = arith.constant 1 : index
    %c2_139 = arith.constant 2 : index
    %c0_140 = arith.constant 0 : index
    %c0_141 = arith.constant 0 : index
    %53 = vector.load %arg2[%c0_136, %c1_137, %c1_138, %c2_139, %c0_140, %c0_141] : memref<1x4x4x4x4x4xf32, #tpu.memory_space<vmem>>, vector<1x1x1x1x4x4xf32>
    %54 = vector.shape_cast %53 : vector<1x1x1x1x4x4xf32> to vector<4x4xf32>
    %c0_142 = arith.constant 0 : index
    %c1_143 = arith.constant 1 : index
    %c1_144 = arith.constant 1 : index
    %c3_145 = arith.constant 3 : index
    %c0_146 = arith.constant 0 : index
    %c0_147 = arith.constant 0 : index
    %55 = vector.load %arg2[%c0_142, %c1_143, %c1_144, %c3_145, %c0_146, %c0_147] : memref<1x4x4x4x4x4xf32, #tpu.memory_space<vmem>>, vector<1x1x1x1x4x4xf32>
    %56 = vector.shape_cast %55 : vector<1x1x1x1x4x4xf32> to vector<4x4xf32>
    %c0_148 = arith.constant 0 : index
    %c2_149 = arith.constant 2 : index
    %c1_150 = arith.constant 1 : index
    %c0_151 = arith.constant 0 : index
    %c0_152 = arith.constant 0 : index
    %c0_153 = arith.constant 0 : index
    %57 = vector.load %arg2[%c0_148, %c2_149, %c1_150, %c0_151, %c0_152, %c0_153] : memref<1x4x4x4x4x4xf32, #tpu.memory_space<vmem>>, vector<1x1x1x1x4x4xf32>
    %58 = vector.shape_cast %57 : vector<1x1x1x1x4x4xf32> to vector<4x4xf32>
    %c0_154 = arith.constant 0 : index
    %c2_155 = arith.constant 2 : index
    %c1_156 = arith.constant 1 : index
    %c1_157 = arith.constant 1 : index
    %c0_158 = arith.constant 0 : index
    %c0_159 = arith.constant 0 : index
    %59 = vector.load %arg2[%c0_154, %c2_155, %c1_156, %c1_157, %c0_158, %c0_159] : memref<1x4x4x4x4x4xf32, #tpu.memory_space<vmem>>, vector<1x1x1x1x4x4xf32>
    %60 = vector.shape_cast %59 : vector<1x1x1x1x4x4xf32> to vector<4x4xf32>
    %c0_160 = arith.constant 0 : index
    %c2_161 = arith.constant 2 : index
    %c1_162 = arith.constant 1 : index
    %c2_163 = arith.constant 2 : index
    %c0_164 = arith.constant 0 : index
    %c0_165 = arith.constant 0 : index
    %61 = vector.load %arg2[%c0_160, %c2_161, %c1_162, %c2_163, %c0_164, %c0_165] : memref<1x4x4x4x4x4xf32, #tpu.memory_space<vmem>>, vector<1x1x1x1x4x4xf32>
    %62 = vector.shape_cast %61 : vector<1x1x1x1x4x4xf32> to vector<4x4xf32>
    %c0_166 = arith.constant 0 : index
    %c2_167 = arith.constant 2 : index
    %c1_168 = arith.constant 1 : index
    %c3_169 = arith.constant 3 : index
    %c0_170 = arith.constant 0 : index
    %c0_171 = arith.constant 0 : index
    %63 = vector.load %arg2[%c0_166, %c2_167, %c1_168, %c3_169, %c0_170, %c0_171] : memref<1x4x4x4x4x4xf32, #tpu.memory_space<vmem>>, vector<1x1x1x1x4x4xf32>
    %64 = vector.shape_cast %63 : vector<1x1x1x1x4x4xf32> to vector<4x4xf32>
    %c0_172 = arith.constant 0 : index
    %c3_173 = arith.constant 3 : index
    %c1_174 = arith.constant 1 : index
    %c0_175 = arith.constant 0 : index
    %c0_176 = arith.constant 0 : index
    %c0_177 = arith.constant 0 : index
    %65 = vector.load %arg2[%c0_172, %c3_173, %c1_174, %c0_175, %c0_176, %c0_177] : memref<1x4x4x4x4x4xf32, #tpu.memory_space<vmem>>, vector<1x1x1x1x4x4xf32>
    %66 = vector.shape_cast %65 : vector<1x1x1x1x4x4xf32> to vector<4x4xf32>
    %c0_178 = arith.constant 0 : index
    %c3_179 = arith.constant 3 : index
    %c1_180 = arith.constant 1 : index
    %c1_181 = arith.constant 1 : index
    %c0_182 = arith.constant 0 : index
    %c0_183 = arith.constant 0 : index
    %67 = vector.load %arg2[%c0_178, %c3_179, %c1_180, %c1_181, %c0_182, %c0_183] : memref<1x4x4x4x4x4xf32, #tpu.memory_space<vmem>>, vector<1x1x1x1x4x4xf32>
    %68 = vector.shape_cast %67 : vector<1x1x1x1x4x4xf32> to vector<4x4xf32>
    %c0_184 = arith.constant 0 : index
    %c3_185 = arith.constant 3 : index
    %c1_186 = arith.constant 1 : index
    %c2_187 = arith.constant 2 : index
    %c0_188 = arith.constant 0 : index
    %c0_189 = arith.constant 0 : index
    %69 = vector.load %arg2[%c0_184, %c3_185, %c1_186, %c2_187, %c0_188, %c0_189] : memref<1x4x4x4x4x4xf32, #tpu.memory_space<vmem>>, vector<1x1x1x1x4x4xf32>
    %70 = vector.shape_cast %69 : vector<1x1x1x1x4x4xf32> to vector<4x4xf32>
    %c0_190 = arith.constant 0 : index
    %c3_191 = arith.constant 3 : index
    %c1_192 = arith.constant 1 : index
    %c3_193 = arith.constant 3 : index
    %c0_194 = arith.constant 0 : index
    %c0_195 = arith.constant 0 : index
    %71 = vector.load %arg2[%c0_190, %c3_191, %c1_192, %c3_193, %c0_194, %c0_195] : memref<1x4x4x4x4x4xf32, #tpu.memory_space<vmem>>, vector<1x1x1x1x4x4xf32>
    %72 = vector.shape_cast %71 : vector<1x1x1x1x4x4xf32> to vector<4x4xf32>
    %73 = tpu.concatenate %42, %44, %46, %48, %50, %52, %54, %56, %58, %60, %62, %64, %66, %68, %70, %72 in 1 : vector<4x4xf32>, vector<4x4xf32>, vector<4x4xf32>, vector<4x4xf32>, vector<4x4xf32>, vector<4x4xf32>, vector<4x4xf32>, vector<4x4xf32>, vector<4x4xf32>, vector<4x4xf32>, vector<4x4xf32>, vector<4x4xf32>, vector<4x4xf32>, vector<4x4xf32>, vector<4x4xf32>, vector<4x4xf32> -> vector<4x64xf32>
    %cst_196 = arith.constant dense<0.000000e+00> : vector<4x32xf32>
    %74 = tpu.matmul %73, %0, %cst_196 {dimension_numbers = #tpu.dot_dimension_numbers<[1], [0], [0], [1], [0, 0, 1, 1], [], []>, precision = #tpu.contract_precision<fp32>} : vector<4x64xf32>, vector<64x32xf32>, vector<4x32xf32> -> vector<4x32xf32>
    %75 = vector.broadcast %1 : vector<1x32xf32> to vector<4x32xf32>
    %76 = arith.addf %74, %75 : vector<4x32xf32>
    %c0_197 = arith.constant 0 : index
    %c1_198 = arith.constant 1 : index
    %c0_199 = arith.constant 0 : index
    %c0_200 = arith.constant 0 : index
    %77 = vector.load %arg5[%c0_197, %c1_198, %c0_199, %c0_200] : memref<1x4x4x32xf32, #tpu.memory_space<vmem>>, vector<1x1x4x32xf32>
    %78 = vector.shape_cast %77 : vector<1x1x4x32xf32> to vector<4x32xf32>
    %79 = vector.shape_cast %76 : vector<4x32xf32> to vector<1x1x4x32xf32>
    tpu.vector_store %arg5[%c0_197, %c1_198, %c0_199, %c0_200], %79 {strides = array<i32>} : memref<1x4x4x32xf32, #tpu.memory_space<vmem>>, vector<1x1x4x32xf32>,
    %c0_201 = arith.constant 0 : index
    %c0_202 = arith.constant 0 : index
    %c2_203 = arith.constant 2 : index
    %c0_204 = arith.constant 0 : index
    %c0_205 = arith.constant 0 : index
    %c0_206 = arith.constant 0 : index
    %80 = vector.load %arg2[%c0_201, %c0_202, %c2_203, %c0_204, %c0_205, %c0_206] : memref<1x4x4x4x4x4xf32, #tpu.memory_space<vmem>>, vector<1x1x1x1x4x4xf32>
    %81 = vector.shape_cast %80 : vector<1x1x1x1x4x4xf32> to vector<4x4xf32>
    %c0_207 = arith.constant 0 : index
    %c0_208 = arith.constant 0 : index
    %c2_209 = arith.constant 2 : index
    %c1_210 = arith.constant 1 : index
    %c0_211 = arith.constant 0 : index
    %c0_212 = arith.constant 0 : index
    %82 = vector.load %arg2[%c0_207, %c0_208, %c2_209, %c1_210, %c0_211, %c0_212] : memref<1x4x4x4x4x4xf32, #tpu.memory_space<vmem>>, vector<1x1x1x1x4x4xf32>
    %83 = vector.shape_cast %82 : vector<1x1x1x1x4x4xf32> to vector<4x4xf32>
    %c0_213 = arith.constant 0 : index
    %c0_214 = arith.constant 0 : index
    %c2_215 = arith.constant 2 : index
    %c2_216 = arith.constant 2 : index
    %c0_217 = arith.constant 0 : index
    %c0_218 = arith.constant 0 : index
    %84 = vector.load %arg2[%c0_213, %c0_214, %c2_215, %c2_216, %c0_217, %c0_218] : memref<1x4x4x4x4x4xf32, #tpu.memory_space<vmem>>, vector<1x1x1x1x4x4xf32>
    %85 = vector.shape_cast %84 : vector<1x1x1x1x4x4xf32> to vector<4x4xf32>
    %c0_219 = arith.constant 0 : index
    %c0_220 = arith.constant 0 : index
    %c2_221 = arith.constant 2 : index
    %c3_222 = arith.constant 3 : index
    %c0_223 = arith.constant 0 : index
    %c0_224 = arith.constant 0 : index
    %86 = vector.load %arg2[%c0_219, %c0_220, %c2_221, %c3_222, %c0_223, %c0_224] : memref<1x4x4x4x4x4xf32, #tpu.memory_space<vmem>>, vector<1x1x1x1x4x4xf32>
    %87 = vector.shape_cast %86 : vector<1x1x1x1x4x4xf32> to vector<4x4xf32>
    %c0_225 = arith.constant 0 : index
    %c1_226 = arith.constant 1 : index
    %c2_227 = arith.constant 2 : index
    %c0_228 = arith.constant 0 : index
    %c0_229 = arith.constant 0 : index
    %c0_230 = arith.constant 0 : index
    %88 = vector.load %arg2[%c0_225, %c1_226, %c2_227, %c0_228, %c0_229, %c0_230] : memref<1x4x4x4x4x4xf32, #tpu.memory_space<vmem>>, vector<1x1x1x1x4x4xf32>
    %89 = vector.shape_cast %88 : vector<1x1x1x1x4x4xf32> to vector<4x4xf32>
    %c0_231 = arith.constant 0 : index
    %c1_232 = arith.constant 1 : index
    %c2_233 = arith.constant 2 : index
    %c1_234 = arith.constant 1 : index
    %c0_235 = arith.constant 0 : index
    %c0_236 = arith.constant 0 : index
    %90 = vector.load %arg2[%c0_231, %c1_232, %c2_233, %c1_234, %c0_235, %c0_236] : memref<1x4x4x4x4x4xf32, #tpu.memory_space<vmem>>, vector<1x1x1x1x4x4xf32>
    %91 = vector.shape_cast %90 : vector<1x1x1x1x4x4xf32> to vector<4x4xf32>
    %c0_237 = arith.constant 0 : index
    %c1_238 = arith.constant 1 : index
    %c2_239 = arith.constant 2 : index
    %c2_240 = arith.constant 2 : index
    %c0_241 = arith.constant 0 : index
    %c0_242 = arith.constant 0 : index
    %92 = vector.load %arg2[%c0_237, %c1_238, %c2_239, %c2_240, %c0_241, %c0_242] : memref<1x4x4x4x4x4xf32, #tpu.memory_space<vmem>>, vector<1x1x1x1x4x4xf32>
    %93 = vector.shape_cast %92 : vector<1x1x1x1x4x4xf32> to vector<4x4xf32>
    %c0_243 = arith.constant 0 : index
    %c1_244 = arith.constant 1 : index
    %c2_245 = arith.constant 2 : index
    %c3_246 = arith.constant 3 : index
    %c0_247 = arith.constant 0 : index
    %c0_248 = arith.constant 0 : index
    %94 = vector.load %arg2[%c0_243, %c1_244, %c2_245, %c3_246, %c0_247, %c0_248] : memref<1x4x4x4x4x4xf32, #tpu.memory_space<vmem>>, vector<1x1x1x1x4x4xf32>
    %95 = vector.shape_cast %94 : vector<1x1x1x1x4x4xf32> to vector<4x4xf32>
    %c0_249 = arith.constant 0 : index
    %c2_250 = arith.constant 2 : index
    %c2_251 = arith.constant 2 : index
    %c0_252 = arith.constant 0 : index
    %c0_253 = arith.constant 0 : index
    %c0_254 = arith.constant 0 : index
    %96 = vector.load %arg2[%c0_249, %c2_250, %c2_251, %c0_252, %c0_253, %c0_254] : memref<1x4x4x4x4x4xf32, #tpu.memory_space<vmem>>, vector<1x1x1x1x4x4xf32>
    %97 = vector.shape_cast %96 : vector<1x1x1x1x4x4xf32> to vector<4x4xf32>
    %c0_255 = arith.constant 0 : index
    %c2_256 = arith.constant 2 : index
    %c2_257 = arith.constant 2 : index
    %c1_258 = arith.constant 1 : index
    %c0_259 = arith.constant 0 : index
    %c0_260 = arith.constant 0 : index
    %98 = vector.load %arg2[%c0_255, %c2_256, %c2_257, %c1_258, %c0_259, %c0_260] : memref<1x4x4x4x4x4xf32, #tpu.memory_space<vmem>>, vector<1x1x1x1x4x4xf32>
    %99 = vector.shape_cast %98 : vector<1x1x1x1x4x4xf32> to vector<4x4xf32>
    %c0_261 = arith.constant 0 : index
    %c2_262 = arith.constant 2 : index
    %c2_263 = arith.constant 2 : index
    %c2_264 = arith.constant 2 : index
    %c0_265 = arith.constant 0 : index
    %c0_266 = arith.constant 0 : index
    %100 = vector.load %arg2[%c0_261, %c2_262, %c2_263, %c2_264, %c0_265, %c0_266] : memref<1x4x4x4x4x4xf32, #tpu.memory_space<vmem>>, vector<1x1x1x1x4x4xf32>
    %101 = vector.shape_cast %100 : vector<1x1x1x1x4x4xf32> to vector<4x4xf32>
    %c0_267 = arith.constant 0 : index
    %c2_268 = arith.constant 2 : index
    %c2_269 = arith.constant 2 : index
    %c3_270 = arith.constant 3 : index
    %c0_271 = arith.constant 0 : index
    %c0_272 = arith.constant 0 : index
    %102 = vector.load %arg2[%c0_267, %c2_268, %c2_269, %c3_270, %c0_271, %c0_272] : memref<1x4x4x4x4x4xf32, #tpu.memory_space<vmem>>, vector<1x1x1x1x4x4xf32>
    %103 = vector.shape_cast %102 : vector<1x1x1x1x4x4xf32> to vector<4x4xf32>
    %c0_273 = arith.constant 0 : index
    %c3_274 = arith.constant 3 : index
    %c2_275 = arith.constant 2 : index
    %c0_276 = arith.constant 0 : index
    %c0_277 = arith.constant 0 : index
    %c0_278 = arith.constant 0 : index
    %104 = vector.load %arg2[%c0_273, %c3_274, %c2_275, %c0_276, %c0_277, %c0_278] : memref<1x4x4x4x4x4xf32, #tpu.memory_space<vmem>>, vector<1x1x1x1x4x4xf32>
    %105 = vector.shape_cast %104 : vector<1x1x1x1x4x4xf32> to vector<4x4xf32>
    %c0_279 = arith.constant 0 : index
    %c3_280 = arith.constant 3 : index
    %c2_281 = arith.constant 2 : index
    %c1_282 = arith.constant 1 : index
    %c0_283 = arith.constant 0 : index
    %c0_284 = arith.constant 0 : index
    %106 = vector.load %arg2[%c0_279, %c3_280, %c2_281, %c1_282, %c0_283, %c0_284] : memref<1x4x4x4x4x4xf32, #tpu.memory_space<vmem>>, vector<1x1x1x1x4x4xf32>
    %107 = vector.shape_cast %106 : vector<1x1x1x1x4x4xf32> to vector<4x4xf32>
    %c0_285 = arith.constant 0 : index
    %c3_286 = arith.constant 3 : index
    %c2_287 = arith.constant 2 : index
    %c2_288 = arith.constant 2 : index
    %c0_289 = arith.constant 0 : index
    %c0_290 = arith.constant 0 : index
    %108 = vector.load %arg2[%c0_285, %c3_286, %c2_287, %c2_288, %c0_289, %c0_290] : memref<1x4x4x4x4x4xf32, #tpu.memory_space<vmem>>, vector<1x1x1x1x4x4xf32>
    %109 = vector.shape_cast %108 : vector<1x1x1x1x4x4xf32> to vector<4x4xf32>
    %c0_291 = arith.constant 0 : index
    %c3_292 = arith.constant 3 : index
    %c2_293 = arith.constant 2 : index
    %c3_294 = arith.constant 3 : index
    %c0_295 = arith.constant 0 : index
    %c0_296 = arith.constant 0 : index
    %110 = vector.load %arg2[%c0_291, %c3_292, %c2_293, %c3_294, %c0_295, %c0_296] : memref<1x4x4x4x4x4xf32, #tpu.memory_space<vmem>>, vector<1x1x1x1x4x4xf32>
    %111 = vector.shape_cast %110 : vector<1x1x1x1x4x4xf32> to vector<4x4xf32>
    %112 = tpu.concatenate %81, %83, %85, %87, %89, %91, %93, %95, %97, %99, %101, %103, %105, %107, %109, %111 in 1 : vector<4x4xf32>, vector<4x4xf32>, vector<4x4xf32>, vector<4x4xf32>, vector<4x4xf32>, vector<4x4xf32>, vector<4x4xf32>, vector<4x4xf32>, vector<4x4xf32>, vector<4x4xf32>, vector<4x4xf32>, vector<4x4xf32>, vector<4x4xf32>, vector<4x4xf32>, vector<4x4xf32>, vector<4x4xf32> -> vector<4x64xf32>
    %cst_297 = arith.constant dense<0.000000e+00> : vector<4x32xf32>
    %113 = tpu.matmul %112, %0, %cst_297 {dimension_numbers = #tpu.dot_dimension_numbers<[1], [0], [0], [1], [0, 0, 1, 1], [], []>, precision = #tpu.contract_precision<fp32>} : vector<4x64xf32>, vector<64x32xf32>, vector<4x32xf32> -> vector<4x32xf32>
    %114 = vector.broadcast %1 : vector<1x32xf32> to vector<4x32xf32>
    %115 = arith.addf %113, %114 : vector<4x32xf32>
    %c0_298 = arith.constant 0 : index
    %c2_299 = arith.constant 2 : index
    %c0_300 = arith.constant 0 : index
    %c0_301 = arith.constant 0 : index
    %116 = vector.load %arg5[%c0_298, %c2_299, %c0_300, %c0_301] : memref<1x4x4x32xf32, #tpu.memory_space<vmem>>, vector<1x1x4x32xf32>
    %117 = vector.shape_cast %116 : vector<1x1x4x32xf32> to vector<4x32xf32>
    %118 = vector.shape_cast %115 : vector<4x32xf32> to vector<1x1x4x32xf32>
    tpu.vector_store %arg5[%c0_298, %c2_299, %c0_300, %c0_301], %118 {strides = array<i32>} : memref<1x4x4x32xf32, #tpu.memory_space<vmem>>, vector<1x1x4x32xf32>,
    %c0_302 = arith.constant 0 : index
    %c0_303 = arith.constant 0 : index
    %c3_304 = arith.constant 3 : index
    %c0_305 = arith.constant 0 : index
    %c0_306 = arith.constant 0 : index
    %c0_307 = arith.constant 0 : index
    %119 = vector.load %arg2[%c0_302, %c0_303, %c3_304, %c0_305, %c0_306, %c0_307] : memref<1x4x4x4x4x4xf32, #tpu.memory_space<vmem>>, vector<1x1x1x1x4x4xf32>
    %120 = vector.shape_cast %119 : vector<1x1x1x1x4x4xf32> to vector<4x4xf32>
    %c0_308 = arith.constant 0 : index
    %c0_309 = arith.constant 0 : index
    %c3_310 = arith.constant 3 : index
    %c1_311 = arith.constant 1 : index
    %c0_312 = arith.constant 0 : index
    %c0_313 = arith.constant 0 : index
    %121 = vector.load %arg2[%c0_308, %c0_309, %c3_310, %c1_311, %c0_312, %c0_313] : memref<1x4x4x4x4x4xf32, #tpu.memory_space<vmem>>, vector<1x1x1x1x4x4xf32>
    %122 = vector.shape_cast %121 : vector<1x1x1x1x4x4xf32> to vector<4x4xf32>
    %c0_314 = arith.constant 0 : index
    %c0_315 = arith.constant 0 : index
    %c3_316 = arith.constant 3 : index
    %c2_317 = arith.constant 2 : index
    %c0_318 = arith.constant 0 : index
    %c0_319 = arith.constant 0 : index
    %123 = vector.load %arg2[%c0_314, %c0_315, %c3_316, %c2_317, %c0_318, %c0_319] : memref<1x4x4x4x4x4xf32, #tpu.memory_space<vmem>>, vector<1x1x1x1x4x4xf32>
    %124 = vector.shape_cast %123 : vector<1x1x1x1x4x4xf32> to vector<4x4xf32>
    %c0_320 = arith.constant 0 : index
    %c0_321 = arith.constant 0 : index
    %c3_322 = arith.constant 3 : index
    %c3_323 = arith.constant 3 : index
    %c0_324 = arith.constant 0 : index
    %c0_325 = arith.constant 0 : index
    %125 = vector.load %arg2[%c0_320, %c0_321, %c3_322, %c3_323, %c0_324, %c0_325] : memref<1x4x4x4x4x4xf32, #tpu.memory_space<vmem>>, vector<1x1x1x1x4x4xf32>
    %126 = vector.shape_cast %125 : vector<1x1x1x1x4x4xf32> to vector<4x4xf32>
    %c0_326 = arith.constant 0 : index
    %c1_327 = arith.constant 1 : index
    %c3_328 = arith.constant 3 : index
    %c0_329 = arith.constant 0 : index
    %c0_330 = arith.constant 0 : index
    %c0_331 = arith.constant 0 : index
    %127 = vector.load %arg2[%c0_326, %c1_327, %c3_328, %c0_329, %c0_330, %c0_331] : memref<1x4x4x4x4x4xf32, #tpu.memory_space<vmem>>, vector<1x1x1x1x4x4xf32>
    %128 = vector.shape_cast %127 : vector<1x1x1x1x4x4xf32> to vector<4x4xf32>
    %c0_332 = arith.constant 0 : index
    %c1_333 = arith.constant 1 : index
    %c3_334 = arith.constant 3 : index
    %c1_335 = arith.constant 1 : index
    %c0_336 = arith.constant 0 : index
    %c0_337 = arith.constant 0 : index
    %129 = vector.load %arg2[%c0_332, %c1_333, %c3_334, %c1_335, %c0_336, %c0_337] : memref<1x4x4x4x4x4xf32, #tpu.memory_space<vmem>>, vector<1x1x1x1x4x4xf32>
    %130 = vector.shape_cast %129 : vector<1x1x1x1x4x4xf32> to vector<4x4xf32>
    %c0_338 = arith.constant 0 : index
    %c1_339 = arith.constant 1 : index
    %c3_340 = arith.constant 3 : index
    %c2_341 = arith.constant 2 : index
    %c0_342 = arith.constant 0 : index
    %c0_343 = arith.constant 0 : index
    %131 = vector.load %arg2[%c0_338, %c1_339, %c3_340, %c2_341, %c0_342, %c0_343] : memref<1x4x4x4x4x4xf32, #tpu.memory_space<vmem>>, vector<1x1x1x1x4x4xf32>
    %132 = vector.shape_cast %131 : vector<1x1x1x1x4x4xf32> to vector<4x4xf32>
    %c0_344 = arith.constant 0 : index
    %c1_345 = arith.constant 1 : index
    %c3_346 = arith.constant 3 : index
    %c3_347 = arith.constant 3 : index
    %c0_348 = arith.constant 0 : index
    %c0_349 = arith.constant 0 : index
    %133 = vector.load %arg2[%c0_344, %c1_345, %c3_346, %c3_347, %c0_348, %c0_349] : memref<1x4x4x4x4x4xf32, #tpu.memory_space<vmem>>, vector<1x1x1x1x4x4xf32>
    %134 = vector.shape_cast %133 : vector<1x1x1x1x4x4xf32> to vector<4x4xf32>
    %c0_350 = arith.constant 0 : index
    %c2_351 = arith.constant 2 : index
    %c3_352 = arith.constant 3 : index
    %c0_353 = arith.constant 0 : index
    %c0_354 = arith.constant 0 : index
    %c0_355 = arith.constant 0 : index
    %135 = vector.load %arg2[%c0_350, %c2_351, %c3_352, %c0_353, %c0_354, %c0_355] : memref<1x4x4x4x4x4xf32, #tpu.memory_space<vmem>>, vector<1x1x1x1x4x4xf32>
    %136 = vector.shape_cast %135 : vector<1x1x1x1x4x4xf32> to vector<4x4xf32>
    %c0_356 = arith.constant 0 : index
    %c2_357 = arith.constant 2 : index
    %c3_358 = arith.constant 3 : index
    %c1_359 = arith.constant 1 : index
    %c0_360 = arith.constant 0 : index
    %c0_361 = arith.constant 0 : index
    %137 = vector.load %arg2[%c0_356, %c2_357, %c3_358, %c1_359, %c0_360, %c0_361] : memref<1x4x4x4x4x4xf32, #tpu.memory_space<vmem>>, vector<1x1x1x1x4x4xf32>
    %138 = vector.shape_cast %137 : vector<1x1x1x1x4x4xf32> to vector<4x4xf32>
    %c0_362 = arith.constant 0 : index
    %c2_363 = arith.constant 2 : index
    %c3_364 = arith.constant 3 : index
    %c2_365 = arith.constant 2 : index
    %c0_366 = arith.constant 0 : index
    %c0_367 = arith.constant 0 : index
    %139 = vector.load %arg2[%c0_362, %c2_363, %c3_364, %c2_365, %c0_366, %c0_367] : memref<1x4x4x4x4x4xf32, #tpu.memory_space<vmem>>, vector<1x1x1x1x4x4xf32>
    %140 = vector.shape_cast %139 : vector<1x1x1x1x4x4xf32> to vector<4x4xf32>
    %c0_368 = arith.constant 0 : index
    %c2_369 = arith.constant 2 : index
    %c3_370 = arith.constant 3 : index
    %c3_371 = arith.constant 3 : index
    %c0_372 = arith.constant 0 : index
    %c0_373 = arith.constant 0 : index
    %141 = vector.load %arg2[%c0_368, %c2_369, %c3_370, %c3_371, %c0_372, %c0_373] : memref<1x4x4x4x4x4xf32, #tpu.memory_space<vmem>>, vector<1x1x1x1x4x4xf32>
    %142 = vector.shape_cast %141 : vector<1x1x1x1x4x4xf32> to vector<4x4xf32>
    %c0_374 = arith.constant 0 : index
    %c3_375 = arith.constant 3 : index
    %c3_376 = arith.constant 3 : index
    %c0_377 = arith.constant 0 : index
    %c0_378 = arith.constant 0 : index
    %c0_379 = arith.constant 0 : index
    %143 = vector.load %arg2[%c0_374, %c3_375, %c3_376, %c0_377, %c0_378, %c0_379] : memref<1x4x4x4x4x4xf32, #tpu.memory_space<vmem>>, vector<1x1x1x1x4x4xf32>
    %144 = vector.shape_cast %143 : vector<1x1x1x1x4x4xf32> to vector<4x4xf32>
    %c0_380 = arith.constant 0 : index
    %c3_381 = arith.constant 3 : index
    %c3_382 = arith.constant 3 : index
    %c1_383 = arith.constant 1 : index
    %c0_384 = arith.constant 0 : index
    %c0_385 = arith.constant 0 : index
    %145 = vector.load %arg2[%c0_380, %c3_381, %c3_382, %c1_383, %c0_384, %c0_385] : memref<1x4x4x4x4x4xf32, #tpu.memory_space<vmem>>, vector<1x1x1x1x4x4xf32>
    %146 = vector.shape_cast %145 : vector<1x1x1x1x4x4xf32> to vector<4x4xf32>
    %c0_386 = arith.constant 0 : index
    %c3_387 = arith.constant 3 : index
    %c3_388 = arith.constant 3 : index
    %c2_389 = arith.constant 2 : index
    %c0_390 = arith.constant 0 : index
    %c0_391 = arith.constant 0 : index
    %147 = vector.load %arg2[%c0_386, %c3_387, %c3_388, %c2_389, %c0_390, %c0_391] : memref<1x4x4x4x4x4xf32, #tpu.memory_space<vmem>>, vector<1x1x1x1x4x4xf32>
    %148 = vector.shape_cast %147 : vector<1x1x1x1x4x4xf32> to vector<4x4xf32>
    %c0_392 = arith.constant 0 : index
    %c3_393 = arith.constant 3 : index
    %c3_394 = arith.constant 3 : index
    %c3_395 = arith.constant 3 : index
    %c0_396 = arith.constant 0 : index
    %c0_397 = arith.constant 0 : index
    %149 = vector.load %arg2[%c0_392, %c3_393, %c3_394, %c3_395, %c0_396, %c0_397] : memref<1x4x4x4x4x4xf32, #tpu.memory_space<vmem>>, vector<1x1x1x1x4x4xf32>
    %150 = vector.shape_cast %149 : vector<1x1x1x1x4x4xf32> to vector<4x4xf32>
    %151 = tpu.concatenate %120, %122, %124, %126, %128, %130, %132, %134, %136, %138, %140, %142, %144, %146, %148, %150 in 1 : vector<4x4xf32>, vector<4x4xf32>, vector<4x4xf32>, vector<4x4xf32>, vector<4x4xf32>, vector<4x4xf32>, vector<4x4xf32>, vector<4x4xf32>, vector<4x4xf32>, vector<4x4xf32>, vector<4x4xf32>, vector<4x4xf32>, vector<4x4xf32>, vector<4x4xf32>, vector<4x4xf32>, vector<4x4xf32> -> vector<4x64xf32>
    %cst_398 = arith.constant dense<0.000000e+00> : vector<4x32xf32>
    %152 = tpu.matmul %151, %0, %cst_398 {dimension_numbers = #tpu.dot_dimension_numbers<[1], [0], [0], [1], [0, 0, 1, 1], [], []>, precision = #tpu.contract_precision<fp32>} : vector<4x64xf32>, vector<64x32xf32>, vector<4x32xf32> -> vector<4x32xf32>
    %153 = vector.broadcast %1 : vector<1x32xf32> to vector<4x32xf32>
    %154 = arith.addf %152, %153 : vector<4x32xf32>
    %c0_399 = arith.constant 0 : index
    %c3_400 = arith.constant 3 : index
    %c0_401 = arith.constant 0 : index
    %c0_402 = arith.constant 0 : index
    %155 = vector.load %arg5[%c0_399, %c3_400, %c0_401, %c0_402] : memref<1x4x4x32xf32, #tpu.memory_space<vmem>>, vector<1x1x4x32xf32>
    %156 = vector.shape_cast %155 : vector<1x1x4x32xf32> to vector<4x32xf32>
    %157 = vector.shape_cast %154 : vector<4x32xf32> to vector<1x1x4x32xf32>
    tpu.vector_store %arg5[%c0_399, %c3_400, %c0_401, %c0_402], %157 {strides = array<i32>} : memref<1x4x4x32xf32, #tpu.memory_space<vmem>>, vector<1x1x4x32xf32>,
    return
  }
  func.func @transform_0(%arg0: i32, %arg1: i32) -> (i32, i32, i32, i32, i32, i32) {
    %c0_i32 = arith.constant 0 : i32
    %c0_i32_0 = arith.constant 0 : i32
    %c0_i32_1 = arith.constant 0 : i32
    %c0_i32_2 = arith.constant 0 : i32
    %c0_i32_3 = arith.constant 0 : i32
    return %arg0, %c0_i32, %arg1, %c0_i32_0, %c0_i32_1, %c0_i32_2 : i32, i32, i32, i32, i32, i32
  }
  func.func @transform_1(%arg0: i32, %arg1: i32) -> (i32, i32) {
    %c0_i32 = arith.constant 0 : i32
    %c0_i32_0 = arith.constant 0 : i32
    %c0_i32_1 = arith.constant 0 : i32
    return %c0_i32, %c0_i32_0 : i32, i32
  }
  func.func @transform_2(%arg0: i32, %arg1: i32) -> (i32, i32) {
    %c0_i32 = arith.constant 0 : i32
    %c0_i32_0 = arith.constant 0 : i32
    %c0_i32_1 = arith.constant 0 : i32
    return %c0_i32, %c0_i32_0 : i32, i32
  }
  func.func @transform_3(%arg0: i32, %arg1: i32) -> (i32, i32, i32, i32) {
    %c0_i32 = arith.constant 0 : i32
    %c0_i32_0 = arith.constant 0 : i32
    %c0_i32_1 = arith.constant 0 : i32
    return %arg0, %arg1, %c0_i32, %c0_i32_0 : i32, i32, i32, i32
  }
}

</mosaic_0001>

<llo_original>
// kernel: tpu_custom_call.1
$region0: #{tpu_custom_call.1}
  #allocation0 [shape = 'u32[]', space=smem, size = 0x4, offset = 0x4, fixed_abs, tag = 'smem constant byte address 0x4 - core index']
  #allocation1 [shape = 'u32[144,128]{1,0:T(1,128)}', space=vmem, size = 0x12000, scoped, tag = 'internal scratch']
  %s0 = inlined_call_operand.hbm [shape: f32[2,4,4,4,4,4], index: 0, kind: input, shape index: {}]
  %s1 = inlined_call_operand.vmem [shape: f32[64,32], index: 1, kind: input, shape index: {}]
  %s2 = inlined_call_operand.vmem [shape: f32[1,32], index: 2, kind: input, shape index: {}]
  %s3 = inlined_call_operand.hbm [shape: f32[2,4,4,32], index: 3, kind: output, shape index: {}]
  %s4 = sld [smem:[#allocation0]]
  $region49: #{tpu_custom_call.1} parent=0
    _
  %s6 = ssub.s32 1, %s4
  %s7 = scalar_select 0, %s6, %s4
  $region1: #{tpu_custom_call.1} parent=0
    #allocation2 [shape = 'u8[262144]{0}', space=vmem, size = 0x40000, scoped, tag = 'input window, operand 0']
    #allocation3 [shape = 's32[2]{0}', space=sflag, size = 0x8, scoped, tag = 'scoped memory for tpu_custom_call.1']
    #allocation4 [shape = 's32[2]{0}', space=sflag, size = 0x8, scoped, tag = 'scoped memory for tpu_custom_call.1']
    #allocation5 [shape = 'u8[16384]{0}', space=vmem, size = 0x4000, scoped, tag = 'output window, operand 0']
    %8 = vsyncpa [#allocation3], 0
    %s9 = scalar_lea.sflag [#allocation3], 1
    %10 = vsyncpa %s9, 0
    %11 = vsyncpa [#allocation4], 0
    %s12 = scalar_lea.sflag [#allocation4], 1
    %13 = vsyncpa %s12, 0
    loop: start=0, step=1, limit=4
    $region2: #{tpu_custom_call.1} parent=1 // loop_pre_header
      _
    $region3: #{tpu_custom_call.1} parent=1 // loop_header
      %s15 = sphi 0, %s19
      %p16 = scmp.ge.s32.totalorder %s15, 4
      %s22 = sphi 0, %s34
      %s23 = sphi 0, %s30
      %s24 = sphi 0, %s22
      %s25 = sphi 0, %s23
      %s26 = sphi 0, %s24
      %s27 = sphi 0, %s25
      %s39 = sphi 0, %s41
      %s42 = sphi 0, %s39
      %s43 = sphi 0, %s42
      %s59 = sphi 0, %s43
      %s63 = sphi 0, %s63
      %s65 = sphi 0, %s63
      %s66 = sphi 0, %s65
      %s80 = sphi 0, %s66
      %s84 = sphi 0, %s84
      %s86 = sphi 0, %s84
      %s87 = sphi 0, %s86
      %s101 = sphi 0, %s87
      %s109 = sphi 0, %s111
      %s112 = sphi 0, %s109
      %s113 = sphi 0, %s112
      %s129 = sphi 0, %s113
    $region4: #{tpu_custom_call.1} parent=1 // loop_header_branch
      %18 = sbr.rel (%p16) target = $region8
    $region5: #{tpu_custom_call.1} parent=1 // loop_body
      %s20 = ssub.s32 %s15, 1
      %s21 = ssub.s32 %s15, 2
      %s28 = sadd.s32 1, %s23
      %p29 = scmp.ge.s32.totalorder %s28, 1
      %s30 = scalar_select %p29, 0, %s28
      %s31 = sadd.s32 1, %s22
      %s32 = scalar_select %p29, %s31, %s22
      %p33 = scmp.ge.s32.totalorder %s32, 2
      %s34 = scalar_select %p33, 0, %s32
      %s35 = ssub.s32 %s22, %s34
      %s36 = ssub.s32 %s23, %s30
      %s37 = sor.u32 %s35, %s36
      %p38 = scmp.eq.s32.totalorder %s37, 0
      %s40 = sadd.s32 %s39, 1
      %s41 = scalar_select %p38, %s39, %s40
      %p44 = pneg %p38
      %p45 = scmp.eq.s32.totalorder %s15, 1
      %p46 = por %p44, %p45
      %p47 = scmp.ne.s32.totalorder %s39, %s42
      %p48 = scmp.eq.s32.totalorder %s15, 0
      %p49 = por %p47, %p48
      %p50 = scmp.ne.s32.totalorder %s39, %s42
      %p51 = scmp.eq.s32.totalorder %s20, 1
      %p52 = por %p50, %p51
      %p53 = scmp.ne.s32.totalorder %s42, %s43
      %p54 = scmp.eq.s32.totalorder %s20, 0
      %p55 = por %p53, %p54
      %p56 = scmp.ne.s32.totalorder %s42, %s43
      %p57 = scmp.eq.s32.totalorder %s21, 1
      %p58 = por %p56, %p57
      %p60 = scmp.ne.s32.totalorder %s43, %s59
      %p61 = scmp.eq.s32.totalorder %s21, 0
      %p62 = por %p60, %p61
      %s64 = sadd.s32 %s63, 1
      %p67 = scmp.eq.s32.totalorder %s15, 1
      %p68 = scmp.ne.s32.totalorder %s63, %s65
      %p69 = scmp.eq.s32.totalorder %s15, 0
      %p70 = por %p68, %p69
      %p71 = scmp.ne.s32.totalorder %s63, %s65
      %p72 = scmp.eq.s32.totalorder %s20, 1
      %p73 = por %p71, %p72
      %p74 = scmp.ne.s32.totalorder %s65, %s66
      %p75 = scmp.eq.s32.totalorder %s20, 0
      %p76 = por %p74, %p75
      %p77 = scmp.ne.s32.totalorder %s65, %s66
      %p78 = scmp.eq.s32.totalorder %s21, 1
      %p79 = por %p77, %p78
      %p81 = scmp.ne.s32.totalorder %s66, %s80
      %p82 = scmp.eq.s32.totalorder %s21, 0
      %p83 = por %p81, %p82
      %s85 = sadd.s32 %s84, 1
      %p88 = scmp.eq.s32.totalorder %s15, 1
      %p89 = scmp.ne.s32.totalorder %s84, %s86
      %p90 = scmp.eq.s32.totalorder %s15, 0
      %p91 = por %p89, %p90
      %p92 = scmp.ne.s32.totalorder %s84, %s86
      %p93 = scmp.eq.s32.totalorder %s20, 1
      %p94 = por %p92, %p93
      %p95 = scmp.ne.s32.totalorder %s86, %s87
      %p96 = scmp.eq.s32.totalorder %s20, 0
      %p97 = por %p95, %p96
      %p98 = scmp.ne.s32.totalorder %s86, %s87
      %p99 = scmp.eq.s32.totalorder %s21, 1
      %p100 = por %p98, %p99
      %p102 = scmp.ne.s32.totalorder %s87, %s101
      %p103 = scmp.eq.s32.totalorder %s21, 0
      %p104 = por %p102, %p103
      %s105 = ssub.s32 %s22, %s34
      %s106 = ssub.s32 %s23, %s30
      %s107 = sor.u32 %s105, %s106
      %p108 = scmp.eq.s32.totalorder %s107, 0
      %s110 = sadd.s32 %s109, 1
      %s111 = scalar_select %p108, %s109, %s110
      %p114 = pneg %p108
      %p115 = scmp.eq.s32.totalorder %s15, 1
      %p116 = por %p114, %p115
      %p117 = scmp.ne.s32.totalorder %s109, %s112
      %p118 = scmp.eq.s32.totalorder %s15, 0
      %p119 = por %p117, %p118
      %p120 = scmp.ne.s32.totalorder %s109, %s112
      %p121 = scmp.eq.s32.totalorder %s20, 1
      %p122 = por %p120, %p121
      %p123 = scmp.ne.s32.totalorder %s112, %s113
      %p124 = scmp.eq.s32.totalorder %s20, 0
      %p125 = por %p123, %p124
      %p126 = scmp.ne.s32.totalorder %s112, %s113
      %p127 = scmp.eq.s32.totalorder %s21, 1
      %p128 = por %p126, %p127
      %p130 = scmp.ne.s32.totalorder %s113, %s129
      %p131 = scmp.eq.s32.totalorder %s21, 0
      %p132 = por %p130, %p131
      %p133 = scmp.le.s32.totalorder 1, %s15
      %p134 = scmp.lt.s32.totalorder %s15, 3
      %p135 = pnand %p133, %p134
      %p136 = pneg %p135
      // Predicated region
      $region9: #{tpu_custom_call.1} parent=5 // pred_check
        _
      $region10: #{tpu_custom_call.1} parent=5 // pred_check_branch
        %138 = sbr.rel (%p135) target = $region12
      $region11: #{tpu_custom_call.1} parent=5 // pred_region
        %s139 = ssub.s32 %s15, 1
        // Predicated region
        $region13: #{tpu_custom_call.1} parent=11 // pred_check
          %p140 = pneg %p76
        $region14: #{tpu_custom_call.1} parent=11 // pred_check_branch
          %142 = sbr.rel (%p140) target = $region16
        $region15: #{tpu_custom_call.1} parent=11 // pred_region
          _
        $region16: #{tpu_custom_call.1} parent=11 // pred_fallthru
          _
        // Predicated region
        $region17: #{tpu_custom_call.1} parent=11 // pred_check
          %p143 = pneg %p97
        $region18: #{tpu_custom_call.1} parent=11 // pred_check_branch
          %145 = sbr.rel (%p143) target = $region20
        $region19: #{tpu_custom_call.1} parent=11 // pred_region
          _
        $region20: #{tpu_custom_call.1} parent=11 // pred_fallthru
          _
      $region12: #{tpu_custom_call.1} parent=5 // pred_fallthru
        _
      %p146 = scmp.lt.s32.totalorder %s15, 2
      // Predicated region
      $region21: #{tpu_custom_call.1} parent=5 // pred_check
        %p147 = pneg %p146
      $region22: #{tpu_custom_call.1} parent=5 // pred_check_branch
        %149 = sbr.rel (%p147) target = $region24
      $region23: #{tpu_custom_call.1} parent=5 // pred_region
        // Predicated region
        $region25: #{tpu_custom_call.1} parent=23 // pred_check
          %p150 = pneg %p49
        $region26: #{tpu_custom_call.1} parent=23 // pred_check_branch
          %152 = sbr.rel (%p150) target = $region28
        $region27: #{tpu_custom_call.1} parent=23 // pred_region
          %s153 = sand.u32 %s39, 1
          %s154 = scalar_lea.sflag [#allocation3], %s153
          %s155 = sand.u32 %s39, 1
          %s156 = smul.addr %s155, 256
          %s157 = scalar_lea.vmem [#allocation2], %s156
          %s158 = smul.u32 4, %s23
          %s160 = ssub.s32 4096, 4096
          %161 = vsyncadd %s154, %s160
          %s162 = smul.addr %s158, 4
          %s163 = smul.addr %s22, 64
          %s164 = sadd.s32 %s162, %s163
          %s165 = smul.addr %s164, 64
          %s166 = scalar_lea.hbm %s0, %s165
          %s167 = sshll.u32 %s157, 4
          %s168 = int_to_ptr.vmem [resolvable:$true] %s167
          %173 = dma.hbm_to_vmem [thread:$0]  %s166, 4096, %s168, %s154, 64, 64, 4
        $region28: #{tpu_custom_call.1} parent=23 // pred_fallthru
          _
      $region24: #{tpu_custom_call.1} parent=5 // pred_fallthru
        _
      %p174 = scmp.le.s32.totalorder 1, %s15
      %p175 = scmp.lt.s32.totalorder %s15, 3
      %p176 = pnand %p174, %p175
      %p177 = pneg %p176
      // Predicated region
      $region29: #{tpu_custom_call.1} parent=5 // pred_check
        _
      $region30: #{tpu_custom_call.1} parent=5 // pred_check_branch
        %179 = sbr.rel (%p176) target = $region32
      $region31: #{tpu_custom_call.1} parent=5 // pred_region
        %s180 = ssub.s32 %s15, 1
        %s181 = sand.u32 %s42, 1
        %s182 = scalar_lea.sflag [#allocation3], %s181
        %s183 = sand.u32 %s42, 1
        %s184 = smul.addr %s183, 256
        %s185 = scalar_lea.vmem [#allocation2], %s184
        // Predicated region
        $region33: #{tpu_custom_call.1} parent=31 // pred_check
          %p186 = pneg %p55
        $region34: #{tpu_custom_call.1} parent=31 // pred_check_branch
          %188 = sbr.rel (%p186) target = $region36
        $region35: #{tpu_custom_call.1} parent=31 // pred_region
          %189 = dma.done %s182, 4096
        $region36: #{tpu_custom_call.1} parent=31 // pred_fallthru
          _
        %s190 = sand.u32 %s42, 1
        %s191 = scalar_lea.sflag [#allocation3], %s190
        %s192 = sand.u32 %s42, 1
        %s193 = smul.addr %s192, 256
        %s194 = scalar_lea.vmem [#allocation2], %s193
        %p195 = pneg %p55
        %p196 = pneg %p52
        %p197 = pneg %p76
        %p198 = pneg %p73
        %p199 = pneg %p97
        %p200 = pneg %p94
        %p201 = pneg %p125
        %p202 = pneg %p122
        %s203 = sand.u32 %s112, 1
        %s204 = scalar_lea.sflag [#allocation4], %s203
        %s205 = sand.u32 %s112, 1
        %s206 = smul.addr %s205, 16
        %s207 = scalar_lea.vmem [#allocation5], %s206
        %s208 = smul.u32 4, %s25
        %s209 = smul.u32 4, %s25
        %v210 = vld [vmem:[%s1] sm:$0xff]
        %v211 = vld [vmem:[%s1 + $0x8] sm:$0xff]
        %v212 = vld [vmem:[%s1 + $0x10] sm:$0xff]
        %v213 = vld [vmem:[%s1 + $0x18] sm:$0xff]
        %v214 = vld [vmem:[%s1 + $0x20] sm:$0xff]
        %v215 = vld [vmem:[%s1 + $0x28] sm:$0xff]
        %v216 = vld [vmem:[%s1 + $0x30] sm:$0xff]
        %v217 = vld [vmem:[%s1 + $0x38] sm:$0xff]
        %v218 = vld [vmem:[%s2] sm:$0x1]
        %v219 = vld [vmem:[%s185] sm:$0xf]
        %s220 = scalar_lea.vmem %s185, 4 [#allocation2]
        %v221 = vld [vmem:[%s220] sm:$0xf]
        %s222 = scalar_lea.vmem %s185, 8 [#allocation2]
        %v223 = vld [vmem:[%s222] sm:$0xf]
        %s224 = scalar_lea.vmem %s185, 12 [#allocation2]
        %v225 = vld [vmem:[%s224] sm:$0xf]
        %s226 = scalar_lea.vmem %s185, 64 [#allocation2]
        %v227 = vld [vmem:[%s226] sm:$0xf]
        %s228 = scalar_lea.vmem %s185, 68 [#allocation2]
        %v229 = vld [vmem:[%s228] sm:$0xf]
        %s230 = scalar_lea.vmem %s185, 72 [#allocation2]
        %v231 = vld [vmem:[%s230] sm:$0xf]
        %s232 = scalar_lea.vmem %s185, 76 [#allocation2]
        %v233 = vld [vmem:[%s232] sm:$0xf]
        %s234 = scalar_lea.vmem %s185, 128 [#allocation2]
        %v235 = vld [vmem:[%s234] sm:$0xf]
        %s236 = scalar_lea.vmem %s185, 132 [#allocation2]
        %v237 = vld [vmem:[%s236] sm:$0xf]
        %s238 = scalar_lea.vmem %s185, 136 [#allocation2]
        %v239 = vld [vmem:[%s238] sm:$0xf]
        %s240 = scalar_lea.vmem %s185, 140 [#allocation2]
        %v241 = vld [vmem:[%s240] sm:$0xf]
        %s242 = scalar_lea.vmem %s185, 192 [#allocation2]
        %v243 = vld [vmem:[%s242] sm:$0xf]
        %s244 = scalar_lea.vmem %s185, 196 [#allocation2]
        %v245 = vld [vmem:[%s244] sm:$0xf]
        %s246 = scalar_lea.vmem %s185, 200 [#allocation2]
        %v247 = vld [vmem:[%s246] sm:$0xf]
        %s248 = scalar_lea.vmem %s185, 204 [#allocation2]
        %v249 = vld [vmem:[%s248] sm:$0xf]
        %251 = vrot.lane.b32.xlu0 %v221, 4
        %v252 = vpop.permute.xlu0 %251
        %255 = vrot.lane.b32.xlu0 %v223, 8
        %v256 = vpop.permute.xlu0 %255
        %259 = vrot.lane.b32.xlu0 %v225, 12
        %v260 = vpop.permute.xlu0 %259
        %263 = vrot.lane.b32.xlu0 %v227, 16
        %v264 = vpop.permute.xlu0 %263
        %267 = vrot.lane.b32.xlu0 %v229, 20
        %v268 = vpop.permute.xlu0 %267
        %271 = vrot.lane.b32.xlu0 %v231, 24
        %v272 = vpop.permute.xlu0 %271
        %275 = vrot.lane.b32.xlu0 %v233, 28
        %v276 = vpop.permute.xlu0 %275
        %279 = vrot.lane.b32.xlu0 %v235, 32
        %v280 = vpop.permute.xlu0 %279
        %283 = vrot.lane.b32.xlu0 %v237, 36
        %v284 = vpop.permute.xlu0 %283
        %287 = vrot.lane.b32.xlu0 %v239, 40
        %v288 = vpop.permute.xlu0 %287
        %291 = vrot.lane.b32.xlu0 %v241, 44
        %v292 = vpop.permute.xlu0 %291
        %295 = vrot.lane.b32.xlu0 %v243, 48
        %v296 = vpop.permute.xlu0 %295
        %299 = vrot.lane.b32.xlu0 %v245, 52
        %v300 = vpop.permute.xlu0 %299
        %303 = vrot.lane.b32.xlu0 %v247, 56
        %v304 = vpop.permute.xlu0 %303
        %307 = vrot.lane.b32.xlu0 %v249, 60
        %v308 = vpop.permute.xlu0 %307
        %vm310 = vcmask 31744
        %v311 = vsel %vm310, %v219, %v252
        %vm312 = vcmask 64512
        %v313 = vsel %vm312, %v311, %v256
        %vm314 = vcmask 97280
        %v315 = vsel %vm314, %v313, %v260
        %vm316 = vcmask 130048
        %v317 = vsel %vm316, %v315, %v264
        %vm318 = vcmask 162816
        %v319 = vsel %vm318, %v317, %v268
        %vm320 = vcmask 195584
        %v321 = vsel %vm320, %v319, %v272
        %vm322 = vcmask 228352
        %v323 = vsel %vm322, %v321, %v276
        %vm324 = vcmask 261120
        %v325 = vsel %vm324, %v323, %v280
        %vm326 = vcmask 293888
        %v327 = vsel %vm326, %v325, %v284
        %vm328 = vcmask 326656
        %v329 = vsel %vm328, %v327, %v288
        %vm330 = vcmask 359424
        %v331 = vsel %vm330, %v329, %v292
        %vm332 = vcmask 392192
        %v333 = vsel %vm332, %v331, %v296
        %vm334 = vcmask 424960
        %v335 = vsel %vm334, %v333, %v300
        %vm336 = vcmask 457728
        %v337 = vsel %vm336, %v335, %v304
        %vm338 = vcmask 490496
        %v339 = vsel %vm338, %v337, %v308
        %v341 = vlaneseq
        %v342 = vshrl.u32 %v341, 7
        %v343 = vsub.s32 0, %v342
        %v344 = vrot.slane %v218, %v343
        %vm346 = vcmask 523264
        %v348 = vsel %vm346, %v339, 0
        %350 = vmatprep.subr.mxu0 0.0
        %v351 = vand.u32 %v210, 4294901760
        %352 = vmatpush1.msra.mxu0 %v351
        %353 = vmatprep.subr.mxu0 0.0
        %v354 = vand.u32 %v211, 4294901760
        %355 = vmatpush1.msra.mxu0 %v354
        %356 = vmatprep.subr.mxu0 0.0
        %v357 = vand.u32 %v212, 4294901760
        %358 = vmatpush1.msra.mxu0 %v357
        %359 = vmatprep.subr.mxu0 0.0
        %v360 = vand.u32 %v213, 4294901760
        %361 = vmatpush1.msra.mxu0 %v360
        %362 = vmatprep.subr.mxu0 0.0
        %v363 = vand.u32 %v214, 4294901760
        %364 = vmatpush1.msra.mxu0 %v363
        %365 = vmatprep.subr.mxu0 0.0
        %v366 = vand.u32 %v215, 4294901760
        %367 = vmatpush1.msra.mxu0 %v366
        %368 = vmatprep.subr.mxu0 0.0
        %v369 = vand.u32 %v216, 4294901760
        %370 = vmatpush1.msra.mxu0 %v369
        %371 = vmatprep.subr.mxu0 0.0
        %v372 = vand.u32 %v217, 4294901760
        %373 = vmatpush1.msra.mxu0 %v372
        %374 = vmatprep.subr.mxu0 0.0
        %375 = vmatpush1.msra.mxu0 0.0
        %376 = vmatprep.subr.mxu0 0.0
        %377 = vmatpush1.msra.mxu0 0.0
        %378 = vmatprep.subr.mxu0 0.0
        %379 = vmatpush1.msra.mxu0 0.0
        %380 = vmatprep.subr.mxu0 0.0
        %381 = vmatpush1.msra.mxu0 0.0
        %382 = vmatprep.subr.mxu0 0.0
        %383 = vmatpush1.msra.mxu0 0.0
        %384 = vmatprep.subr.mxu0 0.0
        %385 = vmatpush1.msra.mxu0 0.0
        %386 = vmatprep.subr.mxu0 0.0
        %387 = vmatpush1.msra.mxu0 0.0
        %388 = vmatprep.subr.mxu0 0.0
        %389 = vmatpush1.msra.mxu0 0.0
        %390 = vmatprep.subr.mxu0 0.0
        %391 = vmatpush1.msra.mxu0 0.0
        %392 = vmatprep.subr.mxu0 0.0
        %393 = vmatpush1.msra.mxu0 0.0
        %394 = vmatprep.subr.mxu0 0.0
        %395 = vmatpush1.msra.mxu0 0.0
        %396 = vmatprep.subr.mxu0 0.0
        %397 = vmatpush1.msra.mxu0 0.0
        %398 = vmatprep.subr.mxu0 0.0
        %399 = vmatpush1.msra.mxu0 0.0
        %400 = vmatprep.subr.mxu0 0.0
        %401 = vmatpush1.msra.mxu0 0.0
        %402 = vmatprep.subr.mxu0 0.0
        %403 = vmatpush1.msra.mxu0 0.0
        %404 = vmatprep.subr.mxu0 0.0
        %405 = vmatpush1.msra.mxu0 0.0
        %406 = vmatprep.subr.mxu0 0.0
        %407 = vmatpush1.msra.mxu0 0.0
        %408 = vmatprep.subr.mxu0 0.0
        %409 = vmatpush1.msra.mxu0 0.0
        %410 = vmatprep.subr.mxu0 0.0
        %411 = vmatpush1.msra.mxu0 0.0
        %412 = vmatprep.subr.mxu0 0.0
        %413 = vmatpush1.msra.mxu0 0.0
        %414 = vmatprep.subr.mxu0 0.0
        %415 = vmatpush1.msra.mxu0 0.0
        %416 = vmatprep.subr.mxu0 0.0
        %417 = vmatpush1.msra.mxu0 0.0
        %418 = vmatprep.subr.mxu0 0.0
        %419 = vmatpush1.msra.mxu0 0.0
        %420 = vmatprep.subr.mxu0 0.0
        %421 = vmatpush1.msra.mxu0 0.0
        %422 = vmatprep.mubr.f32.mxu0 0.0
        %v423 = vand.u32 %v348, 4294901760
        %v424 = vsub.f32 %v348, %v423
        %v425 = vand.u32 %v424, 4294901760
        %v426 = vsub.f32 %v424, %v425
        %v427 = vand.u32 %v426, 4294901760
        %428 = vmatmul.mubr.f32.gmra.mrb[0].mxu0 %v427
        %v429 = vpop.f32.mrb[0].mxu0
        %v430 = vadd.f32 %v344, %v429
        %v431 = vpop.f32.mrb[0].mxu0
        %432 = vdwg.mxu0
        %433 = vmatprep.subr.mxu0 0.0
        %v434 = vand.u32 %v210, 4294901760
        %v435 = vsub.f32 %v210, %v434
        %v436 = vand.u32 %v435, 4294901760
        %v437 = vsub.f32 %v435, %v436
        %v438 = vand.u32 %v437, 4294901760
        %439 = vmatpush1.msra.mxu0 %v438
        %440 = vmatprep.subr.mxu0 0.0
        %v441 = vand.u32 %v211, 4294901760
        %v442 = vsub.f32 %v211, %v441
        %v443 = vand.u32 %v442, 4294901760
        %v444 = vsub.f32 %v442, %v443
        %v445 = vand.u32 %v444, 4294901760
        %446 = vmatpush1.msra.mxu0 %v445
        %447 = vmatprep.subr.mxu0 0.0
        %v448 = vand.u32 %v212, 4294901760
        %v449 = vsub.f32 %v212, %v448
        %v450 = vand.u32 %v449, 4294901760
        %v451 = vsub.f32 %v449, %v450
        %v452 = vand.u32 %v451, 4294901760
        %453 = vmatpush1.msra.mxu0 %v452
        %454 = vmatprep.subr.mxu0 0.0
        %v455 = vand.u32 %v213, 4294901760
        %v456 = vsub.f32 %v213, %v455
        %v457 = vand.u32 %v456, 4294901760
        %v458 = vsub.f32 %v456, %v457
        %v459 = vand.u32 %v458, 4294901760
        %460 = vmatpush1.msra.mxu0 %v459
        %461 = vmatprep.subr.mxu0 0.0
        %v462 = vand.u32 %v214, 4294901760
        %v463 = vsub.f32 %v214, %v462
        %v464 = vand.u32 %v463, 4294901760
        %v465 = vsub.f32 %v463, %v464
        %v466 = vand.u32 %v465, 4294901760
        %467 = vmatpush1.msra.mxu0 %v466
        %468 = vmatprep.subr.mxu0 0.0
        %v469 = vand.u32 %v215, 4294901760
        %v470 = vsub.f32 %v215, %v469
        %v471 = vand.u32 %v470, 4294901760
        %v472 = vsub.f32 %v470, %v471
        %v473 = vand.u32 %v472, 4294901760
        %474 = vmatpush1.msra.mxu0 %v473
        %475 = vmatprep.subr.mxu0 0.0
        %v476 = vand.u32 %v216, 4294901760
        %v477 = vsub.f32 %v216, %v476
        %v478 = vand.u32 %v477, 4294901760
        %v479 = vsub.f32 %v477, %v478
        %v480 = vand.u32 %v479, 4294901760
        %481 = vmatpush1.msra.mxu0 %v480
        %482 = vmatprep.subr.mxu0 0.0
        %v483 = vand.u32 %v217, 4294901760
        %v484 = vsub.f32 %v217, %v483
        %v485 = vand.u32 %v484, 4294901760
        %v486 = vsub.f32 %v484, %v485
        %v487 = vand.u32 %v486, 4294901760
        %488 = vmatpush1.msra.mxu0 %v487
        %489 = vmatprep.subr.mxu0 0.0
        %490 = vmatpush1.msra.mxu0 0.0
        %491 = vmatprep.subr.mxu0 0.0
        %492 = vmatpush1.msra.mxu0 0.0
        %493 = vmatprep.subr.mxu0 0.0
        %494 = vmatpush1.msra.mxu0 0.0
        %495 = vmatprep.subr.mxu0 0.0
        %496 = vmatpush1.msra.mxu0 0.0
        %497 = vmatprep.subr.mxu0 0.0
        %498 = vmatpush1.msra.mxu0 0.0
        %499 = vmatprep.subr.mxu0 0.0
        %500 = vmatpush1.msra.mxu0 0.0
        %501 = vmatprep.subr.mxu0 0.0
        %502 = vmatpush1.msra.mxu0 0.0
        %503 = vmatprep.subr.mxu0 0.0
        %504 = vmatpush1.msra.mxu0 0.0
        %505 = vmatprep.subr.mxu0 0.0
        %506 = vmatpush1.msra.mxu0 0.0
        %507 = vmatprep.subr.mxu0 0.0
        %508 = vmatpush1.msra.mxu0 0.0
        %509 = vmatprep.subr.mxu0 0.0
        %510 = vmatpush1.msra.mxu0 0.0
        %511 = vmatprep.subr.mxu0 0.0
        %512 = vmatpush1.msra.mxu0 0.0
        %513 = vmatprep.subr.mxu0 0.0
        %514 = vmatpush1.msra.mxu0 0.0
        %515 = vmatprep.subr.mxu0 0.0
        %516 = vmatpush1.msra.mxu0 0.0
        %517 = vmatprep.subr.mxu0 0.0
        %518 = vmatpush1.msra.mxu0 0.0
        %519 = vmatprep.subr.mxu0 0.0
        %520 = vmatpush1.msra.mxu0 0.0
        %521 = vmatprep.subr.mxu0 0.0
        %522 = vmatpush1.msra.mxu0 0.0
        %523 = vmatprep.subr.mxu0 0.0
        %524 = vmatpush1.msra.mxu0 0.0
        %525 = vmatprep.subr.mxu0 0.0
        %526 = vmatpush1.msra.mxu0 0.0
        %527 = vmatprep.subr.mxu0 0.0
        %528 = vmatpush1.msra.mxu0 0.0
        %529 = vmatprep.subr.mxu0 0.0
        %530 = vmatpush1.msra.mxu0 0.0
        %531 = vmatprep.subr.mxu0 0.0
        %532 = vmatpush1.msra.mxu0 0.0
        %533 = vmatprep.subr.mxu0 0.0
        %534 = vmatpush1.msra.mxu0 0.0
        %535 = vmatprep.subr.mxu0 0.0
        %536 = vmatpush1.msra.mxu0 0.0
        %537 = vmatprep.mubr.f32.mxu0 0.0
        %v538 = vand.u32 %v348, 4294901760
        %539 = vmatmul.mubr.f32.gmra.mrb[0].mxu0 %v538
        %v540 = vpop.f32.mrb[0].mxu0
        %v541 = vadd.f32 %v430, %v540
        %v542 = vpop.f32.mrb[0].mxu0
        %543 = vdwg.mxu0
        %544 = vmatprep.subr.mxu0 0.0
        %v545 = vand.u32 %v210, 4294901760
        %v546 = vsub.f32 %v210, %v545
        %547 = vmatpush1.msra.mxu0 %v546
        %548 = vmatprep.subr.mxu0 0.0
        %v549 = vand.u32 %v211, 4294901760
        %v550 = vsub.f32 %v211, %v549
        %551 = vmatpush1.msra.mxu0 %v550
        %552 = vmatprep.subr.mxu0 0.0
        %v553 = vand.u32 %v212, 4294901760
        %v554 = vsub.f32 %v212, %v553
        %555 = vmatpush1.msra.mxu0 %v554
        %556 = vmatprep.subr.mxu0 0.0
        %v557 = vand.u32 %v213, 4294901760
        %v558 = vsub.f32 %v213, %v557
        %559 = vmatpush1.msra.mxu0 %v558
        %560 = vmatprep.subr.mxu0 0.0
        %v561 = vand.u32 %v214, 4294901760
        %v562 = vsub.f32 %v214, %v561
        %563 = vmatpush1.msra.mxu0 %v562
        %564 = vmatprep.subr.mxu0 0.0
        %v565 = vand.u32 %v215, 4294901760
        %v566 = vsub.f32 %v215, %v565
        %567 = vmatpush1.msra.mxu0 %v566
        %568 = vmatprep.subr.mxu0 0.0
        %v569 = vand.u32 %v216, 4294901760
        %v570 = vsub.f32 %v216, %v569
        %571 = vmatpush1.msra.mxu0 %v570
        %572 = vmatprep.subr.mxu0 0.0
        %v573 = vand.u32 %v217, 4294901760
        %v574 = vsub.f32 %v217, %v573
        %575 = vmatpush1.msra.mxu0 %v574
        %576 = vmatprep.subr.mxu0 0.0
        %577 = vmatpush1.msra.mxu0 0.0
        %578 = vmatprep.subr.mxu0 0.0
        %579 = vmatpush1.msra.mxu0 0.0
        %580 = vmatprep.subr.mxu0 0.0
        %581 = vmatpush1.msra.mxu0 0.0
        %582 = vmatprep.subr.mxu0 0.0
        %583 = vmatpush1.msra.mxu0 0.0
        %584 = vmatprep.subr.mxu0 0.0
        %585 = vmatpush1.msra.mxu0 0.0
        %586 = vmatprep.subr.mxu0 0.0
        %587 = vmatpush1.msra.mxu0 0.0
        %588 = vmatprep.subr.mxu0 0.0
        %589 = vmatpush1.msra.mxu0 0.0
        %590 = vmatprep.subr.mxu0 0.0
        %591 = vmatpush1.msra.mxu0 0.0
        %592 = vmatprep.subr.mxu0 0.0
        %593 = vmatpush1.msra.mxu0 0.0
        %594 = vmatprep.subr.mxu0 0.0
        %595 = vmatpush1.msra.mxu0 0.0
        %596 = vmatprep.subr.mxu0 0.0
        %597 = vmatpush1.msra.mxu0 0.0
        %598 = vmatprep.subr.mxu0 0.0
        %599 = vmatpush1.msra.mxu0 0.0
        %600 = vmatprep.subr.mxu0 0.0
        %601 = vmatpush1.msra.mxu0 0.0
        %602 = vmatprep.subr.mxu0 0.0
        %603 = vmatpush1.msra.mxu0 0.0
        %604 = vmatprep.subr.mxu0 0.0
        %605 = vmatpush1.msra.mxu0 0.0
        %606 = vmatprep.subr.mxu0 0.0
        %607 = vmatpush1.msra.mxu0 0.0
        %608 = vmatprep.subr.mxu0 0.0
        %609 = vmatpush1.msra.mxu0 0.0
        %610 = vmatprep.subr.mxu0 0.0
        %611 = vmatpush1.msra.mxu0 0.0
        %612 = vmatprep.subr.mxu0 0.0
        %613 = vmatpush1.msra.mxu0 0.0
        %614 = vmatprep.subr.mxu0 0.0
        %615 = vmatpush1.msra.mxu0 0.0
        %616 = vmatprep.subr.mxu0 0.0
        %617 = vmatpush1.msra.mxu0 0.0
        %618 = vmatprep.subr.mxu0 0.0
        %619 = vmatpush1.msra.mxu0 0.0
        %620 = vmatprep.subr.mxu0 0.0
        %621 = vmatpush1.msra.mxu0 0.0
        %622 = vmatprep.subr.mxu0 0.0
        %623 = vmatpush1.msra.mxu0 0.0
        %624 = vmatprep.mubr.f32.mxu0 0.0
        %v625 = vand.u32 %v348, 4294901760
        %v626 = vsub.f32 %v348, %v625
        %627 = vmatmul.mubr.f32.gmra.mrb[0].mxu0 %v626
        %v628 = vpop.f32.mrb[0].mxu0
        %v629 = vadd.f32 %v541, %v628
        %v630 = vpop.f32.mrb[0].mxu0
        %631 = vdwg.mxu0
        %632 = vmatprep.subr.mxu0 0.0
        %v633 = vand.u32 %v210, 4294901760
        %634 = vmatpush1.msra.mxu0 %v633
        %635 = vmatprep.subr.mxu0 0.0
        %v636 = vand.u32 %v211, 4294901760
        %637 = vmatpush1.msra.mxu0 %v636
        %638 = vmatprep.subr.mxu0 0.0
        %v639 = vand.u32 %v212, 4294901760
        %640 = vmatpush1.msra.mxu0 %v639
        %641 = vmatprep.subr.mxu0 0.0
        %v642 = vand.u32 %v213, 4294901760
        %643 = vmatpush1.msra.mxu0 %v642
        %644 = vmatprep.subr.mxu0 0.0
        %v645 = vand.u32 %v214, 4294901760
        %646 = vmatpush1.msra.mxu0 %v645
        %647 = vmatprep.subr.mxu0 0.0
        %v648 = vand.u32 %v215, 4294901760
        %649 = vmatpush1.msra.mxu0 %v648
        %650 = vmatprep.subr.mxu0 0.0
        %v651 = vand.u32 %v216, 4294901760
        %652 = vmatpush1.msra.mxu0 %v651
        %653 = vmatprep.subr.mxu0 0.0
        %v654 = vand.u32 %v217, 4294901760
        %655 = vmatpush1.msra.mxu0 %v654
        %656 = vmatprep.subr.mxu0 0.0
        %657 = vmatpush1.msra.mxu0 0.0
        %658 = vmatprep.subr.mxu0 0.0
        %659 = vmatpush1.msra.mxu0 0.0
        %660 = vmatprep.subr.mxu0 0.0
        %661 = vmatpush1.msra.mxu0 0.0
        %662 = vmatprep.subr.mxu0 0.0
        %663 = vmatpush1.msra.mxu0 0.0
        %664 = vmatprep.subr.mxu0 0.0
        %665 = vmatpush1.msra.mxu0 0.0
        %666 = vmatprep.subr.mxu0 0.0
        %667 = vmatpush1.msra.mxu0 0.0
        %668 = vmatprep.subr.mxu0 0.0
        %669 = vmatpush1.msra.mxu0 0.0
        %670 = vmatprep.subr.mxu0 0.0
        %671 = vmatpush1.msra.mxu0 0.0
        %672 = vmatprep.subr.mxu0 0.0
        %673 = vmatpush1.msra.mxu0 0.0
        %674 = vmatprep.subr.mxu0 0.0
        %675 = vmatpush1.msra.mxu0 0.0
        %676 = vmatprep.subr.mxu0 0.0
        %677 = vmatpush1.msra.mxu0 0.0
        %678 = vmatprep.subr.mxu0 0.0
        %679 = vmatpush1.msra.mxu0 0.0
        %680 = vmatprep.subr.mxu0 0.0
        %681 = vmatpush1.msra.mxu0 0.0
        %682 = vmatprep.subr.mxu0 0.0
        %683 = vmatpush1.msra.mxu0 0.0
        %684 = vmatprep.subr.mxu0 0.0
        %685 = vmatpush1.msra.mxu0 0.0
        %686 = vmatprep.subr.mxu0 0.0
        %687 = vmatpush1.msra.mxu0 0.0
        %688 = vmatprep.subr.mxu0 0.0
        %689 = vmatpush1.msra.mxu0 0.0
        %690 = vmatprep.subr.mxu0 0.0
        %691 = vmatpush1.msra.mxu0 0.0
        %692 = vmatprep.subr.mxu0 0.0
        %693 = vmatpush1.msra.mxu0 0.0
        %694 = vmatprep.subr.mxu0 0.0
        %695 = vmatpush1.msra.mxu0 0.0
        %696 = vmatprep.subr.mxu0 0.0
        %697 = vmatpush1.msra.mxu0 0.0
        %698 = vmatprep.subr.mxu0 0.0
        %699 = vmatpush1.msra.mxu0 0.0
        %700 = vmatprep.subr.mxu0 0.0
        %701 = vmatpush1.msra.mxu0 0.0
        %702 = vmatprep.subr.mxu0 0.0
        %703 = vmatpush1.msra.mxu0 0.0
        %704 = vmatprep.mubr.f32.mxu0 0.0
        %v705 = vand.u32 %v348, 4294901760
        %v706 = vsub.f32 %v348, %v705
        %v707 = vand.u32 %v706, 4294901760
        %708 = vmatmul.mubr.f32.gmra.mrb[0].mxu0 %v707
        %v709 = vpop.f32.mrb[0].mxu0
        %v710 = vadd.f32 %v629, %v709
        %v711 = vpop.f32.mrb[0].mxu0
        %712 = vdwg.mxu0
        %713 = vmatprep.subr.mxu0 0.0
        %v714 = vand.u32 %v210, 4294901760
        %v715 = vsub.f32 %v210, %v714
        %v716 = vand.u32 %v715, 4294901760
        %717 = vmatpush1.msra.mxu0 %v716
        %718 = vmatprep.subr.mxu0 0.0
        %v719 = vand.u32 %v211, 4294901760
        %v720 = vsub.f32 %v211, %v719
        %v721 = vand.u32 %v720, 4294901760
        %722 = vmatpush1.msra.mxu0 %v721
        %723 = vmatprep.subr.mxu0 0.0
        %v724 = vand.u32 %v212, 4294901760
        %v725 = vsub.f32 %v212, %v724
        %v726 = vand.u32 %v725, 4294901760
        %727 = vmatpush1.msra.mxu0 %v726
        %728 = vmatprep.subr.mxu0 0.0
        %v729 = vand.u32 %v213, 4294901760
        %v730 = vsub.f32 %v213, %v729
        %v731 = vand.u32 %v730, 4294901760
        %732 = vmatpush1.msra.mxu0 %v731
        %733 = vmatprep.subr.mxu0 0.0
        %v734 = vand.u32 %v214, 4294901760
        %v735 = vsub.f32 %v214, %v734
        %v736 = vand.u32 %v735, 4294901760
        %737 = vmatpush1.msra.mxu0 %v736
        %738 = vmatprep.subr.mxu0 0.0
        %v739 = vand.u32 %v215, 4294901760
        %v740 = vsub.f32 %v215, %v739
        %v741 = vand.u32 %v740, 4294901760
        %742 = vmatpush1.msra.mxu0 %v741
        %743 = vmatprep.subr.mxu0 0.0
        %v744 = vand.u32 %v216, 4294901760
        %v745 = vsub.f32 %v216, %v744
        %v746 = vand.u32 %v745, 4294901760
        %747 = vmatpush1.msra.mxu0 %v746
        %748 = vmatprep.subr.mxu0 0.0
        %v749 = vand.u32 %v217, 4294901760
        %v750 = vsub.f32 %v217, %v749
        %v751 = vand.u32 %v750, 4294901760
        %752 = vmatpush1.msra.mxu0 %v751
        %753 = vmatprep.subr.mxu0 0.0
        %754 = vmatpush1.msra.mxu0 0.0
        %755 = vmatprep.subr.mxu0 0.0
        %756 = vmatpush1.msra.mxu0 0.0
        %757 = vmatprep.subr.mxu0 0.0
        %758 = vmatpush1.msra.mxu0 0.0
        %759 = vmatprep.subr.mxu0 0.0
        %760 = vmatpush1.msra.mxu0 0.0
        %761 = vmatprep.subr.mxu0 0.0
        %762 = vmatpush1.msra.mxu0 0.0
        %763 = vmatprep.subr.mxu0 0.0
        %764 = vmatpush1.msra.mxu0 0.0
        %765 = vmatprep.subr.mxu0 0.0
        %766 = vmatpush1.msra.mxu0 0.0
        %767 = vmatprep.subr.mxu0 0.0
        %768 = vmatpush1.msra.mxu0 0.0
        %769 = vmatprep.subr.mxu0 0.0
        %770 = vmatpush1.msra.mxu0 0.0
        %771 = vmatprep.subr.mxu0 0.0
        %772 = vmatpush1.msra.mxu0 0.0
        %773 = vmatprep.subr.mxu0 0.0
        %774 = vmatpush1.msra.mxu0 0.0
        %775 = vmatprep.subr.mxu0 0.0
        %776 = vmatpush1.msra.mxu0 0.0
        %777 = vmatprep.subr.mxu0 0.0
        %778 = vmatpush1.msra.mxu0 0.0
        %779 = vmatprep.subr.mxu0 0.0
        %780 = vmatpush1.msra.mxu0 0.0
        %781 = vmatprep.subr.mxu0 0.0
        %782 = vmatpush1.msra.mxu0 0.0
        %783 = vmatprep.subr.mxu0 0.0
        %784 = vmatpush1.msra.mxu0 0.0
        %785 = vmatprep.subr.mxu0 0.0
        %786 = vmatpush1.msra.mxu0 0.0
        %787 = vmatprep.subr.mxu0 0.0
        %788 = vmatpush1.msra.mxu0 0.0
        %789 = vmatprep.subr.mxu0 0.0
        %790 = vmatpush1.msra.mxu0 0.0
        %791 = vmatprep.subr.mxu0 0.0
        %792 = vmatpush1.msra.mxu0 0.0
        %793 = vmatprep.subr.mxu0 0.0
        %794 = vmatpush1.msra.mxu0 0.0
        %795 = vmatprep.subr.mxu0 0.0
        %796 = vmatpush1.msra.mxu0 0.0
        %797 = vmatprep.subr.mxu0 0.0
        %798 = vmatpush1.msra.mxu0 0.0
        %799 = vmatprep.subr.mxu0 0.0
        %800 = vmatpush1.msra.mxu0 0.0
        %801 = vmatprep.mubr.f32.mxu0 0.0
        %v802 = vand.u32 %v348, 4294901760
        %803 = vmatmul.mubr.f32.gmra.mrb[0].mxu0 %v802
        %v804 = vpop.f32.mrb[0].mxu0
        %v805 = vadd.f32 %v710, %v804
        %v806 = vpop.f32.mrb[0].mxu0
        %807 = vdwg.mxu0
        %808 = vmatprep.subr.mxu0 0.0
        %v809 = vand.u32 %v210, 4294901760
        %810 = vmatpush1.msra.mxu0 %v809
        %811 = vmatprep.subr.mxu0 0.0
        %v812 = vand.u32 %v211, 4294901760
        %813 = vmatpush1.msra.mxu0 %v812
        %814 = vmatprep.subr.mxu0 0.0
        %v815 = vand.u32 %v212, 4294901760
        %816 = vmatpush1.msra.mxu0 %v815
        %817 = vmatprep.subr.mxu0 0.0
        %v818 = vand.u32 %v213, 4294901760
        %819 = vmatpush1.msra.mxu0 %v818
        %820 = vmatprep.subr.mxu0 0.0
        %v821 = vand.u32 %v214, 4294901760
        %822 = vmatpush1.msra.mxu0 %v821
        %823 = vmatprep.subr.mxu0 0.0
        %v824 = vand.u32 %v215, 4294901760
        %825 = vmatpush1.msra.mxu0 %v824
        %826 = vmatprep.subr.mxu0 0.0
        %v827 = vand.u32 %v216, 4294901760
        %828 = vmatpush1.msra.mxu0 %v827
        %829 = vmatprep.subr.mxu0 0.0
        %v830 = vand.u32 %v217, 4294901760
        %831 = vmatpush1.msra.mxu0 %v830
        %832 = vmatprep.subr.mxu0 0.0
        %833 = vmatpush1.msra.mxu0 0.0
        %834 = vmatprep.subr.mxu0 0.0
        %835 = vmatpush1.msra.mxu0 0.0
        %836 = vmatprep.subr.mxu0 0.0
        %837 = vmatpush1.msra.mxu0 0.0
        %838 = vmatprep.subr.mxu0 0.0
        %839 = vmatpush1.msra.mxu0 0.0
        %840 = vmatprep.subr.mxu0 0.0
        %841 = vmatpush1.msra.mxu0 0.0
        %842 = vmatprep.subr.mxu0 0.0
        %843 = vmatpush1.msra.mxu0 0.0
        %844 = vmatprep.subr.mxu0 0.0
        %845 = vmatpush1.msra.mxu0 0.0
        %846 = vmatprep.subr.mxu0 0.0
        %847 = vmatpush1.msra.mxu0 0.0
        %848 = vmatprep.subr.mxu0 0.0
        %849 = vmatpush1.msra.mxu0 0.0
        %850 = vmatprep.subr.mxu0 0.0
        %851 = vmatpush1.msra.mxu0 0.0
        %852 = vmatprep.subr.mxu0 0.0
        %853 = vmatpush1.msra.mxu0 0.0
        %854 = vmatprep.subr.mxu0 0.0
        %855 = vmatpush1.msra.mxu0 0.0
        %856 = vmatprep.subr.mxu0 0.0
        %857 = vmatpush1.msra.mxu0 0.0
        %858 = vmatprep.subr.mxu0 0.0
        %859 = vmatpush1.msra.mxu0 0.0
        %860 = vmatprep.subr.mxu0 0.0
        %861 = vmatpush1.msra.mxu0 0.0
        %862 = vmatprep.subr.mxu0 0.0
        %863 = vmatpush1.msra.mxu0 0.0
        %864 = vmatprep.subr.mxu0 0.0
        %865 = vmatpush1.msra.mxu0 0.0
        %866 = vmatprep.subr.mxu0 0.0
        %867 = vmatpush1.msra.mxu0 0.0
        %868 = vmatprep.subr.mxu0 0.0
        %869 = vmatpush1.msra.mxu0 0.0
        %870 = vmatprep.subr.mxu0 0.0
        %871 = vmatpush1.msra.mxu0 0.0
        %872 = vmatprep.subr.mxu0 0.0
        %873 = vmatpush1.msra.mxu0 0.0
        %874 = vmatprep.subr.mxu0 0.0
        %875 = vmatpush1.msra.mxu0 0.0
        %876 = vmatprep.subr.mxu0 0.0
        %877 = vmatpush1.msra.mxu0 0.0
        %878 = vmatprep.subr.mxu0 0.0
        %879 = vmatpush1.msra.mxu0 0.0
        %880 = vmatprep.mubr.f32.mxu0 0.0
        %v881 = vand.u32 %v348, 4294901760
        %882 = vmatmul.mubr.f32.gmra.mrb[0].mxu0 %v881
        %v883 = vpop.f32.mrb[0].mxu0
        %v884 = vadd.f32 %v805, %v883
        %v885 = vpop.f32.mrb[0].mxu0
        %886 = vdwg.mxu0
        %vm887 = vcmask 257024
        %888 = vst.msk [vmem:[%s207] sm:$0xf] %vm887, %v884
        %s889 = scalar_lea.vmem %s185, 16 [#allocation2]
        %v890 = vld [vmem:[%s889] sm:$0xf]
        %s891 = scalar_lea.vmem %s185, 20 [#allocation2]
        %v892 = vld [vmem:[%s891] sm:$0xf]
        %s893 = scalar_lea.vmem %s185, 24 [#allocation2]
        %v894 = vld [vmem:[%s893] sm:$0xf]
        %s895 = scalar_lea.vmem %s185, 28 [#allocation2]
        %v896 = vld [vmem:[%s895] sm:$0xf]
        %s897 = scalar_lea.vmem %s185, 80 [#allocation2]
        %v898 = vld [vmem:[%s897] sm:$0xf]
        %s899 = scalar_lea.vmem %s185, 84 [#allocation2]
        %v900 = vld [vmem:[%s899] sm:$0xf]
        %s901 = scalar_lea.vmem %s185, 88 [#allocation2]
        %v902 = vld [vmem:[%s901] sm:$0xf]
        %s903 = scalar_lea.vmem %s185, 92 [#allocation2]
        %v904 = vld [vmem:[%s903] sm:$0xf]
        %s905 = scalar_lea.vmem %s185, 144 [#allocation2]
        %v906 = vld [vmem:[%s905] sm:$0xf]
        %s907 = scalar_lea.vmem %s185, 148 [#allocation2]
        %v908 = vld [vmem:[%s907] sm:$0xf]
        %s909 = scalar_lea.vmem %s185, 152 [#allocation2]
        %v910 = vld [vmem:[%s909] sm:$0xf]
        %s911 = scalar_lea.vmem %s185, 156 [#allocation2]
        %v912 = vld [vmem:[%s911] sm:$0xf]
        %s913 = scalar_lea.vmem %s185, 208 [#allocation2]
        %v914 = vld [vmem:[%s913] sm:$0xf]
        %s915 = scalar_lea.vmem %s185, 212 [#allocation2]
        %v916 = vld [vmem:[%s915] sm:$0xf]
        %s917 = scalar_lea.vmem %s185, 216 [#allocation2]
        %v918 = vld [vmem:[%s917] sm:$0xf]
        %s919 = scalar_lea.vmem %s185, 220 [#allocation2]
        %v920 = vld [vmem:[%s919] sm:$0xf]
        %922 = vrot.lane.b32.xlu0 %v892, 4
        %v923 = vpop.permute.xlu0 %922
        %926 = vrot.lane.b32.xlu0 %v894, 8
        %v927 = vpop.permute.xlu0 %926
        %930 = vrot.lane.b32.xlu0 %v896, 12
        %v931 = vpop.permute.xlu0 %930
        %934 = vrot.lane.b32.xlu0 %v898, 16
        %v935 = vpop.permute.xlu0 %934
        %938 = vrot.lane.b32.xlu0 %v900, 20
        %v939 = vpop.permute.xlu0 %938
        %942 = vrot.lane.b32.xlu0 %v902, 24
        %v943 = vpop.permute.xlu0 %942
        %946 = vrot.lane.b32.xlu0 %v904, 28
        %v947 = vpop.permute.xlu0 %946
        %950 = vrot.lane.b32.xlu0 %v906, 32
        %v951 = vpop.permute.xlu0 %950
        %954 = vrot.lane.b32.xlu0 %v908, 36
        %v955 = vpop.permute.xlu0 %954
        %958 = vrot.lane.b32.xlu0 %v910, 40
        %v959 = vpop.permute.xlu0 %958
        %962 = vrot.lane.b32.xlu0 %v912, 44
        %v963 = vpop.permute.xlu0 %962
        %966 = vrot.lane.b32.xlu0 %v914, 48
        %v967 = vpop.permute.xlu0 %966
        %970 = vrot.lane.b32.xlu0 %v916, 52
        %v971 = vpop.permute.xlu0 %970
        %974 = vrot.lane.b32.xlu0 %v918, 56
        %v975 = vpop.permute.xlu0 %974
        %978 = vrot.lane.b32.xlu0 %v920, 60
        %v979 = vpop.permute.xlu0 %978
        %v981 = vsel %vm310, %v890, %v923
        %v982 = vsel %vm312, %v981, %v927
        %v983 = vsel %vm314, %v982, %v931
        %v984 = vsel %vm316, %v983, %v935
        %v985 = vsel %vm318, %v984, %v939
        %v986 = vsel %vm320, %v985, %v943
        %v987 = vsel %vm322, %v986, %v947
        %v988 = vsel %vm324, %v987, %v951
        %v989 = vsel %vm326, %v988, %v955
        %v990 = vsel %vm328, %v989, %v959
        %v991 = vsel %vm330, %v990, %v963
        %v992 = vsel %vm332, %v991, %v967
        %v993 = vsel %vm334, %v992, %v971
        %v994 = vsel %vm336, %v993, %v975
        %v995 = vsel %vm338, %v994, %v979
        %v997 = vsel %vm346, %v995, 0
        %999 = vmatprep.subr.mxu0 0.0
        %v1000 = vand.u32 %v210, 4294901760
        %1001 = vmatpush1.msra.mxu0 %v1000
        %1002 = vmatprep.subr.mxu0 0.0
        %v1003 = vand.u32 %v211, 4294901760
        %1004 = vmatpush1.msra.mxu0 %v1003
        %1005 = vmatprep.subr.mxu0 0.0
        %v1006 = vand.u32 %v212, 4294901760
        %1007 = vmatpush1.msra.mxu0 %v1006
        %1008 = vmatprep.subr.mxu0 0.0
        %v1009 = vand.u32 %v213, 4294901760
        %1010 = vmatpush1.msra.mxu0 %v1009
        %1011 = vmatprep.subr.mxu0 0.0
        %v1012 = vand.u32 %v214, 4294901760
        %1013 = vmatpush1.msra.mxu0 %v1012
        %1014 = vmatprep.subr.mxu0 0.0
        %v1015 = vand.u32 %v215, 4294901760
        %1016 = vmatpush1.msra.mxu0 %v1015
        %1017 = vmatprep.subr.mxu0 0.0
        %v1018 = vand.u32 %v216, 4294901760
        %1019 = vmatpush1.msra.mxu0 %v1018
        %1020 = vmatprep.subr.mxu0 0.0
        %v1021 = vand.u32 %v217, 4294901760
        %1022 = vmatpush1.msra.mxu0 %v1021
        %1023 = vmatprep.subr.mxu0 0.0
        %1024 = vmatpush1.msra.mxu0 0.0
        %1025 = vmatprep.subr.mxu0 0.0
        %1026 = vmatpush1.msra.mxu0 0.0
        %1027 = vmatprep.subr.mxu0 0.0
        %1028 = vmatpush1.msra.mxu0 0.0
        %1029 = vmatprep.subr.mxu0 0.0
        %1030 = vmatpush1.msra.mxu0 0.0
        %1031 = vmatprep.subr.mxu0 0.0
        %1032 = vmatpush1.msra.mxu0 0.0
        %1033 = vmatprep.subr.mxu0 0.0
        %1034 = vmatpush1.msra.mxu0 0.0
        %1035 = vmatprep.subr.mxu0 0.0
        %1036 = vmatpush1.msra.mxu0 0.0
        %1037 = vmatprep.subr.mxu0 0.0
        %1038 = vmatpush1.msra.mxu0 0.0
        %1039 = vmatprep.subr.mxu0 0.0
        %1040 = vmatpush1.msra.mxu0 0.0
        %1041 = vmatprep.subr.mxu0 0.0
        %1042 = vmatpush1.msra.mxu0 0.0
        %1043 = vmatprep.subr.mxu0 0.0
        %1044 = vmatpush1.msra.mxu0 0.0
        %1045 = vmatprep.subr.mxu0 0.0
        %1046 = vmatpush1.msra.mxu0 0.0
        %1047 = vmatprep.subr.mxu0 0.0
        %1048 = vmatpush1.msra.mxu0 0.0
        %1049 = vmatprep.subr.mxu0 0.0
        %1050 = vmatpush1.msra.mxu0 0.0
        %1051 = vmatprep.subr.mxu0 0.0
        %1052 = vmatpush1.msra.mxu0 0.0
        %1053 = vmatprep.subr.mxu0 0.0
        %1054 = vmatpush1.msra.mxu0 0.0
        %1055 = vmatprep.subr.mxu0 0.0
        %1056 = vmatpush1.msra.mxu0 0.0
        %1057 = vmatprep.subr.mxu0 0.0
        %1058 = vmatpush1.msra.mxu0 0.0
        %1059 = vmatprep.subr.mxu0 0.0
        %1060 = vmatpush1.msra.mxu0 0.0
        %1061 = vmatprep.subr.mxu0 0.0
        %1062 = vmatpush1.msra.mxu0 0.0
        %1063 = vmatprep.subr.mxu0 0.0
        %1064 = vmatpush1.msra.mxu0 0.0
        %1065 = vmatprep.subr.mxu0 0.0
        %1066 = vmatpush1.msra.mxu0 0.0
        %1067 = vmatprep.subr.mxu0 0.0
        %1068 = vmatpush1.msra.mxu0 0.0
        %1069 = vmatprep.subr.mxu0 0.0
        %1070 = vmatpush1.msra.mxu0 0.0
        %1071 = vmatprep.mubr.f32.mxu0 0.0
        %v1072 = vand.u32 %v997, 4294901760
        %v1073 = vsub.f32 %v997, %v1072
        %v1074 = vand.u32 %v1073, 4294901760
        %v1075 = vsub.f32 %v1073, %v1074
        %v1076 = vand.u32 %v1075, 4294901760
        %1077 = vmatmul.mubr.f32.gmra.mrb[0].mxu0 %v1076
        %v1078 = vpop.f32.mrb[0].mxu0
        %v1079 = vadd.f32 %v344, %v1078
        %v1080 = vpop.f32.mrb[0].mxu0
        %1081 = vdwg.mxu0
        %1082 = vmatprep.subr.mxu0 0.0
        %v1083 = vand.u32 %v210, 4294901760
        %v1084 = vsub.f32 %v210, %v1083
        %v1085 = vand.u32 %v1084, 4294901760
        %v1086 = vsub.f32 %v1084, %v1085
        %v1087 = vand.u32 %v1086, 4294901760
        %1088 = vmatpush1.msra.mxu0 %v1087
        %1089 = vmatprep.subr.mxu0 0.0
        %v1090 = vand.u32 %v211, 4294901760
        %v1091 = vsub.f32 %v211, %v1090
        %v1092 = vand.u32 %v1091, 4294901760
        %v1093 = vsub.f32 %v1091, %v1092
        %v1094 = vand.u32 %v1093, 4294901760
        %1095 = vmatpush1.msra.mxu0 %v1094
        %1096 = vmatprep.subr.mxu0 0.0
        %v1097 = vand.u32 %v212, 4294901760
        %v1098 = vsub.f32 %v212, %v1097
        %v1099 = vand.u32 %v1098, 4294901760
        %v1100 = vsub.f32 %v1098, %v1099
        %v1101 = vand.u32 %v1100, 4294901760
        %1102 = vmatpush1.msra.mxu0 %v1101
        %1103 = vmatprep.subr.mxu0 0.0
        %v1104 = vand.u32 %v213, 4294901760
        %v1105 = vsub.f32 %v213, %v1104
        %v1106 = vand.u32 %v1105, 4294901760
        %v1107 = vsub.f32 %v1105, %v1106
        %v1108 = vand.u32 %v1107, 4294901760
        %1109 = vmatpush1.msra.mxu0 %v1108
        %1110 = vmatprep.subr.mxu0 0.0
        %v1111 = vand.u32 %v214, 4294901760
        %v1112 = vsub.f32 %v214, %v1111
        %v1113 = vand.u32 %v1112, 4294901760
        %v1114 = vsub.f32 %v1112, %v1113
        %v1115 = vand.u32 %v1114, 4294901760
        %1116 = vmatpush1.msra.mxu0 %v1115
        %1117 = vmatprep.subr.mxu0 0.0
        %v1118 = vand.u32 %v215, 4294901760
        %v1119 = vsub.f32 %v215, %v1118
        %v1120 = vand.u32 %v1119, 4294901760
        %v1121 = vsub.f32 %v1119, %v1120
        %v1122 = vand.u32 %v1121, 4294901760
        %1123 = vmatpush1.msra.mxu0 %v1122
        %1124 = vmatprep.subr.mxu0 0.0
        %v1125 = vand.u32 %v216, 4294901760
        %v1126 = vsub.f32 %v216, %v1125
        %v1127 = vand.u32 %v1126, 4294901760
        %v1128 = vsub.f32 %v1126, %v1127
        %v1129 = vand.u32 %v1128, 4294901760
        %1130 = vmatpush1.msra.mxu0 %v1129
        %1131 = vmatprep.subr.mxu0 0.0
        %v1132 = vand.u32 %v217, 4294901760
        %v1133 = vsub.f32 %v217, %v1132
        %v1134 = vand.u32 %v1133, 4294901760
        %v1135 = vsub.f32 %v1133, %v1134
        %v1136 = vand.u32 %v1135, 4294901760
        %1137 = vmatpush1.msra.mxu0 %v1136
        %1138 = vmatprep.subr.mxu0 0.0
        %1139 = vmatpush1.msra.mxu0 0.0
        %1140 = vmatprep.subr.mxu0 0.0
        %1141 = vmatpush1.msra.mxu0 0.0
        %1142 = vmatprep.subr.mxu0 0.0
        %1143 = vmatpush1.msra.mxu0 0.0
        %1144 = vmatprep.subr.mxu0 0.0
        %1145 = vmatpush1.msra.mxu0 0.0
        %1146 = vmatprep.subr.mxu0 0.0
        %1147 = vmatpush1.msra.mxu0 0.0
        %1148 = vmatprep.subr.mxu0 0.0
        %1149 = vmatpush1.msra.mxu0 0.0
        %1150 = vmatprep.subr.mxu0 0.0
        %1151 = vmatpush1.msra.mxu0 0.0
        %1152 = vmatprep.subr.mxu0 0.0
        %1153 = vmatpush1.msra.mxu0 0.0
        %1154 = vmatprep.subr.mxu0 0.0
        %1155 = vmatpush1.msra.mxu0 0.0
        %1156 = vmatprep.subr.mxu0 0.0
        %1157 = vmatpush1.msra.mxu0 0.0
        %1158 = vmatprep.subr.mxu0 0.0
        %1159 = vmatpush1.msra.mxu0 0.0
        %1160 = vmatprep.subr.mxu0 0.0
        %1161 = vmatpush1.msra.mxu0 0.0
        %1162 = vmatprep.subr.mxu0 0.0
        %1163 = vmatpush1.msra.mxu0 0.0
        %1164 = vmatprep.subr.mxu0 0.0
        %1165 = vmatpush1.msra.mxu0 0.0
        %1166 = vmatprep.subr.mxu0 0.0
        %1167 = vmatpush1.msra.mxu0 0.0
        %1168 = vmatprep.subr.mxu0 0.0
        %1169 = vmatpush1.msra.mxu0 0.0
        %1170 = vmatprep.subr.mxu0 0.0
        %1171 = vmatpush1.msra.mxu0 0.0
        %1172 = vmatprep.subr.mxu0 0.0
        %1173 = vmatpush1.msra.mxu0 0.0
        %1174 = vmatprep.subr.mxu0 0.0
        %1175 = vmatpush1.msra.mxu0 0.0
        %1176 = vmatprep.subr.mxu0 0.0
        %1177 = vmatpush1.msra.mxu0 0.0
        %1178 = vmatprep.subr.mxu0 0.0
        %1179 = vmatpush1.msra.mxu0 0.0
        %1180 = vmatprep.subr.mxu0 0.0
        %1181 = vmatpush1.msra.mxu0 0.0
        %1182 = vmatprep.subr.mxu0 0.0
        %1183 = vmatpush1.msra.mxu0 0.0
        %1184 = vmatprep.subr.mxu0 0.0
        %1185 = vmatpush1.msra.mxu0 0.0
        %1186 = vmatprep.mubr.f32.mxu0 0.0
        %v1187 = vand.u32 %v997, 4294901760
        %1188 = vmatmul.mubr.f32.gmra.mrb[0].mxu0 %v1187
        %v1189 = vpop.f32.mrb[0].mxu0
        %v1190 = vadd.f32 %v1079, %v1189
        %v1191 = vpop.f32.mrb[0].mxu0
        %1192 = vdwg.mxu0
        %1193 = vmatprep.subr.mxu0 0.0
        %v1194 = vand.u32 %v210, 4294901760
        %v1195 = vsub.f32 %v210, %v1194
        %1196 = vmatpush1.msra.mxu0 %v1195
        %1197 = vmatprep.subr.mxu0 0.0
        %v1198 = vand.u32 %v211, 4294901760
        %v1199 = vsub.f32 %v211, %v1198
        %1200 = vmatpush1.msra.mxu0 %v1199
        %1201 = vmatprep.subr.mxu0 0.0
        %v1202 = vand.u32 %v212, 4294901760
        %v1203 = vsub.f32 %v212, %v1202
        %1204 = vmatpush1.msra.mxu0 %v1203
        %1205 = vmatprep.subr.mxu0 0.0
        %v1206 = vand.u32 %v213, 4294901760
        %v1207 = vsub.f32 %v213, %v1206
        %1208 = vmatpush1.msra.mxu0 %v1207
        %1209 = vmatprep.subr.mxu0 0.0
        %v1210 = vand.u32 %v214, 4294901760
        %v1211 = vsub.f32 %v214, %v1210
        %1212 = vmatpush1.msra.mxu0 %v1211
        %1213 = vmatprep.subr.mxu0 0.0
        %v1214 = vand.u32 %v215, 4294901760
        %v1215 = vsub.f32 %v215, %v1214
        %1216 = vmatpush1.msra.mxu0 %v1215
        %1217 = vmatprep.subr.mxu0 0.0
        %v1218 = vand.u32 %v216, 4294901760
        %v1219 = vsub.f32 %v216, %v1218
        %1220 = vmatpush1.msra.mxu0 %v1219
        %1221 = vmatprep.subr.mxu0 0.0
        %v1222 = vand.u32 %v217, 4294901760
        %v1223 = vsub.f32 %v217, %v1222
        %1224 = vmatpush1.msra.mxu0 %v1223
        %1225 = vmatprep.subr.mxu0 0.0
        %1226 = vmatpush1.msra.mxu0 0.0
        %1227 = vmatprep.subr.mxu0 0.0
        %1228 = vmatpush1.msra.mxu0 0.0
        %1229 = vmatprep.subr.mxu0 0.0
        %1230 = vmatpush1.msra.mxu0 0.0
        %1231 = vmatprep.subr.mxu0 0.0
        %1232 = vmatpush1.msra.mxu0 0.0
        %1233 = vmatprep.subr.mxu0 0.0
        %1234 = vmatpush1.msra.mxu0 0.0
        %1235 = vmatprep.subr.mxu0 0.0
        %1236 = vmatpush1.msra.mxu0 0.0
        %1237 = vmatprep.subr.mxu0 0.0
        %1238 = vmatpush1.msra.mxu0 0.0
        %1239 = vmatprep.subr.mxu0 0.0
        %1240 = vmatpush1.msra.mxu0 0.0
        %1241 = vmatprep.subr.mxu0 0.0
        %1242 = vmatpush1.msra.mxu0 0.0
        %1243 = vmatprep.subr.mxu0 0.0
        %1244 = vmatpush1.msra.mxu0 0.0
        %1245 = vmatprep.subr.mxu0 0.0
        %1246 = vmatpush1.msra.mxu0 0.0
        %1247 = vmatprep.subr.mxu0 0.0
        %1248 = vmatpush1.msra.mxu0 0.0
        %1249 = vmatprep.subr.mxu0 0.0
        %1250 = vmatpush1.msra.mxu0 0.0
        %1251 = vmatprep.subr.mxu0 0.0
        %1252 = vmatpush1.msra.mxu0 0.0
        %1253 = vmatprep.subr.mxu0 0.0
        %1254 = vmatpush1.msra.mxu0 0.0
        %1255 = vmatprep.subr.mxu0 0.0
        %1256 = vmatpush1.msra.mxu0 0.0
        %1257 = vmatprep.subr.mxu0 0.0
        %1258 = vmatpush1.msra.mxu0 0.0
        %1259 = vmatprep.subr.mxu0 0.0
        %1260 = vmatpush1.msra.mxu0 0.0
        %1261 = vmatprep.subr.mxu0 0.0
        %1262 = vmatpush1.msra.mxu0 0.0
        %1263 = vmatprep.subr.mxu0 0.0
        %1264 = vmatpush1.msra.mxu0 0.0
        %1265 = vmatprep.subr.mxu0 0.0
        %1266 = vmatpush1.msra.mxu0 0.0
        %1267 = vmatprep.subr.mxu0 0.0
        %1268 = vmatpush1.msra.mxu0 0.0
        %1269 = vmatprep.subr.mxu0 0.0
        %1270 = vmatpush1.msra.mxu0 0.0
        %1271 = vmatprep.subr.mxu0 0.0
        %1272 = vmatpush1.msra.mxu0 0.0
        %1273 = vmatprep.mubr.f32.mxu0 0.0
        %v1274 = vand.u32 %v997, 4294901760
        %v1275 = vsub.f32 %v997, %v1274
        %1276 = vmatmul.mubr.f32.gmra.mrb[0].mxu0 %v1275
        %v1277 = vpop.f32.mrb[0].mxu0
        %v1278 = vadd.f32 %v1190, %v1277
        %v1279 = vpop.f32.mrb[0].mxu0
        %1280 = vdwg.mxu0
        %1281 = vmatprep.subr.mxu0 0.0
        %v1282 = vand.u32 %v210, 4294901760
        %1283 = vmatpush1.msra.mxu0 %v1282
        %1284 = vmatprep.subr.mxu0 0.0
        %v1285 = vand.u32 %v211, 4294901760
        %1286 = vmatpush1.msra.mxu0 %v1285
        %1287 = vmatprep.subr.mxu0 0.0
        %v1288 = vand.u32 %v212, 4294901760
        %1289 = vmatpush1.msra.mxu0 %v1288
        %1290 = vmatprep.subr.mxu0 0.0
        %v1291 = vand.u32 %v213, 4294901760
        %1292 = vmatpush1.msra.mxu0 %v1291
        %1293 = vmatprep.subr.mxu0 0.0
        %v1294 = vand.u32 %v214, 4294901760
        %1295 = vmatpush1.msra.mxu0 %v1294
        %1296 = vmatprep.subr.mxu0 0.0
        %v1297 = vand.u32 %v215, 4294901760
        %1298 = vmatpush1.msra.mxu0 %v1297
        %1299 = vmatprep.subr.mxu0 0.0
        %v1300 = vand.u32 %v216, 4294901760
        %1301 = vmatpush1.msra.mxu0 %v1300
        %1302 = vmatprep.subr.mxu0 0.0
        %v1303 = vand.u32 %v217, 4294901760
        %1304 = vmatpush1.msra.mxu0 %v1303
        %1305 = vmatprep.subr.mxu0 0.0
        %1306 = vmatpush1.msra.mxu0 0.0
        %1307 = vmatprep.subr.mxu0 0.0
        %1308 = vmatpush1.msra.mxu0 0.0
        %1309 = vmatprep.subr.mxu0 0.0
        %1310 = vmatpush1.msra.mxu0 0.0
        %1311 = vmatprep.subr.mxu0 0.0
        %1312 = vmatpush1.msra.mxu0 0.0
        %1313 = vmatprep.subr.mxu0 0.0
        %1314 = vmatpush1.msra.mxu0 0.0
        %1315 = vmatprep.subr.mxu0 0.0
        %1316 = vmatpush1.msra.mxu0 0.0
        %1317 = vmatprep.subr.mxu0 0.0
        %1318 = vmatpush1.msra.mxu0 0.0
        %1319 = vmatprep.subr.mxu0 0.0
        %1320 = vmatpush1.msra.mxu0 0.0
        %1321 = vmatprep.subr.mxu0 0.0
        %1322 = vmatpush1.msra.mxu0 0.0
        %1323 = vmatprep.subr.mxu0 0.0
        %1324 = vmatpush1.msra.mxu0 0.0
        %1325 = vmatprep.subr.mxu0 0.0
        %1326 = vmatpush1.msra.mxu0 0.0
        %1327 = vmatprep.subr.mxu0 0.0
        %1328 = vmatpush1.msra.mxu0 0.0
        %1329 = vmatprep.subr.mxu0 0.0
        %1330 = vmatpush1.msra.mxu0 0.0
        %1331 = vmatprep.subr.mxu0 0.0
        %1332 = vmatpush1.msra.mxu0 0.0
        %1333 = vmatprep.subr.mxu0 0.0
        %1334 = vmatpush1.msra.mxu0 0.0
        %1335 = vmatprep.subr.mxu0 0.0
        %1336 = vmatpush1.msra.mxu0 0.0
        %1337 = vmatprep.subr.mxu0 0.0
        %1338 = vmatpush1.msra.mxu0 0.0
        %1339 = vmatprep.subr.mxu0 0.0
        %1340 = vmatpush1.msra.mxu0 0.0
        %1341 = vmatprep.subr.mxu0 0.0
        %1342 = vmatpush1.msra.mxu0 0.0
        %1343 = vmatprep.subr.mxu0 0.0
        %1344 = vmatpush1.msra.mxu0 0.0
        %1345 = vmatprep.subr.mxu0 0.0
        %1346 = vmatpush1.msra.mxu0 0.0
        %1347 = vmatprep.subr.mxu0 0.0
        %1348 = vmatpush1.msra.mxu0 0.0
        %1349 = vmatprep.subr.mxu0 0.0
        %1350 = vmatpush1.msra.mxu0 0.0
        %1351 = vmatprep.subr.mxu0 0.0
        %1352 = vmatpush1.msra.mxu0 0.0
        %1353 = vmatprep.mubr.f32.mxu0 0.0
        %v1354 = vand.u32 %v997, 4294901760
        %v1355 = vsub.f32 %v997, %v1354
        %v1356 = vand.u32 %v1355, 4294901760
        %1357 = vmatmul.mubr.f32.gmra.mrb[0].mxu0 %v1356
        %v1358 = vpop.f32.mrb[0].mxu0
        %v1359 = vadd.f32 %v1278, %v1358
        %v1360 = vpop.f32.mrb[0].mxu0
        %1361 = vdwg.mxu0
        %1362 = vmatprep.subr.mxu0 0.0
        %v1363 = vand.u32 %v210, 4294901760
        %v1364 = vsub.f32 %v210, %v1363
        %v1365 = vand.u32 %v1364, 4294901760
        %1366 = vmatpush1.msra.mxu0 %v1365
        %1367 = vmatprep.subr.mxu0 0.0
        %v1368 = vand.u32 %v211, 4294901760
        %v1369 = vsub.f32 %v211, %v1368
        %v1370 = vand.u32 %v1369, 4294901760
        %1371 = vmatpush1.msra.mxu0 %v1370
        %1372 = vmatprep.subr.mxu0 0.0
        %v1373 = vand.u32 %v212, 4294901760
        %v1374 = vsub.f32 %v212, %v1373
        %v1375 = vand.u32 %v1374, 4294901760
        %1376 = vmatpush1.msra.mxu0 %v1375
        %1377 = vmatprep.subr.mxu0 0.0
        %v1378 = vand.u32 %v213, 4294901760
        %v1379 = vsub.f32 %v213, %v1378
        %v1380 = vand.u32 %v1379, 4294901760
        %1381 = vmatpush1.msra.mxu0 %v1380
        %1382 = vmatprep.subr.mxu0 0.0
        %v1383 = vand.u32 %v214, 4294901760
        %v1384 = vsub.f32 %v214, %v1383
        %v1385 = vand.u32 %v1384, 4294901760
        %1386 = vmatpush1.msra.mxu0 %v1385
        %1387 = vmatprep.subr.mxu0 0.0
        %v1388 = vand.u32 %v215, 4294901760
        %v1389 = vsub.f32 %v215, %v1388
        %v1390 = vand.u32 %v1389, 4294901760
        %1391 = vmatpush1.msra.mxu0 %v1390
        %1392 = vmatprep.subr.mxu0 0.0
        %v1393 = vand.u32 %v216, 4294901760
        %v1394 = vsub.f32 %v216, %v1393
        %v1395 = vand.u32 %v1394, 4294901760
        %1396 = vmatpush1.msra.mxu0 %v1395
        %1397 = vmatprep.subr.mxu0 0.0
        %v1398 = vand.u32 %v217, 4294901760
        %v1399 = vsub.f32 %v217, %v1398
        %v1400 = vand.u32 %v1399, 4294901760
        %1401 = vmatpush1.msra.mxu0 %v1400
        %1402 = vmatprep.subr.mxu0 0.0
        %1403 = vmatpush1.msra.mxu0 0.0
        %1404 = vmatprep.subr.mxu0 0.0
        %1405 = vmatpush1.msra.mxu0 0.0
        %1406 = vmatprep.subr.mxu0 0.0
        %1407 = vmatpush1.msra.mxu0 0.0
        %1408 = vmatprep.subr.mxu0 0.0
        %1409 = vmatpush1.msra.mxu0 0.0
        %1410 = vmatprep.subr.mxu0 0.0
        %1411 = vmatpush1.msra.mxu0 0.0
        %1412 = vmatprep.subr.mxu0 0.0
        %1413 = vmatpush1.msra.mxu0 0.0
        %1414 = vmatprep.subr.mxu0 0.0
        %1415 = vmatpush1.msra.mxu0 0.0
        %1416 = vmatprep.subr.mxu0 0.0
        %1417 = vmatpush1.msra.mxu0 0.0
        %1418 = vmatprep.subr.mxu0 0.0
        %1419 = vmatpush1.msra.mxu0 0.0
        %1420 = vmatprep.subr.mxu0 0.0
        %1421 = vmatpush1.msra.mxu0 0.0
        %1422 = vmatprep.subr.mxu0 0.0
        %1423 = vmatpush1.msra.mxu0 0.0
        %1424 = vmatprep.subr.mxu0 0.0
        %1425 = vmatpush1.msra.mxu0 0.0
        %1426 = vmatprep.subr.mxu0 0.0
        %1427 = vmatpush1.msra.mxu0 0.0
        %1428 = vmatprep.subr.mxu0 0.0
        %1429 = vmatpush1.msra.mxu0 0.0
        %1430 = vmatprep.subr.mxu0 0.0
        %1431 = vmatpush1.msra.mxu0 0.0
        %1432 = vmatprep.subr.mxu0 0.0
        %1433 = vmatpush1.msra.mxu0 0.0
        %1434 = vmatprep.subr.mxu0 0.0
        %1435 = vmatpush1.msra.mxu0 0.0
        %1436 = vmatprep.subr.mxu0 0.0
        %1437 = vmatpush1.msra.mxu0 0.0
        %1438 = vmatprep.subr.mxu0 0.0
        %1439 = vmatpush1.msra.mxu0 0.0
        %1440 = vmatprep.subr.mxu0 0.0
        %1441 = vmatpush1.msra.mxu0 0.0
        %1442 = vmatprep.subr.mxu0 0.0
        %1443 = vmatpush1.msra.mxu0 0.0
        %1444 = vmatprep.subr.mxu0 0.0
        %1445 = vmatpush1.msra.mxu0 0.0
        %1446 = vmatprep.subr.mxu0 0.0
        %1447 = vmatpush1.msra.mxu0 0.0
        %1448 = vmatprep.subr.mxu0 0.0
        %1449 = vmatpush1.msra.mxu0 0.0
        %1450 = vmatprep.mubr.f32.mxu0 0.0
        %v1451 = vand.u32 %v997, 4294901760
        %1452 = vmatmul.mubr.f32.gmra.mrb[0].mxu0 %v1451
        %v1453 = vpop.f32.mrb[0].mxu0
        %v1454 = vadd.f32 %v1359, %v1453
        %v1455 = vpop.f32.mrb[0].mxu0
        %1456 = vdwg.mxu0
        %1457 = vmatprep.subr.mxu0 0.0
        %v1458 = vand.u32 %v210, 4294901760
        %1459 = vmatpush1.msra.mxu0 %v1458
        %1460 = vmatprep.subr.mxu0 0.0
        %v1461 = vand.u32 %v211, 4294901760
        %1462 = vmatpush1.msra.mxu0 %v1461
        %1463 = vmatprep.subr.mxu0 0.0
        %v1464 = vand.u32 %v212, 4294901760
        %1465 = vmatpush1.msra.mxu0 %v1464
        %1466 = vmatprep.subr.mxu0 0.0
        %v1467 = vand.u32 %v213, 4294901760
        %1468 = vmatpush1.msra.mxu0 %v1467
        %1469 = vmatprep.subr.mxu0 0.0
        %v1470 = vand.u32 %v214, 4294901760
        %1471 = vmatpush1.msra.mxu0 %v1470
        %1472 = vmatprep.subr.mxu0 0.0
        %v1473 = vand.u32 %v215, 4294901760
        %1474 = vmatpush1.msra.mxu0 %v1473
        %1475 = vmatprep.subr.mxu0 0.0
        %v1476 = vand.u32 %v216, 4294901760
        %1477 = vmatpush1.msra.mxu0 %v1476
        %1478 = vmatprep.subr.mxu0 0.0
        %v1479 = vand.u32 %v217, 4294901760
        %1480 = vmatpush1.msra.mxu0 %v1479
        %1481 = vmatprep.subr.mxu0 0.0
        %1482 = vmatpush1.msra.mxu0 0.0
        %1483 = vmatprep.subr.mxu0 0.0
        %1484 = vmatpush1.msra.mxu0 0.0
        %1485 = vmatprep.subr.mxu0 0.0
        %1486 = vmatpush1.msra.mxu0 0.0
        %1487 = vmatprep.subr.mxu0 0.0
        %1488 = vmatpush1.msra.mxu0 0.0
        %1489 = vmatprep.subr.mxu0 0.0
        %1490 = vmatpush1.msra.mxu0 0.0
        %1491 = vmatprep.subr.mxu0 0.0
        %1492 = vmatpush1.msra.mxu0 0.0
        %1493 = vmatprep.subr.mxu0 0.0
        %1494 = vmatpush1.msra.mxu0 0.0
        %1495 = vmatprep.subr.mxu0 0.0
        %1496 = vmatpush1.msra.mxu0 0.0
        %1497 = vmatprep.subr.mxu0 0.0
        %1498 = vmatpush1.msra.mxu0 0.0
        %1499 = vmatprep.subr.mxu0 0.0
        %1500 = vmatpush1.msra.mxu0 0.0
        %1501 = vmatprep.subr.mxu0 0.0
        %1502 = vmatpush1.msra.mxu0 0.0
        %1503 = vmatprep.subr.mxu0 0.0
        %1504 = vmatpush1.msra.mxu0 0.0
        %1505 = vmatprep.subr.mxu0 0.0
        %1506 = vmatpush1.msra.mxu0 0.0
        %1507 = vmatprep.subr.mxu0 0.0
        %1508 = vmatpush1.msra.mxu0 0.0
        %1509 = vmatprep.subr.mxu0 0.0
        %1510 = vmatpush1.msra.mxu0 0.0
        %1511 = vmatprep.subr.mxu0 0.0
        %1512 = vmatpush1.msra.mxu0 0.0
        %1513 = vmatprep.subr.mxu0 0.0
        %1514 = vmatpush1.msra.mxu0 0.0
        %1515 = vmatprep.subr.mxu0 0.0
        %1516 = vmatpush1.msra.mxu0 0.0
        %1517 = vmatprep.subr.mxu0 0.0
        %1518 = vmatpush1.msra.mxu0 0.0
        %1519 = vmatprep.subr.mxu0 0.0
        %1520 = vmatpush1.msra.mxu0 0.0
        %1521 = vmatprep.subr.mxu0 0.0
        %1522 = vmatpush1.msra.mxu0 0.0
        %1523 = vmatprep.subr.mxu0 0.0
        %1524 = vmatpush1.msra.mxu0 0.0
        %1525 = vmatprep.subr.mxu0 0.0
        %1526 = vmatpush1.msra.mxu0 0.0
        %1527 = vmatprep.subr.mxu0 0.0
        %1528 = vmatpush1.msra.mxu0 0.0
        %1529 = vmatprep.mubr.f32.mxu0 0.0
        %v1530 = vand.u32 %v997, 4294901760
        %1531 = vmatmul.mubr.f32.gmra.mrb[0].mxu0 %v1530
        %v1532 = vpop.f32.mrb[0].mxu0
        %v1533 = vadd.f32 %v1454, %v1532
        %v1534 = vpop.f32.mrb[0].mxu0
        %1535 = vdwg.mxu0
        %s1536 = scalar_lea.vmem %s207, 4 [#allocation5]
        %1537 = vst.msk [vmem:[%s1536] sm:$0xf] %vm887, %v1533
        %s1538 = scalar_lea.vmem %s185, 32 [#allocation2]
        %v1539 = vld [vmem:[%s1538] sm:$0xf]
        %s1540 = scalar_lea.vmem %s185, 36 [#allocation2]
        %v1541 = vld [vmem:[%s1540] sm:$0xf]
        %s1542 = scalar_lea.vmem %s185, 40 [#allocation2]
        %v1543 = vld [vmem:[%s1542] sm:$0xf]
        %s1544 = scalar_lea.vmem %s185, 44 [#allocation2]
        %v1545 = vld [vmem:[%s1544] sm:$0xf]
        %s1546 = scalar_lea.vmem %s185, 96 [#allocation2]
        %v1547 = vld [vmem:[%s1546] sm:$0xf]
        %s1548 = scalar_lea.vmem %s185, 100 [#allocation2]
        %v1549 = vld [vmem:[%s1548] sm:$0xf]
        %s1550 = scalar_lea.vmem %s185, 104 [#allocation2]
        %v1551 = vld [vmem:[%s1550] sm:$0xf]
        %s1552 = scalar_lea.vmem %s185, 108 [#allocation2]
        %v1553 = vld [vmem:[%s1552] sm:$0xf]
        %s1554 = scalar_lea.vmem %s185, 160 [#allocation2]
        %v1555 = vld [vmem:[%s1554] sm:$0xf]
        %s1556 = scalar_lea.vmem %s185, 164 [#allocation2]
        %v1557 = vld [vmem:[%s1556] sm:$0xf]
        %s1558 = scalar_lea.vmem %s185, 168 [#allocation2]
        %v1559 = vld [vmem:[%s1558] sm:$0xf]
        %s1560 = scalar_lea.vmem %s185, 172 [#allocation2]
        %v1561 = vld [vmem:[%s1560] sm:$0xf]
        %s1562 = scalar_lea.vmem %s185, 224 [#allocation2]
        %v1563 = vld [vmem:[%s1562] sm:$0xf]
        %s1564 = scalar_lea.vmem %s185, 228 [#allocation2]
        %v1565 = vld [vmem:[%s1564] sm:$0xf]
        %s1566 = scalar_lea.vmem %s185, 232 [#allocation2]
        %v1567 = vld [vmem:[%s1566] sm:$0xf]
        %s1568 = scalar_lea.vmem %s185, 236 [#allocation2]
        %v1569 = vld [vmem:[%s1568] sm:$0xf]
        %1571 = vrot.lane.b32.xlu0 %v1541, 4
        %v1572 = vpop.permute.xlu0 %1571
        %1575 = vrot.lane.b32.xlu0 %v1543, 8
        %v1576 = vpop.permute.xlu0 %1575
        %1579 = vrot.lane.b32.xlu0 %v1545, 12
        %v1580 = vpop.permute.xlu0 %1579
        %1583 = vrot.lane.b32.xlu0 %v1547, 16
        %v1584 = vpop.permute.xlu0 %1583
        %1587 = vrot.lane.b32.xlu0 %v1549, 20
        %v1588 = vpop.permute.xlu0 %1587
        %1591 = vrot.lane.b32.xlu0 %v1551, 24
        %v1592 = vpop.permute.xlu0 %1591
        %1595 = vrot.lane.b32.xlu0 %v1553, 28
        %v1596 = vpop.permute.xlu0 %1595
        %1599 = vrot.lane.b32.xlu0 %v1555, 32
        %v1600 = vpop.permute.xlu0 %1599
        %1603 = vrot.lane.b32.xlu0 %v1557, 36
        %v1604 = vpop.permute.xlu0 %1603
        %1607 = vrot.lane.b32.xlu0 %v1559, 40
        %v1608 = vpop.permute.xlu0 %1607
        %1611 = vrot.lane.b32.xlu0 %v1561, 44
        %v1612 = vpop.permute.xlu0 %1611
        %1615 = vrot.lane.b32.xlu0 %v1563, 48
        %v1616 = vpop.permute.xlu0 %1615
        %1619 = vrot.lane.b32.xlu0 %v1565, 52
        %v1620 = vpop.permute.xlu0 %1619
        %1623 = vrot.lane.b32.xlu0 %v1567, 56
        %v1624 = vpop.permute.xlu0 %1623
        %1627 = vrot.lane.b32.xlu0 %v1569, 60
        %v1628 = vpop.permute.xlu0 %1627
        %v1630 = vsel %vm310, %v1539, %v1572
        %v1631 = vsel %vm312, %v1630, %v1576
        %v1632 = vsel %vm314, %v1631, %v1580
        %v1633 = vsel %vm316, %v1632, %v1584
        %v1634 = vsel %vm318, %v1633, %v1588
        %v1635 = vsel %vm320, %v1634, %v1592
        %v1636 = vsel %vm322, %v1635, %v1596
        %v1637 = vsel %vm324, %v1636, %v1600
        %v1638 = vsel %vm326, %v1637, %v1604
        %v1639 = vsel %vm328, %v1638, %v1608
        %v1640 = vsel %vm330, %v1639, %v1612
        %v1641 = vsel %vm332, %v1640, %v1616
        %v1642 = vsel %vm334, %v1641, %v1620
        %v1643 = vsel %vm336, %v1642, %v1624
        %v1644 = vsel %vm338, %v1643, %v1628
        %v1646 = vsel %vm346, %v1644, 0
        %1648 = vmatprep.subr.mxu0 0.0
        %v1649 = vand.u32 %v210, 4294901760
        %1650 = vmatpush1.msra.mxu0 %v1649
        %1651 = vmatprep.subr.mxu0 0.0
        %v1652 = vand.u32 %v211, 4294901760
        %1653 = vmatpush1.msra.mxu0 %v1652
        %1654 = vmatprep.subr.mxu0 0.0
        %v1655 = vand.u32 %v212, 4294901760
        %1656 = vmatpush1.msra.mxu0 %v1655
        %1657 = vmatprep.subr.mxu0 0.0
        %v1658 = vand.u32 %v213, 4294901760
        %1659 = vmatpush1.msra.mxu0 %v1658
        %1660 = vmatprep.subr.mxu0 0.0
        %v1661 = vand.u32 %v214, 4294901760
        %1662 = vmatpush1.msra.mxu0 %v1661
        %1663 = vmatprep.subr.mxu0 0.0
        %v1664 = vand.u32 %v215, 4294901760
        %1665 = vmatpush1.msra.mxu0 %v1664
        %1666 = vmatprep.subr.mxu0 0.0
        %v1667 = vand.u32 %v216, 4294901760
        %1668 = vmatpush1.msra.mxu0 %v1667
        %1669 = vmatprep.subr.mxu0 0.0
        %v1670 = vand.u32 %v217, 4294901760
        %1671 = vmatpush1.msra.mxu0 %v1670
        %1672 = vmatprep.subr.mxu0 0.0
        %1673 = vmatpush1.msra.mxu0 0.0
        %1674 = vmatprep.subr.mxu0 0.0
        %1675 = vmatpush1.msra.mxu0 0.0
        %1676 = vmatprep.subr.mxu0 0.0
        %1677 = vmatpush1.msra.mxu0 0.0
        %1678 = vmatprep.subr.mxu0 0.0
        %1679 = vmatpush1.msra.mxu0 0.0
        %1680 = vmatprep.subr.mxu0 0.0
        %1681 = vmatpush1.msra.mxu0 0.0
        %1682 = vmatprep.subr.mxu0 0.0
        %1683 = vmatpush1.msra.mxu0 0.0
        %1684 = vmatprep.subr.mxu0 0.0
        %1685 = vmatpush1.msra.mxu0 0.0
        %1686 = vmatprep.subr.mxu0 0.0
        %1687 = vmatpush1.msra.mxu0 0.0
        %1688 = vmatprep.subr.mxu0 0.0
        %1689 = vmatpush1.msra.mxu0 0.0
        %1690 = vmatprep.subr.mxu0 0.0
        %1691 = vmatpush1.msra.mxu0 0.0
        %1692 = vmatprep.subr.mxu0 0.0
        %1693 = vmatpush1.msra.mxu0 0.0
        %1694 = vmatprep.subr.mxu0 0.0
        %1695 = vmatpush1.msra.mxu0 0.0
        %1696 = vmatprep.subr.mxu0 0.0
        %1697 = vmatpush1.msra.mxu0 0.0
        %1698 = vmatprep.subr.mxu0 0.0
        %1699 = vmatpush1.msra.mxu0 0.0
        %1700 = vmatprep.subr.mxu0 0.0
        %1701 = vmatpush1.msra.mxu0 0.0
        %1702 = vmatprep.subr.mxu0 0.0
        %1703 = vmatpush1.msra.mxu0 0.0
        %1704 = vmatprep.subr.mxu0 0.0
        %1705 = vmatpush1.msra.mxu0 0.0
        %1706 = vmatprep.subr.mxu0 0.0
        %1707 = vmatpush1.msra.mxu0 0.0
        %1708 = vmatprep.subr.mxu0 0.0
        %1709 = vmatpush1.msra.mxu0 0.0
        %1710 = vmatprep.subr.mxu0 0.0
        %1711 = vmatpush1.msra.mxu0 0.0
        %1712 = vmatprep.subr.mxu0 0.0
        %1713 = vmatpush1.msra.mxu0 0.0
        %1714 = vmatprep.subr.mxu0 0.0
        %1715 = vmatpush1.msra.mxu0 0.0
        %1716 = vmatprep.subr.mxu0 0.0
        %1717 = vmatpush1.msra.mxu0 0.0
        %1718 = vmatprep.subr.mxu0 0.0
        %1719 = vmatpush1.msra.mxu0 0.0
        %1720 = vmatprep.mubr.f32.mxu0 0.0
        %v1721 = vand.u32 %v1646, 4294901760
        %v1722 = vsub.f32 %v1646, %v1721
        %v1723 = vand.u32 %v1722, 4294901760
        %v1724 = vsub.f32 %v1722, %v1723
        %v1725 = vand.u32 %v1724, 4294901760
        %1726 = vmatmul.mubr.f32.gmra.mrb[0].mxu0 %v1725
        %v1727 = vpop.f32.mrb[0].mxu0
        %v1728 = vadd.f32 %v344, %v1727
        %v1729 = vpop.f32.mrb[0].mxu0
        %1730 = vdwg.mxu0
        %1731 = vmatprep.subr.mxu0 0.0
        %v1732 = vand.u32 %v210, 4294901760
        %v1733 = vsub.f32 %v210, %v1732
        %v1734 = vand.u32 %v1733, 4294901760
        %v1735 = vsub.f32 %v1733, %v1734
        %v1736 = vand.u32 %v1735, 4294901760
        %1737 = vmatpush1.msra.mxu0 %v1736
        %1738 = vmatprep.subr.mxu0 0.0
        %v1739 = vand.u32 %v211, 4294901760
        %v1740 = vsub.f32 %v211, %v1739
        %v1741 = vand.u32 %v1740, 4294901760
        %v1742 = vsub.f32 %v1740, %v1741
        %v1743 = vand.u32 %v1742, 4294901760
        %1744 = vmatpush1.msra.mxu0 %v1743
        %1745 = vmatprep.subr.mxu0 0.0
        %v1746 = vand.u32 %v212, 4294901760
        %v1747 = vsub.f32 %v212, %v1746
        %v1748 = vand.u32 %v1747, 4294901760
        %v1749 = vsub.f32 %v1747, %v1748
        %v1750 = vand.u32 %v1749, 4294901760
        %1751 = vmatpush1.msra.mxu0 %v1750
        %1752 = vmatprep.subr.mxu0 0.0
        %v1753 = vand.u32 %v213, 4294901760
        %v1754 = vsub.f32 %v213, %v1753
        %v1755 = vand.u32 %v1754, 4294901760
        %v1756 = vsub.f32 %v1754, %v1755
        %v1757 = vand.u32 %v1756, 4294901760
        %1758 = vmatpush1.msra.mxu0 %v1757
        %1759 = vmatprep.subr.mxu0 0.0
        %v1760 = vand.u32 %v214, 4294901760
        %v1761 = vsub.f32 %v214, %v1760
        %v1762 = vand.u32 %v1761, 4294901760
        %v1763 = vsub.f32 %v1761, %v1762
        %v1764 = vand.u32 %v1763, 4294901760
        %1765 = vmatpush1.msra.mxu0 %v1764
        %1766 = vmatprep.subr.mxu0 0.0
        %v1767 = vand.u32 %v215, 4294901760
        %v1768 = vsub.f32 %v215, %v1767
        %v1769 = vand.u32 %v1768, 4294901760
        %v1770 = vsub.f32 %v1768, %v1769
        %v1771 = vand.u32 %v1770, 4294901760
        %1772 = vmatpush1.msra.mxu0 %v1771
        %1773 = vmatprep.subr.mxu0 0.0
        %v1774 = vand.u32 %v216, 4294901760
        %v1775 = vsub.f32 %v216, %v1774
        %v1776 = vand.u32 %v1775, 4294901760
        %v1777 = vsub.f32 %v1775, %v1776
        %v1778 = vand.u32 %v1777, 4294901760
        %1779 = vmatpush1.msra.mxu0 %v1778
        %1780 = vmatprep.subr.mxu0 0.0
        %v1781 = vand.u32 %v217, 4294901760
        %v1782 = vsub.f32 %v217, %v1781
        %v1783 = vand.u32 %v1782, 4294901760
        %v1784 = vsub.f32 %v1782, %v1783
        %v1785 = vand.u32 %v1784, 4294901760
        %1786 = vmatpush1.msra.mxu0 %v1785
        %1787 = vmatprep.subr.mxu0 0.0
        %1788 = vmatpush1.msra.mxu0 0.0
        %1789 = vmatprep.subr.mxu0 0.0
        %1790 = vmatpush1.msra.mxu0 0.0
        %1791 = vmatprep.subr.mxu0 0.0
        %1792 = vmatpush1.msra.mxu0 0.0
        %1793 = vmatprep.subr.mxu0 0.0
        %1794 = vmatpush1.msra.mxu0 0.0
        %1795 = vmatprep.subr.mxu0 0.0
        %1796 = vmatpush1.msra.mxu0 0.0
        %1797 = vmatprep.subr.mxu0 0.0
        %1798 = vmatpush1.msra.mxu0 0.0
        %1799 = vmatprep.subr.mxu0 0.0
        %1800 = vmatpush1.msra.mxu0 0.0
        %1801 = vmatprep.subr.mxu0 0.0
        %1802 = vmatpush1.msra.mxu0 0.0
        %1803 = vmatprep.subr.mxu0 0.0
        %1804 = vmatpush1.msra.mxu0 0.0
        %1805 = vmatprep.subr.mxu0 0.0
        %1806 = vmatpush1.msra.mxu0 0.0
        %1807 = vmatprep.subr.mxu0 0.0
        %1808 = vmatpush1.msra.mxu0 0.0
        %1809 = vmatprep.subr.mxu0 0.0
        %1810 = vmatpush1.msra.mxu0 0.0
        %1811 = vmatprep.subr.mxu0 0.0
        %1812 = vmatpush1.msra.mxu0 0.0
        %1813 = vmatprep.subr.mxu0 0.0
        %1814 = vmatpush1.msra.mxu0 0.0
        %1815 = vmatprep.subr.mxu0 0.0
        %1816 = vmatpush1.msra.mxu0 0.0
        %1817 = vmatprep.subr.mxu0 0.0
        %1818 = vmatpush1.msra.mxu0 0.0
        %1819 = vmatprep.subr.mxu0 0.0
        %1820 = vmatpush1.msra.mxu0 0.0
        %1821 = vmatprep.subr.mxu0 0.0
        %1822 = vmatpush1.msra.mxu0 0.0
        %1823 = vmatprep.subr.mxu0 0.0
        %1824 = vmatpush1.msra.mxu0 0.0
        %1825 = vmatprep.subr.mxu0 0.0
        %1826 = vmatpush1.msra.mxu0 0.0
        %1827 = vmatprep.subr.mxu0 0.0
        %1828 = vmatpush1.msra.mxu0 0.0
        %1829 = vmatprep.subr.mxu0 0.0
        %1830 = vmatpush1.msra.mxu0 0.0
        %1831 = vmatprep.subr.mxu0 0.0
        %1832 = vmatpush1.msra.mxu0 0.0
        %1833 = vmatprep.subr.mxu0 0.0
        %1834 = vmatpush1.msra.mxu0 0.0
        %1835 = vmatprep.mubr.f32.mxu0 0.0
        %v1836 = vand.u32 %v1646, 4294901760
        %1837 = vmatmul.mubr.f32.gmra.mrb[0].mxu0 %v1836
        %v1838 = vpop.f32.mrb[0].mxu0
        %v1839 = vadd.f32 %v1728, %v1838
        %v1840 = vpop.f32.mrb[0].mxu0
        %1841 = vdwg.mxu0
        %1842 = vmatprep.subr.mxu0 0.0
        %v1843 = vand.u32 %v210, 4294901760
        %v1844 = vsub.f32 %v210, %v1843
        %1845 = vmatpush1.msra.mxu0 %v1844
        %1846 = vmatprep.subr.mxu0 0.0
        %v1847 = vand.u32 %v211, 4294901760
        %v1848 = vsub.f32 %v211, %v1847
        %1849 = vmatpush1.msra.mxu0 %v1848
        %1850 = vmatprep.subr.mxu0 0.0
        %v1851 = vand.u32 %v212, 4294901760
        %v1852 = vsub.f32 %v212, %v1851
        %1853 = vmatpush1.msra.mxu0 %v1852
        %1854 = vmatprep.subr.mxu0 0.0
        %v1855 = vand.u32 %v213, 4294901760
        %v1856 = vsub.f32 %v213, %v1855
        %1857 = vmatpush1.msra.mxu0 %v1856
        %1858 = vmatprep.subr.mxu0 0.0
        %v1859 = vand.u32 %v214, 4294901760
        %v1860 = vsub.f32 %v214, %v1859
        %1861 = vmatpush1.msra.mxu0 %v1860
        %1862 = vmatprep.subr.mxu0 0.0
        %v1863 = vand.u32 %v215, 4294901760
        %v1864 = vsub.f32 %v215, %v1863
        %1865 = vmatpush1.msra.mxu0 %v1864
        %1866 = vmatprep.subr.mxu0 0.0
        %v1867 = vand.u32 %v216, 4294901760
        %v1868 = vsub.f32 %v216, %v1867
        %1869 = vmatpush1.msra.mxu0 %v1868
        %1870 = vmatprep.subr.mxu0 0.0
        %v1871 = vand.u32 %v217, 4294901760
        %v1872 = vsub.f32 %v217, %v1871
        %1873 = vmatpush1.msra.mxu0 %v1872
        %1874 = vmatprep.subr.mxu0 0.0
        %1875 = vmatpush1.msra.mxu0 0.0
        %1876 = vmatprep.subr.mxu0 0.0
        %1877 = vmatpush1.msra.mxu0 0.0
        %1878 = vmatprep.subr.mxu0 0.0
        %1879 = vmatpush1.msra.mxu0 0.0
        %1880 = vmatprep.subr.mxu0 0.0
        %1881 = vmatpush1.msra.mxu0 0.0
        %1882 = vmatprep.subr.mxu0 0.0
        %1883 = vmatpush1.msra.mxu0 0.0
        %1884 = vmatprep.subr.mxu0 0.0
        %1885 = vmatpush1.msra.mxu0 0.0
        %1886 = vmatprep.subr.mxu0 0.0
        %1887 = vmatpush1.msra.mxu0 0.0
        %1888 = vmatprep.subr.mxu0 0.0
        %1889 = vmatpush1.msra.mxu0 0.0
        %1890 = vmatprep.subr.mxu0 0.0
        %1891 = vmatpush1.msra.mxu0 0.0
        %1892 = vmatprep.subr.mxu0 0.0
        %1893 = vmatpush1.msra.mxu0 0.0
        %1894 = vmatprep.subr.mxu0 0.0
        %1895 = vmatpush1.msra.mxu0 0.0
        %1896 = vmatprep.subr.mxu0 0.0
        %1897 = vmatpush1.msra.mxu0 0.0
        %1898 = vmatprep.subr.mxu0 0.0
        %1899 = vmatpush1.msra.mxu0 0.0
        %1900 = vmatprep.subr.mxu0 0.0
        %1901 = vmatpush1.msra.mxu0 0.0
        %1902 = vmatprep.subr.mxu0 0.0
        %1903 = vmatpush1.msra.mxu0 0.0
        %1904 = vmatprep.subr.mxu0 0.0
        %1905 = vmatpush1.msra.mxu0 0.0
        %1906 = vmatprep.subr.mxu0 0.0
        %1907 = vmatpush1.msra.mxu0 0.0
        %1908 = vmatprep.subr.mxu0 0.0
        %1909 = vmatpush1.msra.mxu0 0.0
        %1910 = vmatprep.subr.mxu0 0.0
        %1911 = vmatpush1.msra.mxu0 0.0
        %1912 = vmatprep.subr.mxu0 0.0
        %1913 = vmatpush1.msra.mxu0 0.0
        %1914 = vmatprep.subr.mxu0 0.0
        %1915 = vmatpush1.msra.mxu0 0.0
        %1916 = vmatprep.subr.mxu0 0.0
        %1917 = vmatpush1.msra.mxu0 0.0
        %1918 = vmatprep.subr.mxu0 0.0
        %1919 = vmatpush1.msra.mxu0 0.0
        %1920 = vmatprep.subr.mxu0 0.0
        %1921 = vmatpush1.msra.mxu0 0.0
        %1922 = vmatprep.mubr.f32.mxu0 0.0
        %v1923 = vand.u32 %v1646, 4294901760
        %v1924 = vsub.f32 %v1646, %v1923
        %1925 = vmatmul.mubr.f32.gmra.mrb[0].mxu0 %v1924
        %v1926 = vpop.f32.mrb[0].mxu0
        %v1927 = vadd.f32 %v1839, %v1926
        %v1928 = vpop.f32.mrb[0].mxu0
        %1929 = vdwg.mxu0
        %1930 = vmatprep.subr.mxu0 0.0
        %v1931 = vand.u32 %v210, 4294901760
        %1932 = vmatpush1.msra.mxu0 %v1931
        %1933 = vmatprep.subr.mxu0 0.0
        %v1934 = vand.u32 %v211, 4294901760
        %1935 = vmatpush1.msra.mxu0 %v1934
        %1936 = vmatprep.subr.mxu0 0.0
        %v1937 = vand.u32 %v212, 4294901760
        %1938 = vmatpush1.msra.mxu0 %v1937
        %1939 = vmatprep.subr.mxu0 0.0
        %v1940 = vand.u32 %v213, 4294901760
        %1941 = vmatpush1.msra.mxu0 %v1940
        %1942 = vmatprep.subr.mxu0 0.0
        %v1943 = vand.u32 %v214, 4294901760
        %1944 = vmatpush1.msra.mxu0 %v1943
        %1945 = vmatprep.subr.mxu0 0.0
        %v1946 = vand.u32 %v215, 4294901760
        %1947 = vmatpush1.msra.mxu0 %v1946
        %1948 = vmatprep.subr.mxu0 0.0
        %v1949 = vand.u32 %v216, 4294901760
        %1950 = vmatpush1.msra.mxu0 %v1949
        %1951 = vmatprep.subr.mxu0 0.0
        %v1952 = vand.u32 %v217, 4294901760
        %1953 = vmatpush1.msra.mxu0 %v1952
        %1954 = vmatprep.subr.mxu0 0.0
        %1955 = vmatpush1.msra.mxu0 0.0
        %1956 = vmatprep.subr.mxu0 0.0
        %1957 = vmatpush1.msra.mxu0 0.0
        %1958 = vmatprep.subr.mxu0 0.0
        %1959 = vmatpush1.msra.mxu0 0.0
        %1960 = vmatprep.subr.mxu0 0.0
        %1961 = vmatpush1.msra.mxu0 0.0
        %1962 = vmatprep.subr.mxu0 0.0
        %1963 = vmatpush1.msra.mxu0 0.0
        %1964 = vmatprep.subr.mxu0 0.0
        %1965 = vmatpush1.msra.mxu0 0.0
        %1966 = vmatprep.subr.mxu0 0.0
        %1967 = vmatpush1.msra.mxu0 0.0
        %1968 = vmatprep.subr.mxu0 0.0
        %1969 = vmatpush1.msra.mxu0 0.0
        %1970 = vmatprep.subr.mxu0 0.0
        %1971 = vmatpush1.msra.mxu0 0.0
        %1972 = vmatprep.subr.mxu0 0.0
        %1973 = vmatpush1.msra.mxu0 0.0
        %1974 = vmatprep.subr.mxu0 0.0
        %1975 = vmatpush1.msra.mxu0 0.0
        %1976 = vmatprep.subr.mxu0 0.0
        %1977 = vmatpush1.msra.mxu0 0.0
        %1978 = vmatprep.subr.mxu0 0.0
        %1979 = vmatpush1.msra.mxu0 0.0
        %1980 = vmatprep.subr.mxu0 0.0
        %1981 = vmatpush1.msra.mxu0 0.0
        %1982 = vmatprep.subr.mxu0 0.0
        %1983 = vmatpush1.msra.mxu0 0.0
        %1984 = vmatprep.subr.mxu0 0.0
        %1985 = vmatpush1.msra.mxu0 0.0
        %1986 = vmatprep.subr.mxu0 0.0
        %1987 = vmatpush1.msra.mxu0 0.0
        %1988 = vmatprep.subr.mxu0 0.0
        %1989 = vmatpush1.msra.mxu0 0.0
        %1990 = vmatprep.subr.mxu0 0.0
        %1991 = vmatpush1.msra.mxu0 0.0
        %1992 = vmatprep.subr.mxu0 0.0
        %1993 = vmatpush1.msra.mxu0 0.0
        %1994 = vmatprep.subr.mxu0 0.0
        %1995 = vmatpush1.msra.mxu0 0.0
        %1996 = vmatprep.subr.mxu0 0.0
        %1997 = vmatpush1.msra.mxu0 0.0
        %1998 = vmatprep.subr.mxu0 0.0
        %1999 = vmatpush1.msra.mxu0 0.0
        %2000 = vmatprep.subr.mxu0 0.0
        %2001 = vmatpush1.msra.mxu0 0.0
        %2002 = vmatprep.mubr.f32.mxu0 0.0
        %v2003 = vand.u32 %v1646, 4294901760
        %v2004 = vsub.f32 %v1646, %v2003
        %v2005 = vand.u32 %v2004, 4294901760
        %2006 = vmatmul.mubr.f32.gmra.mrb[0].mxu0 %v2005
        %v2007 = vpop.f32.mrb[0].mxu0
        %v2008 = vadd.f32 %v1927, %v2007
        %v2009 = vpop.f32.mrb[0].mxu0
        %2010 = vdwg.mxu0
        %2011 = vmatprep.subr.mxu0 0.0
        %v2012 = vand.u32 %v210, 4294901760
        %v2013 = vsub.f32 %v210, %v2012
        %v2014 = vand.u32 %v2013, 4294901760
        %2015 = vmatpush1.msra.mxu0 %v2014
        %2016 = vmatprep.subr.mxu0 0.0
        %v2017 = vand.u32 %v211, 4294901760
        %v2018 = vsub.f32 %v211, %v2017
        %v2019 = vand.u32 %v2018, 4294901760
        %2020 = vmatpush1.msra.mxu0 %v2019
        %2021 = vmatprep.subr.mxu0 0.0
        %v2022 = vand.u32 %v212, 4294901760
        %v2023 = vsub.f32 %v212, %v2022
        %v2024 = vand.u32 %v2023, 4294901760
        %2025 = vmatpush1.msra.mxu0 %v2024
        %2026 = vmatprep.subr.mxu0 0.0
        %v2027 = vand.u32 %v213, 4294901760
        %v2028 = vsub.f32 %v213, %v2027
        %v2029 = vand.u32 %v2028, 4294901760
        %2030 = vmatpush1.msra.mxu0 %v2029
        %2031 = vmatprep.subr.mxu0 0.0
        %v2032 = vand.u32 %v214, 4294901760
        %v2033 = vsub.f32 %v214, %v2032
        %v2034 = vand.u32 %v2033, 4294901760
        %2035 = vmatpush1.msra.mxu0 %v2034
        %2036 = vmatprep.subr.mxu0 0.0
        %v2037 = vand.u32 %v215, 4294901760
        %v2038 = vsub.f32 %v215, %v2037
        %v2039 = vand.u32 %v2038, 4294901760
        %2040 = vmatpush1.msra.mxu0 %v2039
        %2041 = vmatprep.subr.mxu0 0.0
        %v2042 = vand.u32 %v216, 4294901760
        %v2043 = vsub.f32 %v216, %v2042
        %v2044 = vand.u32 %v2043, 4294901760
        %2045 = vmatpush1.msra.mxu0 %v2044
        %2046 = vmatprep.subr.mxu0 0.0
        %v2047 = vand.u32 %v217, 4294901760
        %v2048 = vsub.f32 %v217, %v2047
        %v2049 = vand.u32 %v2048, 4294901760
        %2050 = vmatpush1.msra.mxu0 %v2049
        %2051 = vmatprep.subr.mxu0 0.0
        %2052 = vmatpush1.msra.mxu0 0.0
        %2053 = vmatprep.subr.mxu0 0.0
        %2054 = vmatpush1.msra.mxu0 0.0
        %2055 = vmatprep.subr.mxu0 0.0
        %2056 = vmatpush1.msra.mxu0 0.0
        %2057 = vmatprep.subr.mxu0 0.0
        %2058 = vmatpush1.msra.mxu0 0.0
        %2059 = vmatprep.subr.mxu0 0.0
        %2060 = vmatpush1.msra.mxu0 0.0
        %2061 = vmatprep.subr.mxu0 0.0
        %2062 = vmatpush1.msra.mxu0 0.0
        %2063 = vmatprep.subr.mxu0 0.0
        %2064 = vmatpush1.msra.mxu0 0.0
        %2065 = vmatprep.subr.mxu0 0.0
        %2066 = vmatpush1.msra.mxu0 0.0
        %2067 = vmatprep.subr.mxu0 0.0
        %2068 = vmatpush1.msra.mxu0 0.0
        %2069 = vmatprep.subr.mxu0 0.0
        %2070 = vmatpush1.msra.mxu0 0.0
        %2071 = vmatprep.subr.mxu0 0.0
        %2072 = vmatpush1.msra.mxu0 0.0
        %2073 = vmatprep.subr.mxu0 0.0
        %2074 = vmatpush1.msra.mxu0 0.0
        %2075 = vmatprep.subr.mxu0 0.0
        %2076 = vmatpush1.msra.mxu0 0.0
        %2077 = vmatprep.subr.mxu0 0.0
        %2078 = vmatpush1.msra.mxu0 0.0
        %2079 = vmatprep.subr.mxu0 0.0
        %2080 = vmatpush1.msra.mxu0 0.0
        %2081 = vmatprep.subr.mxu0 0.0
        %2082 = vmatpush1.msra.mxu0 0.0
        %2083 = vmatprep.subr.mxu0 0.0
        %2084 = vmatpush1.msra.mxu0 0.0
        %2085 = vmatprep.subr.mxu0 0.0
        %2086 = vmatpush1.msra.mxu0 0.0
        %2087 = vmatprep.subr.mxu0 0.0
        %2088 = vmatpush1.msra.mxu0 0.0
        %2089 = vmatprep.subr.mxu0 0.0
        %2090 = vmatpush1.msra.mxu0 0.0
        %2091 = vmatprep.subr.mxu0 0.0
        %2092 = vmatpush1.msra.mxu0 0.0
        %2093 = vmatprep.subr.mxu0 0.0
        %2094 = vmatpush1.msra.mxu0 0.0
        %2095 = vmatprep.subr.mxu0 0.0
        %2096 = vmatpush1.msra.mxu0 0.0
        %2097 = vmatprep.subr.mxu0 0.0
        %2098 = vmatpush1.msra.mxu0 0.0
        %2099 = vmatprep.mubr.f32.mxu0 0.0
        %v2100 = vand.u32 %v1646, 4294901760
        %2101 = vmatmul.mubr.f32.gmra.mrb[0].mxu0 %v2100
        %v2102 = vpop.f32.mrb[0].mxu0
        %v2103 = vadd.f32 %v2008, %v2102
        %v2104 = vpop.f32.mrb[0].mxu0
        %2105 = vdwg.mxu0
        %2106 = vmatprep.subr.mxu0 0.0
        %v2107 = vand.u32 %v210, 4294901760
        %2108 = vmatpush1.msra.mxu0 %v2107
        %2109 = vmatprep.subr.mxu0 0.0
        %v2110 = vand.u32 %v211, 4294901760
        %2111 = vmatpush1.msra.mxu0 %v2110
        %2112 = vmatprep.subr.mxu0 0.0
        %v2113 = vand.u32 %v212, 4294901760
        %2114 = vmatpush1.msra.mxu0 %v2113
        %2115 = vmatprep.subr.mxu0 0.0
        %v2116 = vand.u32 %v213, 4294901760
        %2117 = vmatpush1.msra.mxu0 %v2116
        %2118 = vmatprep.subr.mxu0 0.0
        %v2119 = vand.u32 %v214, 4294901760
        %2120 = vmatpush1.msra.mxu0 %v2119
        %2121 = vmatprep.subr.mxu0 0.0
        %v2122 = vand.u32 %v215, 4294901760
        %2123 = vmatpush1.msra.mxu0 %v2122
        %2124 = vmatprep.subr.mxu0 0.0
        %v2125 = vand.u32 %v216, 4294901760
        %2126 = vmatpush1.msra.mxu0 %v2125
        %2127 = vmatprep.subr.mxu0 0.0
        %v2128 = vand.u32 %v217, 4294901760
        %2129 = vmatpush1.msra.mxu0 %v2128
        %2130 = vmatprep.subr.mxu0 0.0
        %2131 = vmatpush1.msra.mxu0 0.0
        %2132 = vmatprep.subr.mxu0 0.0
        %2133 = vmatpush1.msra.mxu0 0.0
        %2134 = vmatprep.subr.mxu0 0.0
        %2135 = vmatpush1.msra.mxu0 0.0
        %2136 = vmatprep.subr.mxu0 0.0
        %2137 = vmatpush1.msra.mxu0 0.0
        %2138 = vmatprep.subr.mxu0 0.0
        %2139 = vmatpush1.msra.mxu0 0.0
        %2140 = vmatprep.subr.mxu0 0.0
        %2141 = vmatpush1.msra.mxu0 0.0
        %2142 = vmatprep.subr.mxu0 0.0
        %2143 = vmatpush1.msra.mxu0 0.0
        %2144 = vmatprep.subr.mxu0 0.0
        %2145 = vmatpush1.msra.mxu0 0.0
        %2146 = vmatprep.subr.mxu0 0.0
        %2147 = vmatpush1.msra.mxu0 0.0
        %2148 = vmatprep.subr.mxu0 0.0
        %2149 = vmatpush1.msra.mxu0 0.0
        %2150 = vmatprep.subr.mxu0 0.0
        %2151 = vmatpush1.msra.mxu0 0.0
        %2152 = vmatprep.subr.mxu0 0.0
        %2153 = vmatpush1.msra.mxu0 0.0
        %2154 = vmatprep.subr.mxu0 0.0
        %2155 = vmatpush1.msra.mxu0 0.0
        %2156 = vmatprep.subr.mxu0 0.0
        %2157 = vmatpush1.msra.mxu0 0.0
        %2158 = vmatprep.subr.mxu0 0.0
        %2159 = vmatpush1.msra.mxu0 0.0
        %2160 = vmatprep.subr.mxu0 0.0
        %2161 = vmatpush1.msra.mxu0 0.0
        %2162 = vmatprep.subr.mxu0 0.0
        %2163 = vmatpush1.msra.mxu0 0.0
        %2164 = vmatprep.subr.mxu0 0.0
        %2165 = vmatpush1.msra.mxu0 0.0
        %2166 = vmatprep.subr.mxu0 0.0
        %2167 = vmatpush1.msra.mxu0 0.0
        %2168 = vmatprep.subr.mxu0 0.0
        %2169 = vmatpush1.msra.mxu0 0.0
        %2170 = vmatprep.subr.mxu0 0.0
        %2171 = vmatpush1.msra.mxu0 0.0
        %2172 = vmatprep.subr.mxu0 0.0
        %2173 = vmatpush1.msra.mxu0 0.0
        %2174 = vmatprep.subr.mxu0 0.0
        %2175 = vmatpush1.msra.mxu0 0.0
        %2176 = vmatprep.subr.mxu0 0.0
        %2177 = vmatpush1.msra.mxu0 0.0
        %2178 = vmatprep.mubr.f32.mxu0 0.0
        %v2179 = vand.u32 %v1646, 4294901760
        %2180 = vmatmul.mubr.f32.gmra.mrb[0].mxu0 %v2179
        %v2181 = vpop.f32.mrb[0].mxu0
        %v2182 = vadd.f32 %v2103, %v2181
        %v2183 = vpop.f32.mrb[0].mxu0
        %2184 = vdwg.mxu0
        %s2185 = scalar_lea.vmem %s207, 8 [#allocation5]
        %2186 = vst.msk [vmem:[%s2185] sm:$0xf] %vm887, %v2182
        %s2187 = scalar_lea.vmem %s185, 48 [#allocation2]
        %v2188 = vld [vmem:[%s2187] sm:$0xf]
        %s2189 = scalar_lea.vmem %s185, 52 [#allocation2]
        %v2190 = vld [vmem:[%s2189] sm:$0xf]
        %s2191 = scalar_lea.vmem %s185, 56 [#allocation2]
        %v2192 = vld [vmem:[%s2191] sm:$0xf]
        %s2193 = scalar_lea.vmem %s185, 60 [#allocation2]
        %v2194 = vld [vmem:[%s2193] sm:$0xf]
        %s2195 = scalar_lea.vmem %s185, 112 [#allocation2]
        %v2196 = vld [vmem:[%s2195] sm:$0xf]
        %s2197 = scalar_lea.vmem %s185, 116 [#allocation2]
        %v2198 = vld [vmem:[%s2197] sm:$0xf]
        %s2199 = scalar_lea.vmem %s185, 120 [#allocation2]
        %v2200 = vld [vmem:[%s2199] sm:$0xf]
        %s2201 = scalar_lea.vmem %s185, 124 [#allocation2]
        %v2202 = vld [vmem:[%s2201] sm:$0xf]
        %s2203 = scalar_lea.vmem %s185, 176 [#allocation2]
        %v2204 = vld [vmem:[%s2203] sm:$0xf]
        %s2205 = scalar_lea.vmem %s185, 180 [#allocation2]
        %v2206 = vld [vmem:[%s2205] sm:$0xf]
        %s2207 = scalar_lea.vmem %s185, 184 [#allocation2]
        %v2208 = vld [vmem:[%s2207] sm:$0xf]
        %s2209 = scalar_lea.vmem %s185, 188 [#allocation2]
        %v2210 = vld [vmem:[%s2209] sm:$0xf]
        %s2211 = scalar_lea.vmem %s185, 240 [#allocation2]
        %v2212 = vld [vmem:[%s2211] sm:$0xf]
        %s2213 = scalar_lea.vmem %s185, 244 [#allocation2]
        %v2214 = vld [vmem:[%s2213] sm:$0xf]
        %s2215 = scalar_lea.vmem %s185, 248 [#allocation2]
        %v2216 = vld [vmem:[%s2215] sm:$0xf]
        %s2217 = scalar_lea.vmem %s185, 252 [#allocation2]
        %v2218 = vld [vmem:[%s2217] sm:$0xf]
        %2220 = vrot.lane.b32.xlu0 %v2190, 4
        %v2221 = vpop.permute.xlu0 %2220
        %2224 = vrot.lane.b32.xlu0 %v2192, 8
        %v2225 = vpop.permute.xlu0 %2224
        %2228 = vrot.lane.b32.xlu0 %v2194, 12
        %v2229 = vpop.permute.xlu0 %2228
        %2232 = vrot.lane.b32.xlu0 %v2196, 16
        %v2233 = vpop.permute.xlu0 %2232
        %2236 = vrot.lane.b32.xlu0 %v2198, 20
        %v2237 = vpop.permute.xlu0 %2236
        %2240 = vrot.lane.b32.xlu0 %v2200, 24
        %v2241 = vpop.permute.xlu0 %2240
        %2244 = vrot.lane.b32.xlu0 %v2202, 28
        %v2245 = vpop.permute.xlu0 %2244
        %2248 = vrot.lane.b32.xlu0 %v2204, 32
        %v2249 = vpop.permute.xlu0 %2248
        %2252 = vrot.lane.b32.xlu0 %v2206, 36
        %v2253 = vpop.permute.xlu0 %2252
        %2256 = vrot.lane.b32.xlu0 %v2208, 40
        %v2257 = vpop.permute.xlu0 %2256
        %2260 = vrot.lane.b32.xlu0 %v2210, 44
        %v2261 = vpop.permute.xlu0 %2260
        %2264 = vrot.lane.b32.xlu0 %v2212, 48
        %v2265 = vpop.permute.xlu0 %2264
        %2268 = vrot.lane.b32.xlu0 %v2214, 52
        %v2269 = vpop.permute.xlu0 %2268
        %2272 = vrot.lane.b32.xlu0 %v2216, 56
        %v2273 = vpop.permute.xlu0 %2272
        %2276 = vrot.lane.b32.xlu0 %v2218, 60
        %v2277 = vpop.permute.xlu0 %2276
        %v2279 = vsel %vm310, %v2188, %v2221
        %v2280 = vsel %vm312, %v2279, %v2225
        %v2281 = vsel %vm314, %v2280, %v2229
        %v2282 = vsel %vm316, %v2281, %v2233
        %v2283 = vsel %vm318, %v2282, %v2237
        %v2284 = vsel %vm320, %v2283, %v2241
        %v2285 = vsel %vm322, %v2284, %v2245
        %v2286 = vsel %vm324, %v2285, %v2249
        %v2287 = vsel %vm326, %v2286, %v2253
        %v2288 = vsel %vm328, %v2287, %v2257
        %v2289 = vsel %vm330, %v2288, %v2261
        %v2290 = vsel %vm332, %v2289, %v2265
        %v2291 = vsel %vm334, %v2290, %v2269
        %v2292 = vsel %vm336, %v2291, %v2273
        %v2293 = vsel %vm338, %v2292, %v2277
        %v2295 = vsel %vm346, %v2293, 0
        %2297 = vmatprep.subr.mxu0 0.0
        %v2298 = vand.u32 %v210, 4294901760
        %2299 = vmatpush1.msra.mxu0 %v2298
        %2300 = vmatprep.subr.mxu0 0.0
        %v2301 = vand.u32 %v211, 4294901760
        %2302 = vmatpush1.msra.mxu0 %v2301
        %2303 = vmatprep.subr.mxu0 0.0
        %v2304 = vand.u32 %v212, 4294901760
        %2305 = vmatpush1.msra.mxu0 %v2304
        %2306 = vmatprep.subr.mxu0 0.0
        %v2307 = vand.u32 %v213, 4294901760
        %2308 = vmatpush1.msra.mxu0 %v2307
        %2309 = vmatprep.subr.mxu0 0.0
        %v2310 = vand.u32 %v214, 4294901760
        %2311 = vmatpush1.msra.mxu0 %v2310
        %2312 = vmatprep.subr.mxu0 0.0
        %v2313 = vand.u32 %v215, 4294901760
        %2314 = vmatpush1.msra.mxu0 %v2313
        %2315 = vmatprep.subr.mxu0 0.0
        %v2316 = vand.u32 %v216, 4294901760
        %2317 = vmatpush1.msra.mxu0 %v2316
        %2318 = vmatprep.subr.mxu0 0.0
        %v2319 = vand.u32 %v217, 4294901760
        %2320 = vmatpush1.msra.mxu0 %v2319
        %2321 = vmatprep.subr.mxu0 0.0
        %2322 = vmatpush1.msra.mxu0 0.0
        %2323 = vmatprep.subr.mxu0 0.0
        %2324 = vmatpush1.msra.mxu0 0.0
        %2325 = vmatprep.subr.mxu0 0.0
        %2326 = vmatpush1.msra.mxu0 0.0
        %2327 = vmatprep.subr.mxu0 0.0
        %2328 = vmatpush1.msra.mxu0 0.0
        %2329 = vmatprep.subr.mxu0 0.0
        %2330 = vmatpush1.msra.mxu0 0.0
        %2331 = vmatprep.subr.mxu0 0.0
        %2332 = vmatpush1.msra.mxu0 0.0
        %2333 = vmatprep.subr.mxu0 0.0
        %2334 = vmatpush1.msra.mxu0 0.0
        %2335 = vmatprep.subr.mxu0 0.0
        %2336 = vmatpush1.msra.mxu0 0.0
        %2337 = vmatprep.subr.mxu0 0.0
        %2338 = vmatpush1.msra.mxu0 0.0
        %2339 = vmatprep.subr.mxu0 0.0
        %2340 = vmatpush1.msra.mxu0 0.0
        %2341 = vmatprep.subr.mxu0 0.0
        %2342 = vmatpush1.msra.mxu0 0.0
        %2343 = vmatprep.subr.mxu0 0.0
        %2344 = vmatpush1.msra.mxu0 0.0
        %2345 = vmatprep.subr.mxu0 0.0
        %2346 = vmatpush1.msra.mxu0 0.0
        %2347 = vmatprep.subr.mxu0 0.0
        %2348 = vmatpush1.msra.mxu0 0.0
        %2349 = vmatprep.subr.mxu0 0.0
        %2350 = vmatpush1.msra.mxu0 0.0
        %2351 = vmatprep.subr.mxu0 0.0
        %2352 = vmatpush1.msra.mxu0 0.0
        %2353 = vmatprep.subr.mxu0 0.0
        %2354 = vmatpush1.msra.mxu0 0.0
        %2355 = vmatprep.subr.mxu0 0.0
        %2356 = vmatpush1.msra.mxu0 0.0
        %2357 = vmatprep.subr.mxu0 0.0
        %2358 = vmatpush1.msra.mxu0 0.0
        %2359 = vmatprep.subr.mxu0 0.0
        %2360 = vmatpush1.msra.mxu0 0.0
        %2361 = vmatprep.subr.mxu0 0.0
        %2362 = vmatpush1.msra.mxu0 0.0
        %2363 = vmatprep.subr.mxu0 0.0
        %2364 = vmatpush1.msra.mxu0 0.0
        %2365 = vmatprep.subr.mxu0 0.0
        %2366 = vmatpush1.msra.mxu0 0.0
        %2367 = vmatprep.subr.mxu0 0.0
        %2368 = vmatpush1.msra.mxu0 0.0
        %2369 = vmatprep.mubr.f32.mxu0 0.0
        %v2370 = vand.u32 %v2295, 4294901760
        %v2371 = vsub.f32 %v2295, %v2370
        %v2372 = vand.u32 %v2371, 4294901760
        %v2373 = vsub.f32 %v2371, %v2372
        %v2374 = vand.u32 %v2373, 4294901760
        %2375 = vmatmul.mubr.f32.gmra.mrb[0].mxu0 %v2374
        %v2376 = vpop.f32.mrb[0].mxu0
        %v2377 = vadd.f32 %v344, %v2376
        %v2378 = vpop.f32.mrb[0].mxu0
        %2379 = vdwg.mxu0
        %2380 = vmatprep.subr.mxu0 0.0
        %v2381 = vand.u32 %v210, 4294901760
        %v2382 = vsub.f32 %v210, %v2381
        %v2383 = vand.u32 %v2382, 4294901760
        %v2384 = vsub.f32 %v2382, %v2383
        %v2385 = vand.u32 %v2384, 4294901760
        %2386 = vmatpush1.msra.mxu0 %v2385
        %2387 = vmatprep.subr.mxu0 0.0
        %v2388 = vand.u32 %v211, 4294901760
        %v2389 = vsub.f32 %v211, %v2388
        %v2390 = vand.u32 %v2389, 4294901760
        %v2391 = vsub.f32 %v2389, %v2390
        %v2392 = vand.u32 %v2391, 4294901760
        %2393 = vmatpush1.msra.mxu0 %v2392
        %2394 = vmatprep.subr.mxu0 0.0
        %v2395 = vand.u32 %v212, 4294901760
        %v2396 = vsub.f32 %v212, %v2395
        %v2397 = vand.u32 %v2396, 4294901760
        %v2398 = vsub.f32 %v2396, %v2397
        %v2399 = vand.u32 %v2398, 4294901760
        %2400 = vmatpush1.msra.mxu0 %v2399
        %2401 = vmatprep.subr.mxu0 0.0
        %v2402 = vand.u32 %v213, 4294901760
        %v2403 = vsub.f32 %v213, %v2402
        %v2404 = vand.u32 %v2403, 4294901760
        %v2405 = vsub.f32 %v2403, %v2404
        %v2406 = vand.u32 %v2405, 4294901760
        %2407 = vmatpush1.msra.mxu0 %v2406
        %2408 = vmatprep.subr.mxu0 0.0
        %v2409 = vand.u32 %v214, 4294901760
        %v2410 = vsub.f32 %v214, %v2409
        %v2411 = vand.u32 %v2410, 4294901760
        %v2412 = vsub.f32 %v2410, %v2411
        %v2413 = vand.u32 %v2412, 4294901760
        %2414 = vmatpush1.msra.mxu0 %v2413
        %2415 = vmatprep.subr.mxu0 0.0
        %v2416 = vand.u32 %v215, 4294901760
        %v2417 = vsub.f32 %v215, %v2416
        %v2418 = vand.u32 %v2417, 4294901760
        %v2419 = vsub.f32 %v2417, %v2418
        %v2420 = vand.u32 %v2419, 4294901760
        %2421 = vmatpush1.msra.mxu0 %v2420
        %2422 = vmatprep.subr.mxu0 0.0
        %v2423 = vand.u32 %v216, 4294901760
        %v2424 = vsub.f32 %v216, %v2423
        %v2425 = vand.u32 %v2424, 4294901760
        %v2426 = vsub.f32 %v2424, %v2425
        %v2427 = vand.u32 %v2426, 4294901760
        %2428 = vmatpush1.msra.mxu0 %v2427
        %2429 = vmatprep.subr.mxu0 0.0
        %v2430 = vand.u32 %v217, 4294901760
        %v2431 = vsub.f32 %v217, %v2430
        %v2432 = vand.u32 %v2431, 4294901760
        %v2433 = vsub.f32 %v2431, %v2432
        %v2434 = vand.u32 %v2433, 4294901760
        %2435 = vmatpush1.msra.mxu0 %v2434
        %2436 = vmatprep.subr.mxu0 0.0
        %2437 = vmatpush1.msra.mxu0 0.0
        %2438 = vmatprep.subr.mxu0 0.0
        %2439 = vmatpush1.msra.mxu0 0.0
        %2440 = vmatprep.subr.mxu0 0.0
        %2441 = vmatpush1.msra.mxu0 0.0
        %2442 = vmatprep.subr.mxu0 0.0
        %2443 = vmatpush1.msra.mxu0 0.0
        %2444 = vmatprep.subr.mxu0 0.0
        %2445 = vmatpush1.msra.mxu0 0.0
        %2446 = vmatprep.subr.mxu0 0.0
        %2447 = vmatpush1.msra.mxu0 0.0
        %2448 = vmatprep.subr.mxu0 0.0
        %2449 = vmatpush1.msra.mxu0 0.0
        %2450 = vmatprep.subr.mxu0 0.0
        %2451 = vmatpush1.msra.mxu0 0.0
        %2452 = vmatprep.subr.mxu0 0.0
        %2453 = vmatpush1.msra.mxu0 0.0
        %2454 = vmatprep.subr.mxu0 0.0
        %2455 = vmatpush1.msra.mxu0 0.0
        %2456 = vmatprep.subr.mxu0 0.0
        %2457 = vmatpush1.msra.mxu0 0.0
        %2458 = vmatprep.subr.mxu0 0.0
        %2459 = vmatpush1.msra.mxu0 0.0
        %2460 = vmatprep.subr.mxu0 0.0
        %2461 = vmatpush1.msra.mxu0 0.0
        %2462 = vmatprep.subr.mxu0 0.0
        %2463 = vmatpush1.msra.mxu0 0.0
        %2464 = vmatprep.subr.mxu0 0.0
        %2465 = vmatpush1.msra.mxu0 0.0
        %2466 = vmatprep.subr.mxu0 0.0
        %2467 = vmatpush1.msra.mxu0 0.0
        %2468 = vmatprep.subr.mxu0 0.0
        %2469 = vmatpush1.msra.mxu0 0.0
        %2470 = vmatprep.subr.mxu0 0.0
        %2471 = vmatpush1.msra.mxu0 0.0
        %2472 = vmatprep.subr.mxu0 0.0
        %2473 = vmatpush1.msra.mxu0 0.0
        %2474 = vmatprep.subr.mxu0 0.0
        %2475 = vmatpush1.msra.mxu0 0.0
        %2476 = vmatprep.subr.mxu0 0.0
        %2477 = vmatpush1.msra.mxu0 0.0
        %2478 = vmatprep.subr.mxu0 0.0
        %2479 = vmatpush1.msra.mxu0 0.0
        %2480 = vmatprep.subr.mxu0 0.0
        %2481 = vmatpush1.msra.mxu0 0.0
        %2482 = vmatprep.subr.mxu0 0.0
        %2483 = vmatpush1.msra.mxu0 0.0
        %2484 = vmatprep.mubr.f32.mxu0 0.0
        %v2485 = vand.u32 %v2295, 4294901760
        %2486 = vmatmul.mubr.f32.gmra.mrb[0].mxu0 %v2485
        %v2487 = vpop.f32.mrb[0].mxu0
        %v2488 = vadd.f32 %v2377, %v2487
        %v2489 = vpop.f32.mrb[0].mxu0
        %2490 = vdwg.mxu0
        %2491 = vmatprep.subr.mxu0 0.0
        %v2492 = vand.u32 %v210, 4294901760
        %v2493 = vsub.f32 %v210, %v2492
        %2494 = vmatpush1.msra.mxu0 %v2493
        %2495 = vmatprep.subr.mxu0 0.0
        %v2496 = vand.u32 %v211, 4294901760
        %v2497 = vsub.f32 %v211, %v2496
        %2498 = vmatpush1.msra.mxu0 %v2497
        %2499 = vmatprep.subr.mxu0 0.0
        %v2500 = vand.u32 %v212, 4294901760
        %v2501 = vsub.f32 %v212, %v2500
        %2502 = vmatpush1.msra.mxu0 %v2501
        %2503 = vmatprep.subr.mxu0 0.0
        %v2504 = vand.u32 %v213, 4294901760
        %v2505 = vsub.f32 %v213, %v2504
        %2506 = vmatpush1.msra.mxu0 %v2505
        %2507 = vmatprep.subr.mxu0 0.0
        %v2508 = vand.u32 %v214, 4294901760
        %v2509 = vsub.f32 %v214, %v2508
        %2510 = vmatpush1.msra.mxu0 %v2509
        %2511 = vmatprep.subr.mxu0 0.0
        %v2512 = vand.u32 %v215, 4294901760
        %v2513 = vsub.f32 %v215, %v2512
        %2514 = vmatpush1.msra.mxu0 %v2513
        %2515 = vmatprep.subr.mxu0 0.0
        %v2516 = vand.u32 %v216, 4294901760
        %v2517 = vsub.f32 %v216, %v2516
        %2518 = vmatpush1.msra.mxu0 %v2517
        %2519 = vmatprep.subr.mxu0 0.0
        %v2520 = vand.u32 %v217, 4294901760
        %v2521 = vsub.f32 %v217, %v2520
        %2522 = vmatpush1.msra.mxu0 %v2521
        %2523 = vmatprep.subr.mxu0 0.0
        %2524 = vmatpush1.msra.mxu0 0.0
        %2525 = vmatprep.subr.mxu0 0.0
        %2526 = vmatpush1.msra.mxu0 0.0
        %2527 = vmatprep.subr.mxu0 0.0
        %2528 = vmatpush1.msra.mxu0 0.0
        %2529 = vmatprep.subr.mxu0 0.0
        %2530 = vmatpush1.msra.mxu0 0.0
        %2531 = vmatprep.subr.mxu0 0.0
        %2532 = vmatpush1.msra.mxu0 0.0
        %2533 = vmatprep.subr.mxu0 0.0
        %2534 = vmatpush1.msra.mxu0 0.0
        %2535 = vmatprep.subr.mxu0 0.0
        %2536 = vmatpush1.msra.mxu0 0.0
        %2537 = vmatprep.subr.mxu0 0.0
        %2538 = vmatpush1.msra.mxu0 0.0
        %2539 = vmatprep.subr.mxu0 0.0
        %2540 = vmatpush1.msra.mxu0 0.0
        %2541 = vmatprep.subr.mxu0 0.0
        %2542 = vmatpush1.msra.mxu0 0.0
        %2543 = vmatprep.subr.mxu0 0.0
        %2544 = vmatpush1.msra.mxu0 0.0
        %2545 = vmatprep.subr.mxu0 0.0
        %2546 = vmatpush1.msra.mxu0 0.0
        %2547 = vmatprep.subr.mxu0 0.0
        %2548 = vmatpush1.msra.mxu0 0.0
        %2549 = vmatprep.subr.mxu0 0.0
        %2550 = vmatpush1.msra.mxu0 0.0
        %2551 = vmatprep.subr.mxu0 0.0
        %2552 = vmatpush1.msra.mxu0 0.0
        %2553 = vmatprep.subr.mxu0 0.0
        %2554 = vmatpush1.msra.mxu0 0.0
        %2555 = vmatprep.subr.mxu0 0.0
        %2556 = vmatpush1.msra.mxu0 0.0
        %2557 = vmatprep.subr.mxu0 0.0
        %2558 = vmatpush1.msra.mxu0 0.0
        %2559 = vmatprep.subr.mxu0 0.0
        %2560 = vmatpush1.msra.mxu0 0.0
        %2561 = vmatprep.subr.mxu0 0.0
        %2562 = vmatpush1.msra.mxu0 0.0
        %2563 = vmatprep.subr.mxu0 0.0
        %2564 = vmatpush1.msra.mxu0 0.0
        %2565 = vmatprep.subr.mxu0 0.0
        %2566 = vmatpush1.msra.mxu0 0.0
        %2567 = vmatprep.subr.mxu0 0.0
        %2568 = vmatpush1.msra.mxu0 0.0
        %2569 = vmatprep.subr.mxu0 0.0
        %2570 = vmatpush1.msra.mxu0 0.0
        %2571 = vmatprep.mubr.f32.mxu0 0.0
        %v2572 = vand.u32 %v2295, 4294901760
        %v2573 = vsub.f32 %v2295, %v2572
        %2574 = vmatmul.mubr.f32.gmra.mrb[0].mxu0 %v2573
        %v2575 = vpop.f32.mrb[0].mxu0
        %v2576 = vadd.f32 %v2488, %v2575
        %v2577 = vpop.f32.mrb[0].mxu0
        %2578 = vdwg.mxu0
        %2579 = vmatprep.subr.mxu0 0.0
        %v2580 = vand.u32 %v210, 4294901760
        %2581 = vmatpush1.msra.mxu0 %v2580
        %2582 = vmatprep.subr.mxu0 0.0
        %v2583 = vand.u32 %v211, 4294901760
        %2584 = vmatpush1.msra.mxu0 %v2583
        %2585 = vmatprep.subr.mxu0 0.0
        %v2586 = vand.u32 %v212, 4294901760
        %2587 = vmatpush1.msra.mxu0 %v2586
        %2588 = vmatprep.subr.mxu0 0.0
        %v2589 = vand.u32 %v213, 4294901760
        %2590 = vmatpush1.msra.mxu0 %v2589
        %2591 = vmatprep.subr.mxu0 0.0
        %v2592 = vand.u32 %v214, 4294901760
        %2593 = vmatpush1.msra.mxu0 %v2592
        %2594 = vmatprep.subr.mxu0 0.0
        %v2595 = vand.u32 %v215, 4294901760
        %2596 = vmatpush1.msra.mxu0 %v2595
        %2597 = vmatprep.subr.mxu0 0.0
        %v2598 = vand.u32 %v216, 4294901760
        %2599 = vmatpush1.msra.mxu0 %v2598
        %2600 = vmatprep.subr.mxu0 0.0
        %v2601 = vand.u32 %v217, 4294901760
        %2602 = vmatpush1.msra.mxu0 %v2601
        %2603 = vmatprep.subr.mxu0 0.0
        %2604 = vmatpush1.msra.mxu0 0.0
        %2605 = vmatprep.subr.mxu0 0.0
        %2606 = vmatpush1.msra.mxu0 0.0
        %2607 = vmatprep.subr.mxu0 0.0
        %2608 = vmatpush1.msra.mxu0 0.0
        %2609 = vmatprep.subr.mxu0 0.0
        %2610 = vmatpush1.msra.mxu0 0.0
        %2611 = vmatprep.subr.mxu0 0.0
        %2612 = vmatpush1.msra.mxu0 0.0
        %2613 = vmatprep.subr.mxu0 0.0
        %2614 = vmatpush1.msra.mxu0 0.0
        %2615 = vmatprep.subr.mxu0 0.0
        %2616 = vmatpush1.msra.mxu0 0.0
        %2617 = vmatprep.subr.mxu0 0.0
        %2618 = vmatpush1.msra.mxu0 0.0
        %2619 = vmatprep.subr.mxu0 0.0
        %2620 = vmatpush1.msra.mxu0 0.0
        %2621 = vmatprep.subr.mxu0 0.0
        %2622 = vmatpush1.msra.mxu0 0.0
        %2623 = vmatprep.subr.mxu0 0.0
        %2624 = vmatpush1.msra.mxu0 0.0
        %2625 = vmatprep.subr.mxu0 0.0
        %2626 = vmatpush1.msra.mxu0 0.0
        %2627 = vmatprep.subr.mxu0 0.0
        %2628 = vmatpush1.msra.mxu0 0.0
        %2629 = vmatprep.subr.mxu0 0.0
        %2630 = vmatpush1.msra.mxu0 0.0
        %2631 = vmatprep.subr.mxu0 0.0
        %2632 = vmatpush1.msra.mxu0 0.0
        %2633 = vmatprep.subr.mxu0 0.0
        %2634 = vmatpush1.msra.mxu0 0.0
        %2635 = vmatprep.subr.mxu0 0.0
        %2636 = vmatpush1.msra.mxu0 0.0
        %2637 = vmatprep.subr.mxu0 0.0
        %2638 = vmatpush1.msra.mxu0 0.0
        %2639 = vmatprep.subr.mxu0 0.0
        %2640 = vmatpush1.msra.mxu0 0.0
        %2641 = vmatprep.subr.mxu0 0.0
        %2642 = vmatpush1.msra.mxu0 0.0
        %2643 = vmatprep.subr.mxu0 0.0
        %2644 = vmatpush1.msra.mxu0 0.0
        %2645 = vmatprep.subr.mxu0 0.0
        %2646 = vmatpush1.msra.mxu0 0.0
        %2647 = vmatprep.subr.mxu0 0.0
        %2648 = vmatpush1.msra.mxu0 0.0
        %2649 = vmatprep.subr.mxu0 0.0
        %2650 = vmatpush1.msra.mxu0 0.0
        %2651 = vmatprep.mubr.f32.mxu0 0.0
        %v2652 = vand.u32 %v2295, 4294901760
        %v2653 = vsub.f32 %v2295, %v2652
        %v2654 = vand.u32 %v2653, 4294901760
        %2655 = vmatmul.mubr.f32.gmra.mrb[0].mxu0 %v2654
        %v2656 = vpop.f32.mrb[0].mxu0
        %v2657 = vadd.f32 %v2576, %v2656
        %v2658 = vpop.f32.mrb[0].mxu0
        %2659 = vdwg.mxu0
        %2660 = vmatprep.subr.mxu0 0.0
        %v2661 = vand.u32 %v210, 4294901760
        %v2662 = vsub.f32 %v210, %v2661
        %v2663 = vand.u32 %v2662, 4294901760
        %2664 = vmatpush1.msra.mxu0 %v2663
        %2665 = vmatprep.subr.mxu0 0.0
        %v2666 = vand.u32 %v211, 4294901760
        %v2667 = vsub.f32 %v211, %v2666
        %v2668 = vand.u32 %v2667, 4294901760
        %2669 = vmatpush1.msra.mxu0 %v2668
        %2670 = vmatprep.subr.mxu0 0.0
        %v2671 = vand.u32 %v212, 4294901760
        %v2672 = vsub.f32 %v212, %v2671
        %v2673 = vand.u32 %v2672, 4294901760
        %2674 = vmatpush1.msra.mxu0 %v2673
        %2675 = vmatprep.subr.mxu0 0.0
        %v2676 = vand.u32 %v213, 4294901760
        %v2677 = vsub.f32 %v213, %v2676
        %v2678 = vand.u32 %v2677, 4294901760
        %2679 = vmatpush1.msra.mxu0 %v2678
        %2680 = vmatprep.subr.mxu0 0.0
        %v2681 = vand.u32 %v214, 4294901760
        %v2682 = vsub.f32 %v214, %v2681
        %v2683 = vand.u32 %v2682, 4294901760
        %2684 = vmatpush1.msra.mxu0 %v2683
        %2685 = vmatprep.subr.mxu0 0.0
        %v2686 = vand.u32 %v215, 4294901760
        %v2687 = vsub.f32 %v215, %v2686
        %v2688 = vand.u32 %v2687, 4294901760
        %2689 = vmatpush1.msra.mxu0 %v2688
        %2690 = vmatprep.subr.mxu0 0.0
        %v2691 = vand.u32 %v216, 4294901760
        %v2692 = vsub.f32 %v216, %v2691
        %v2693 = vand.u32 %v2692, 4294901760
        %2694 = vmatpush1.msra.mxu0 %v2693
        %2695 = vmatprep.subr.mxu0 0.0
        %v2696 = vand.u32 %v217, 4294901760
        %v2697 = vsub.f32 %v217, %v2696
        %v2698 = vand.u32 %v2697, 4294901760
        %2699 = vmatpush1.msra.mxu0 %v2698
        %2700 = vmatprep.subr.mxu0 0.0
        %2701 = vmatpush1.msra.mxu0 0.0
        %2702 = vmatprep.subr.mxu0 0.0
        %2703 = vmatpush1.msra.mxu0 0.0
        %2704 = vmatprep.subr.mxu0 0.0
        %2705 = vmatpush1.msra.mxu0 0.0
        %2706 = vmatprep.subr.mxu0 0.0
        %2707 = vmatpush1.msra.mxu0 0.0
        %2708 = vmatprep.subr.mxu0 0.0
        %2709 = vmatpush1.msra.mxu0 0.0
        %2710 = vmatprep.subr.mxu0 0.0
        %2711 = vmatpush1.msra.mxu0 0.0
        %2712 = vmatprep.subr.mxu0 0.0
        %2713 = vmatpush1.msra.mxu0 0.0
        %2714 = vmatprep.subr.mxu0 0.0
        %2715 = vmatpush1.msra.mxu0 0.0
        %2716 = vmatprep.subr.mxu0 0.0
        %2717 = vmatpush1.msra.mxu0 0.0
        %2718 = vmatprep.subr.mxu0 0.0
        %2719 = vmatpush1.msra.mxu0 0.0
        %2720 = vmatprep.subr.mxu0 0.0
        %2721 = vmatpush1.msra.mxu0 0.0
        %2722 = vmatprep.subr.mxu0 0.0
        %2723 = vmatpush1.msra.mxu0 0.0
        %2724 = vmatprep.subr.mxu0 0.0
        %2725 = vmatpush1.msra.mxu0 0.0
        %2726 = vmatprep.subr.mxu0 0.0
        %2727 = vmatpush1.msra.mxu0 0.0
        %2728 = vmatprep.subr.mxu0 0.0
        %2729 = vmatpush1.msra.mxu0 0.0
        %2730 = vmatprep.subr.mxu0 0.0
        %2731 = vmatpush1.msra.mxu0 0.0
        %2732 = vmatprep.subr.mxu0 0.0
        %2733 = vmatpush1.msra.mxu0 0.0
        %2734 = vmatprep.subr.mxu0 0.0
        %2735 = vmatpush1.msra.mxu0 0.0
        %2736 = vmatprep.subr.mxu0 0.0
        %2737 = vmatpush1.msra.mxu0 0.0
        %2738 = vmatprep.subr.mxu0 0.0
        %2739 = vmatpush1.msra.mxu0 0.0
        %2740 = vmatprep.subr.mxu0 0.0
        %2741 = vmatpush1.msra.mxu0 0.0
        %2742 = vmatprep.subr.mxu0 0.0
        %2743 = vmatpush1.msra.mxu0 0.0
        %2744 = vmatprep.subr.mxu0 0.0
        %2745 = vmatpush1.msra.mxu0 0.0
        %2746 = vmatprep.subr.mxu0 0.0
        %2747 = vmatpush1.msra.mxu0 0.0
        %2748 = vmatprep.mubr.f32.mxu0 0.0
        %v2749 = vand.u32 %v2295, 4294901760
        %2750 = vmatmul.mubr.f32.gmra.mrb[0].mxu0 %v2749
        %v2751 = vpop.f32.mrb[0].mxu0
        %v2752 = vadd.f32 %v2657, %v2751
        %v2753 = vpop.f32.mrb[0].mxu0
        %2754 = vdwg.mxu0
        %2755 = vmatprep.subr.mxu0 0.0
        %v2756 = vand.u32 %v210, 4294901760
        %2757 = vmatpush1.msra.mxu0 %v2756
        %2758 = vmatprep.subr.mxu0 0.0
        %v2759 = vand.u32 %v211, 4294901760
        %2760 = vmatpush1.msra.mxu0 %v2759
        %2761 = vmatprep.subr.mxu0 0.0
        %v2762 = vand.u32 %v212, 4294901760
        %2763 = vmatpush1.msra.mxu0 %v2762
        %2764 = vmatprep.subr.mxu0 0.0
        %v2765 = vand.u32 %v213, 4294901760
        %2766 = vmatpush1.msra.mxu0 %v2765
        %2767 = vmatprep.subr.mxu0 0.0
        %v2768 = vand.u32 %v214, 4294901760
        %2769 = vmatpush1.msra.mxu0 %v2768
        %2770 = vmatprep.subr.mxu0 0.0
        %v2771 = vand.u32 %v215, 4294901760
        %2772 = vmatpush1.msra.mxu0 %v2771
        %2773 = vmatprep.subr.mxu0 0.0
        %v2774 = vand.u32 %v216, 4294901760
        %2775 = vmatpush1.msra.mxu0 %v2774
        %2776 = vmatprep.subr.mxu0 0.0
        %v2777 = vand.u32 %v217, 4294901760
        %2778 = vmatpush1.msra.mxu0 %v2777
        %2779 = vmatprep.subr.mxu0 0.0
        %2780 = vmatpush1.msra.mxu0 0.0
        %2781 = vmatprep.subr.mxu0 0.0
        %2782 = vmatpush1.msra.mxu0 0.0
        %2783 = vmatprep.subr.mxu0 0.0
        %2784 = vmatpush1.msra.mxu0 0.0
        %2785 = vmatprep.subr.mxu0 0.0
        %2786 = vmatpush1.msra.mxu0 0.0
        %2787 = vmatprep.subr.mxu0 0.0
        %2788 = vmatpush1.msra.mxu0 0.0
        %2789 = vmatprep.subr.mxu0 0.0
        %2790 = vmatpush1.msra.mxu0 0.0
        %2791 = vmatprep.subr.mxu0 0.0
        %2792 = vmatpush1.msra.mxu0 0.0
        %2793 = vmatprep.subr.mxu0 0.0
        %2794 = vmatpush1.msra.mxu0 0.0
        %2795 = vmatprep.subr.mxu0 0.0
        %2796 = vmatpush1.msra.mxu0 0.0
        %2797 = vmatprep.subr.mxu0 0.0
        %2798 = vmatpush1.msra.mxu0 0.0
        %2799 = vmatprep.subr.mxu0 0.0
        %2800 = vmatpush1.msra.mxu0 0.0
        %2801 = vmatprep.subr.mxu0 0.0
        %2802 = vmatpush1.msra.mxu0 0.0
        %2803 = vmatprep.subr.mxu0 0.0
        %2804 = vmatpush1.msra.mxu0 0.0
        %2805 = vmatprep.subr.mxu0 0.0
        %2806 = vmatpush1.msra.mxu0 0.0
        %2807 = vmatprep.subr.mxu0 0.0
        %2808 = vmatpush1.msra.mxu0 0.0
        %2809 = vmatprep.subr.mxu0 0.0
        %2810 = vmatpush1.msra.mxu0 0.0
        %2811 = vmatprep.subr.mxu0 0.0
        %2812 = vmatpush1.msra.mxu0 0.0
        %2813 = vmatprep.subr.mxu0 0.0
        %2814 = vmatpush1.msra.mxu0 0.0
        %2815 = vmatprep.subr.mxu0 0.0
        %2816 = vmatpush1.msra.mxu0 0.0
        %2817 = vmatprep.subr.mxu0 0.0
        %2818 = vmatpush1.msra.mxu0 0.0
        %2819 = vmatprep.subr.mxu0 0.0
        %2820 = vmatpush1.msra.mxu0 0.0
        %2821 = vmatprep.subr.mxu0 0.0
        %2822 = vmatpush1.msra.mxu0 0.0
        %2823 = vmatprep.subr.mxu0 0.0
        %2824 = vmatpush1.msra.mxu0 0.0
        %2825 = vmatprep.subr.mxu0 0.0
        %2826 = vmatpush1.msra.mxu0 0.0
        %2827 = vmatprep.mubr.f32.mxu0 0.0
        %v2828 = vand.u32 %v2295, 4294901760
        %2829 = vmatmul.mubr.f32.gmra.mrb[0].mxu0 %v2828
        %v2830 = vpop.f32.mrb[0].mxu0
        %v2831 = vadd.f32 %v2752, %v2830
        %v2832 = vpop.f32.mrb[0].mxu0
        %2833 = vdwg.mxu0
        %s2834 = scalar_lea.vmem %s207, 12 [#allocation5]
        %2835 = vst.msk [vmem:[%s2834] sm:$0xf] %vm887, %v2831
        %s2836 = sand.u32 %s112, 1
        %s2837 = scalar_lea.sflag [#allocation4], %s2836
        %s2838 = sand.u32 %s112, 1
        %s2839 = smul.addr %s2838, 16
        %s2840 = scalar_lea.vmem [#allocation5], %s2839
        // Predicated region
        $region37: #{tpu_custom_call.1} parent=31 // pred_check
          %p2841 = pneg %p122
        $region38: #{tpu_custom_call.1} parent=31 // pred_check_branch
          %2843 = sbr.rel (%p2841) target = $region40
        $region39: #{tpu_custom_call.1} parent=31 // pred_region
          %s2844 = smul.u32 4, %s25
          %s2846 = ssub.s32 256, 256
          %2847 = vsyncadd %s2837, %s2846
          %s2848 = smul.addr %s24, 4
          %s2849 = sadd.s32 %s2844, %s2848
          %s2850 = smul.addr %s2849, 64
          %s2851 = scalar_lea.hbm %s3, %s2850
          %s2852 = sshll.u32 %s2840, 4
          %s2853 = int_to_ptr.vmem [resolvable:$true] %s2852
          %2858 = dma.vmem_to_hbm [thread:$0]  %s2853, 256, %s2851, %s2837, 64, 64, 4
        $region40: #{tpu_custom_call.1} parent=31 // pred_fallthru
          _
      $region32: #{tpu_custom_call.1} parent=5 // pred_fallthru
        _
      %p2859 = scmp.le.s32.totalorder 2, %s15
      // Predicated region
      $region41: #{tpu_custom_call.1} parent=5 // pred_check
        %p2860 = pneg %p2859
      $region42: #{tpu_custom_call.1} parent=5 // pred_check_branch
        %2862 = sbr.rel (%p2860) target = $region44
      $region43: #{tpu_custom_call.1} parent=5 // pred_region
        %s2863 = ssub.s32 %s15, 2
        // Predicated region
        $region45: #{tpu_custom_call.1} parent=43 // pred_check
          %p2864 = pneg %p128
        $region46: #{tpu_custom_call.1} parent=43 // pred_check_branch
          %2866 = sbr.rel (%p2864) target = $region48
        $region47: #{tpu_custom_call.1} parent=43 // pred_region
          %s2867 = sand.u32 %s113, 1
          %s2868 = scalar_lea.sflag [#allocation4], %s2867
          %s2869 = sand.u32 %s113, 1
          %s2870 = smul.addr %s2869, 16
          %s2871 = scalar_lea.vmem [#allocation5], %s2870
          %2872 = dma.done %s2868, 256
        $region48: #{tpu_custom_call.1} parent=43 // pred_fallthru
          _
      $region44: #{tpu_custom_call.1} parent=5 // pred_fallthru
        _
    $region6: #{tpu_custom_call.1} parent=1 // loop_footer
      %s19 = sadd.s32 1, %s15
    $region7: #{tpu_custom_call.1} parent=1 // loop_footer_branch
      %14 = sbr.rel target = $region3
    $region8: #{tpu_custom_call.1} parent=1 // loop_exit
      _
    %2873 = vsyncpa [#allocation3], 1
    %s2874 = scalar_lea.sflag [#allocation3], 1
    %2875 = vsyncpa %s2874, 1
    %2876 = vsyncpa [#allocation4], 1
    %s2877 = scalar_lea.sflag [#allocation4], 1
    %2878 = vsyncpa %s2877, 1

</llo_original>
